<compile_context>
chip_gen: v7x
topology: tpu7x:2x2x1
jax: 0.10.0
libtpu: 0.0.40
codegen_flags: <defaults>
</compile_context>

<pallas_src>
import jax
import jax.numpy as jnp
from jax.experimental import pallas as pl
from jax.experimental.pallas import tpu as pltpu

# Real layer widths of the MLP and the lane-padded widths used by the kernel.
DIMS = [2048, 1024, 512, 256, 128, 32, 16, 2]
DIMS_PAD = [2048, 1024, 512, 256, 128, 128, 128, 128]
NUM_LAYERS = 7
OUT_PAD = DIMS_PAD[-1]          # 128-wide (lane-dense) padded output
BN_EPS = 1e-5
BIAS_ROWS = 8                   # sublane-aligned packing of the 7 bias vectors
BIAS_COLS = DIMS[1]             # 1024 = widest bias, lane-aligned

VMEM_LIMIT_BYTES = 48 * 1024 * 1024   # safe on v7x (64 MiB/TC) and v5e/v6e
SMALL_BATCH_ROWS = 512                # manual-DMA single-step path up to here
LARGE_TILE_B = 512                    # pipeline-knee tile for the tiled path
PARALLEL_MIN_ROWS = 2048              # gate v7x 2-TC sharding on batch size


def _round_up(x, m):
    return (x + m - 1) // m * m


def _gelu_exact(x):
    # Exact GELU (matches torch.nn.GELU default): 0.5*x*(1+erf(x/sqrt(2)))
    return 0.5 * x * (1.0 + jax.lax.erf(x * jnp.float32(0.7071067811865476)))


def _mlp_body(x_ref, bias_ref, load_weight, out_ref):
    """Shared per-layer compute.  load_weight(li) -> bf16 (in_pad, out_pad)."""
    h = x_ref[...].astype(jnp.bfloat16)          # bf16 activation carry
    for li in range(NUM_LAYERS):
        w = load_weight(li)
        n_out = DIMS_PAD[li + 1]
        y = jnp.dot(h, w, preferred_element_type=jnp.float32)
        y = y + bias_ref[li:li + 1, :n_out]      # folded (BN) bias, f32
        if li < NUM_LAYERS - 1:
            # Dropout = identity in eval mode.
            h = _gelu_exact(y).astype(jnp.bfloat16)
        else:
            out_ref[...] = y                     # final Linear, no BN/GELU


def geo_kernel_dma(x_ref, bias_ref, *rest):
    """Small-batch kernel: weights live in HBM, fetched via overlapped DMA."""
    w_hbm = rest[:NUM_LAYERS]
    out_ref = rest[NUM_LAYERS]
    w_buf = rest[NUM_LAYERS + 1:2 * NUM_LAYERS + 1]
    sems = rest[2 * NUM_LAYERS + 1]

    copies = [pltpu.make_async_copy(w_hbm[li], w_buf[li], sems.at[li])
              for li in range(NUM_LAYERS)]
    for cp in copies:           # issue all weight fetches up front
        cp.start()

    def load_weight(li):
        copies[li].wait()       # block only on the weight this layer needs
        return w_buf[li][...]

    _mlp_body(x_ref, bias_ref, load_weight, out_ref)


def geo_kernel_resident(x_ref, bias_ref, *rest):
    """Large-batch kernel: weights are VMEM-resident via constant BlockSpecs."""
    w_refs = rest[:NUM_LAYERS]
    out_ref = rest[NUM_LAYERS]
    _mlp_body(x_ref, bias_ref, lambda li: w_refs[li][...], out_ref)


def _cost_estimate(batch_rows):
    mm = sum(DIMS_PAD[i] * DIMS_PAD[i + 1] for i in range(NUM_LAYERS))
    weight_bytes = 2 * mm                                 # bf16 weights
    return pl.CostEstimate(
        flops=2 * batch_rows * mm,
        transcendentals=batch_rows * sum(DIMS_PAD[1:-1]),  # one erf per GELU elt
        bytes_accessed=(weight_bytes + BIAS_ROWS * BIAS_COLS * 4
                        + batch_rows * DIMS[0] * 4 + batch_rows * OUT_PAD * 4),
    )


def _forward_small(x, weights, bias_packed):
    """B <= 512: single grid step, manual overlapped weight DMA."""
    B = x.shape[0]
    Bp = _round_up(max(B, 8), 8)
    if Bp != B:
        x = jnp.pad(x, ((0, Bp - B), (0, 0)))

    out = pl.pallas_call(
        geo_kernel_dma,
        out_shape=jax.ShapeDtypeStruct((Bp, OUT_PAD), jnp.float32),
        grid=(1,),
        in_specs=(
            [pl.BlockSpec((Bp, DIMS[0]), lambda i: (i, 0)),
             pl.BlockSpec((BIAS_ROWS, BIAS_COLS), lambda i: (0, 0))]
            + [pl.BlockSpec(memory_space=pl.ANY) for _ in range(NUM_LAYERS)]
        ),
        out_specs=pl.BlockSpec((Bp, OUT_PAD), lambda i: (i, 0)),
        scratch_shapes=(
            [pltpu.VMEM((DIMS_PAD[li], DIMS_PAD[li + 1]), jnp.bfloat16)
             for li in range(NUM_LAYERS)]
            + [pltpu.SemaphoreType.DMA((NUM_LAYERS,))]
        ),
        compiler_params=pltpu.CompilerParams(
            dimension_semantics=("arbitrary",),
            vmem_limit_bytes=VMEM_LIMIT_BYTES,
        ),
        cost_estimate=_cost_estimate(Bp),
    )(x, bias_packed, *weights)
    return out[:B, :DIMS[-1]]


def _forward_tiled(x, weights, bias_packed):
    """B > 512: pipelined batch tiles, single-buffered resident weights."""
    B = x.shape[0]
    tile_b = LARGE_TILE_B
    Bp = _round_up(B, tile_b)
    if Bp != B:
        x = jnp.pad(x, ((0, Bp - B), (0, 0)))
    grid = (Bp // tile_b,)

    resident = lambda i: (0, 0)   # constant index_map -> stays in VMEM
    in_specs = (
        [pl.BlockSpec((tile_b, DIMS[0]), lambda i: (i, 0)),
         pl.BlockSpec((BIAS_ROWS, BIAS_COLS), resident,
                      pipeline_mode=pl.Buffered(1))]
        + [pl.BlockSpec(w.shape, resident, pipeline_mode=pl.Buffered(1))
           for w in weights]
    )
    dim_sem = ("parallel",) if Bp >= PARALLEL_MIN_ROWS else ("arbitrary",)

    out = pl.pallas_call(
        geo_kernel_resident,
        out_shape=jax.ShapeDtypeStruct((Bp, OUT_PAD), jnp.float32),
        grid=grid,
        in_specs=in_specs,
        out_specs=pl.BlockSpec((tile_b, OUT_PAD), lambda i: (i, 0)),
        compiler_params=pltpu.CompilerParams(
            dimension_semantics=dim_sem,
            vmem_limit_bytes=VMEM_LIMIT_BYTES,
        ),
        cost_estimate=_cost_estimate(Bp),
    )(x, bias_packed, *weights)
    return out[:B, :DIMS[-1]]


@jax.jit
def geo_predictor_forward(x, weights, bias_packed):
    if x.shape[0] <= SMALL_BATCH_ROWS:
        return _forward_small(x, weights, bias_packed)
    return _forward_tiled(x, weights, bias_packed)


def make_params(key):
    """Deterministic synthetic parameters.

    Returns:
      raw_params:     list of (w, b, gamma, beta, mean, var) per layer (BN
                      entries are None for the last layer) -- pure-f32 ref.
      padded_weights: 7 bf16 (in_pad, out_pad) weights, BN folded, zero-padded
                      to 128-lane widths on the tail layers.
      bias_packed:    (8, 1024) f32; row li = folded bias of layer li
                      (zero in padded columns).
    """
    raw_params = []
    padded_weights = []
    bias_packed = jnp.zeros((BIAS_ROWS, BIAS_COLS), jnp.float32)
    for li in range(NUM_LAYERS):
        fan_in, fan_out = DIMS[li], DIMS[li + 1]
        in_pad, out_pad = DIMS_PAD[li], DIMS_PAD[li + 1]
        key, kw, kb, kg, kbeta, km, kv = jax.random.split(key, 7)
        w = jax.random.normal(kw, (fan_in, fan_out), jnp.float32) / jnp.sqrt(fan_in)
        b = jax.random.normal(kb, (fan_out,), jnp.float32) * 0.01
        if li < NUM_LAYERS - 1:
            gamma = 1.0 + 0.1 * jax.random.normal(kg, (fan_out,), jnp.float32)
            beta = 0.05 * jax.random.normal(kbeta, (fan_out,), jnp.float32)
            mean = 0.1 * jax.random.normal(km, (fan_out,), jnp.float32)
            var = 1.0 + 0.1 * jax.random.uniform(kv, (fan_out,), jnp.float32)
            raw_params.append((w, b, gamma, beta, mean, var))
            scale = gamma / jnp.sqrt(var + BN_EPS)
            shift = beta - mean * scale
            w_fold = w * scale[None, :]
            b_fold = b * scale + shift
        else:
            raw_params.append((w, b, None, None, None, None))
            w_fold, b_fold = w, b
        w_pad = jnp.zeros((in_pad, out_pad), jnp.float32)
        w_pad = w_pad.at[:fan_in, :fan_out].set(w_fold)
        padded_weights.append(w_pad.astype(jnp.bfloat16))
        bias_packed = bias_packed.at[li, :fan_out].set(b_fold)
    return raw_params, padded_weights, bias_packed


def reference_forward_f32(x, raw_params):
    """Pure-JAX f32 reference of the eval-mode PyTorch forward (unfolded BN)."""
    h = x
    for li, (w, b, gamma, beta, mean, var) in enumerate(raw_params):
        h = h @ w + b
        if li < NUM_LAYERS - 1:
            h = (h - mean) / jnp.sqrt(var + BN_EPS) * gamma + beta
            h = _gelu_exact(h)
    return h


def reference_forward_folded(x, padded_weights, bias_packed):
    """Pure-JAX reference mirroring the kernel math exactly (bf16, padded)."""
    h = x.astype(jnp.bfloat16)
    for li in range(NUM_LAYERS):
        n_out = DIMS_PAD[li + 1]
        y = jnp.dot(h, padded_weights[li],
                    preferred_element_type=jnp.float32) + bias_packed[li, :n_out]
        if li < NUM_LAYERS - 1:
            h = _gelu_exact(y).astype(jnp.bfloat16)
        else:
            out = y
    return out[:, :DIMS[-1]]


if __name__ == "__main__":
    key = jax.random.PRNGKey(0)
    key, kx = jax.random.split(key)

    B = 8  # small batch -> exercises the overlapped weight-DMA path
    x = jax.random.normal(kx, (B, DIMS[0]), jnp.float32)
    raw_params, padded_weights, bias_packed = make_params(key)

    out = geo_predictor_forward(x, padded_weights, bias_packed)
    out = jax.block_until_ready(out)
    assert out.shape == (B, DIMS[-1]), out.shape

    # Tight check against a reference that uses the same bf16 folded weights.
    ref_bf16 = reference_forward_folded(x, padded_weights, bias_packed)
    assert jnp.allclose(out, ref_bf16, atol=1e-2, rtol=1e-2), (
        f"max abs err vs bf16 reference: {jnp.max(jnp.abs(out - ref_bf16))}"
    )

    # Loose sanity check against the full-precision eval-mode semantics
    # (bf16 weights introduce ~1% relative error over 7 layers).
    ref_f32 = reference_forward_f32(x, raw_params)
    rel_err = jnp.max(jnp.abs(out - ref_f32)) / (jnp.max(jnp.abs(ref_f32)) + 1e-6)
    assert rel_err < 0.1, f"relative error vs f32 reference too large: {rel_err}"

    print("KERNEL_OK")
</pallas_src>

<mosaic_0001>
module attributes {stable_mosaic.version = 11 : i64} {
  func.func @geo_kernel_dma(%arg0: i32, %arg1: memref<8x2048xf32, #tpu.memory_space<vmem>>, %arg2: memref<8x1024xf32, #tpu.memory_space<vmem>>, %arg3: memref<2048x1024xbf16, #tpu.memory_space<any>>, %arg4: memref<1024x512xbf16, #tpu.memory_space<any>>, %arg5: memref<512x256xbf16, #tpu.memory_space<any>>, %arg6: memref<256x128xbf16, #tpu.memory_space<any>>, %arg7: memref<128x128xbf16, #tpu.memory_space<any>>, %arg8: memref<128x128xbf16, #tpu.memory_space<any>>, %arg9: memref<128x128xbf16, #tpu.memory_space<any>>, %arg10: memref<8x128xf32, #tpu.memory_space<vmem>>, %arg11: memref<2048x1024xbf16, #tpu.memory_space<vmem>>, %arg12: memref<1024x512xbf16, #tpu.memory_space<vmem>>, %arg13: memref<512x256xbf16, #tpu.memory_space<vmem>>, %arg14: memref<256x128xbf16, #tpu.memory_space<vmem>>, %arg15: memref<128x128xbf16, #tpu.memory_space<vmem>>, %arg16: memref<128x128xbf16, #tpu.memory_space<vmem>>, %arg17: memref<128x128xbf16, #tpu.memory_space<vmem>>, %arg18: memref<7x!tpu.dma_semaphore, #tpu.memory_space<semaphore_mem>>) attributes {dimension_semantics = [#tpu.dimension_semantics<arbitrary>], iteration_bounds = array<i64: 1>, scalar_prefetch = 0 : i64, scratch_operands = 8 : i64, tpu.core_type = #tpu.core_type<tc>, window_params = [{transform_indices = @transform_0, window_bounds = array<i64: 8, 2048>}, {pipeline_mode = #tpu.pipeline_mode<synchronous>, transform_indices = @transform_1, window_bounds = array<i64: 8, 1024>}, {}, {}, {}, {}, {}, {}, {}, {transform_indices = @transform_9, window_bounds = array<i64: 8, 128>}]} {
    %c0_i32 = arith.constant 0 : i32
    %0 = tpu.memref_slice %arg18[%c0_i32] : memref<7x!tpu.dma_semaphore, #tpu.memory_space<semaphore_mem>> -> memref<1x!tpu.dma_semaphore, #tpu.memory_space<semaphore_mem>>
    %1 = tpu.memref_squeeze %0 : memref<1x!tpu.dma_semaphore, #tpu.memory_space<semaphore_mem>> -> memref<!tpu.dma_semaphore, #tpu.memory_space<semaphore_mem>>
    tpu.enqueue_dma source(%arg3 : memref<2048x1024xbf16, #tpu.memory_space<any>>) target(%arg11 : memref<2048x1024xbf16, #tpu.memory_space<vmem>>) target_semaphore(%1 : memref<!tpu.dma_semaphore, #tpu.memory_space<semaphore_mem>>)
    %c1_i32 = arith.constant 1 : i32
    %2 = tpu.memref_slice %arg18[%c1_i32] : memref<7x!tpu.dma_semaphore, #tpu.memory_space<semaphore_mem>> -> memref<1x!tpu.dma_semaphore, #tpu.memory_space<semaphore_mem>>
    %3 = tpu.memref_squeeze %2 : memref<1x!tpu.dma_semaphore, #tpu.memory_space<semaphore_mem>> -> memref<!tpu.dma_semaphore, #tpu.memory_space<semaphore_mem>>
    tpu.enqueue_dma source(%arg4 : memref<1024x512xbf16, #tpu.memory_space<any>>) target(%arg12 : memref<1024x512xbf16, #tpu.memory_space<vmem>>) target_semaphore(%3 : memref<!tpu.dma_semaphore, #tpu.memory_space<semaphore_mem>>)
    %c2_i32 = arith.constant 2 : i32
    %4 = tpu.memref_slice %arg18[%c2_i32] : memref<7x!tpu.dma_semaphore, #tpu.memory_space<semaphore_mem>> -> memref<1x!tpu.dma_semaphore, #tpu.memory_space<semaphore_mem>>
    %5 = tpu.memref_squeeze %4 : memref<1x!tpu.dma_semaphore, #tpu.memory_space<semaphore_mem>> -> memref<!tpu.dma_semaphore, #tpu.memory_space<semaphore_mem>>
    tpu.enqueue_dma source(%arg5 : memref<512x256xbf16, #tpu.memory_space<any>>) target(%arg13 : memref<512x256xbf16, #tpu.memory_space<vmem>>) target_semaphore(%5 : memref<!tpu.dma_semaphore, #tpu.memory_space<semaphore_mem>>)
    %c3_i32 = arith.constant 3 : i32
    %6 = tpu.memref_slice %arg18[%c3_i32] : memref<7x!tpu.dma_semaphore, #tpu.memory_space<semaphore_mem>> -> memref<1x!tpu.dma_semaphore, #tpu.memory_space<semaphore_mem>>
    %7 = tpu.memref_squeeze %6 : memref<1x!tpu.dma_semaphore, #tpu.memory_space<semaphore_mem>> -> memref<!tpu.dma_semaphore, #tpu.memory_space<semaphore_mem>>
    tpu.enqueue_dma source(%arg6 : memref<256x128xbf16, #tpu.memory_space<any>>) target(%arg14 : memref<256x128xbf16, #tpu.memory_space<vmem>>) target_semaphore(%7 : memref<!tpu.dma_semaphore, #tpu.memory_space<semaphore_mem>>)
    %c4_i32 = arith.constant 4 : i32
    %8 = tpu.memref_slice %arg18[%c4_i32] : memref<7x!tpu.dma_semaphore, #tpu.memory_space<semaphore_mem>> -> memref<1x!tpu.dma_semaphore, #tpu.memory_space<semaphore_mem>>
    %9 = tpu.memref_squeeze %8 : memref<1x!tpu.dma_semaphore, #tpu.memory_space<semaphore_mem>> -> memref<!tpu.dma_semaphore, #tpu.memory_space<semaphore_mem>>
    tpu.enqueue_dma source(%arg7 : memref<128x128xbf16, #tpu.memory_space<any>>) target(%arg15 : memref<128x128xbf16, #tpu.memory_space<vmem>>) target_semaphore(%9 : memref<!tpu.dma_semaphore, #tpu.memory_space<semaphore_mem>>)
    %c5_i32 = arith.constant 5 : i32
    %10 = tpu.memref_slice %arg18[%c5_i32] : memref<7x!tpu.dma_semaphore, #tpu.memory_space<semaphore_mem>> -> memref<1x!tpu.dma_semaphore, #tpu.memory_space<semaphore_mem>>
    %11 = tpu.memref_squeeze %10 : memref<1x!tpu.dma_semaphore, #tpu.memory_space<semaphore_mem>> -> memref<!tpu.dma_semaphore, #tpu.memory_space<semaphore_mem>>
    tpu.enqueue_dma source(%arg8 : memref<128x128xbf16, #tpu.memory_space<any>>) target(%arg16 : memref<128x128xbf16, #tpu.memory_space<vmem>>) target_semaphore(%11 : memref<!tpu.dma_semaphore, #tpu.memory_space<semaphore_mem>>)
    %c6_i32 = arith.constant 6 : i32
    %12 = tpu.memref_slice %arg18[%c6_i32] : memref<7x!tpu.dma_semaphore, #tpu.memory_space<semaphore_mem>> -> memref<1x!tpu.dma_semaphore, #tpu.memory_space<semaphore_mem>>
    %13 = tpu.memref_squeeze %12 : memref<1x!tpu.dma_semaphore, #tpu.memory_space<semaphore_mem>> -> memref<!tpu.dma_semaphore, #tpu.memory_space<semaphore_mem>>
    tpu.enqueue_dma source(%arg9 : memref<128x128xbf16, #tpu.memory_space<any>>) target(%arg17 : memref<128x128xbf16, #tpu.memory_space<vmem>>) target_semaphore(%13 : memref<!tpu.dma_semaphore, #tpu.memory_space<semaphore_mem>>)
    %c0 = arith.constant 0 : index
    %c0_0 = arith.constant 0 : index
    %14 = vector.load %arg1[%c0, %c0_0] : memref<8x2048xf32, #tpu.memory_space<vmem>>, vector<8x2048xf32>
    %15 = arith.truncf %14 : vector<8x2048xf32> to vector<8x2048xbf16>
    %c0_i32_1 = arith.constant 0 : i32
    %16 = tpu.memref_slice %arg18[%c0_i32_1] : memref<7x!tpu.dma_semaphore, #tpu.memory_space<semaphore_mem>> -> memref<1x!tpu.dma_semaphore, #tpu.memory_space<semaphore_mem>>
    %17 = tpu.memref_squeeze %16 : memref<1x!tpu.dma_semaphore, #tpu.memory_space<semaphore_mem>> -> memref<!tpu.dma_semaphore, #tpu.memory_space<semaphore_mem>>
    tpu.wait_dma2 semaphore(%17 : memref<!tpu.dma_semaphore, #tpu.memory_space<semaphore_mem>>) src(%arg3 : memref<2048x1024xbf16, #tpu.memory_space<any>>) dst(%arg11 : memref<2048x1024xbf16, #tpu.memory_space<vmem>>)
    %c0_2 = arith.constant 0 : index
    %c0_3 = arith.constant 0 : index
    %18 = vector.load %arg11[%c0_2, %c0_3] : memref<2048x1024xbf16, #tpu.memory_space<vmem>>, vector<2048x1024xbf16>
    %cst = arith.constant dense<0.000000e+00> : vector<8x1024xf32>
    %19 = tpu.matmul %15, %18, %cst {dimension_numbers = #tpu.dot_dimension_numbers<[1], [0], [0], [1], [0, 0, 1, 1], [], []>} : vector<8x2048xbf16>, vector<2048x1024xbf16>, vector<8x1024xf32> -> vector<8x1024xf32>
    %c0_4 = arith.constant 0 : index
    %c0_5 = arith.constant 0 : index
    %20 = vector.load %arg2[%c0_4, %c0_5] : memref<8x1024xf32, #tpu.memory_space<vmem>>, vector<1x1024xf32>
    %21 = vector.broadcast %20 : vector<1x1024xf32> to vector<8x1024xf32>
    %22 = arith.addf %19, %21 : vector<8x1024xf32>
    %cst_6 = arith.constant 5.000000e-01 : f32
    %23 = vector.broadcast %cst_6 : f32 to vector<8x1024xf32>
    %24 = arith.mulf %23, %22 : vector<8x1024xf32>
    %cst_7 = arith.constant 0.707106769 : f32
    %25 = vector.broadcast %cst_7 : f32 to vector<8x1024xf32>
    %26 = arith.mulf %22, %25 : vector<8x1024xf32>
    %27 = math.erf %26 : vector<8x1024xf32>
    %cst_8 = arith.constant 1.000000e+00 : f32
    %28 = vector.broadcast %cst_8 : f32 to vector<8x1024xf32>
    %29 = arith.addf %28, %27 : vector<8x1024xf32>
    %30 = arith.mulf %24, %29 : vector<8x1024xf32>
    %31 = arith.truncf %30 : vector<8x1024xf32> to vector<8x1024xbf16>
    %c1_i32_9 = arith.constant 1 : i32
    %32 = tpu.memref_slice %arg18[%c1_i32_9] : memref<7x!tpu.dma_semaphore, #tpu.memory_space<semaphore_mem>> -> memref<1x!tpu.dma_semaphore, #tpu.memory_space<semaphore_mem>>
    %33 = tpu.memref_squeeze %32 : memref<1x!tpu.dma_semaphore, #tpu.memory_space<semaphore_mem>> -> memref<!tpu.dma_semaphore, #tpu.memory_space<semaphore_mem>>
    tpu.wait_dma2 semaphore(%33 : memref<!tpu.dma_semaphore, #tpu.memory_space<semaphore_mem>>) src(%arg4 : memref<1024x512xbf16, #tpu.memory_space<any>>) dst(%arg12 : memref<1024x512xbf16, #tpu.memory_space<vmem>>)
    %c0_10 = arith.constant 0 : index
    %c0_11 = arith.constant 0 : index
    %34 = vector.load %arg12[%c0_10, %c0_11] : memref<1024x512xbf16, #tpu.memory_space<vmem>>, vector<1024x512xbf16>
    %cst_12 = arith.constant dense<0.000000e+00> : vector<8x512xf32>
    %35 = tpu.matmul %31, %34, %cst_12 {dimension_numbers = #tpu.dot_dimension_numbers<[1], [0], [0], [1], [0, 0, 1, 1], [], []>} : vector<8x1024xbf16>, vector<1024x512xbf16>, vector<8x512xf32> -> vector<8x512xf32>
    %c1 = arith.constant 1 : index
    %c0_13 = arith.constant 0 : index
    %36 = vector.load %arg2[%c1, %c0_13] : memref<8x1024xf32, #tpu.memory_space<vmem>>, vector<1x512xf32>
    %37 = vector.broadcast %36 : vector<1x512xf32> to vector<8x512xf32>
    %38 = arith.addf %35, %37 : vector<8x512xf32>
    %cst_14 = arith.constant 5.000000e-01 : f32
    %39 = vector.broadcast %cst_14 : f32 to vector<8x512xf32>
    %40 = arith.mulf %39, %38 : vector<8x512xf32>
    %cst_15 = arith.constant 0.707106769 : f32
    %41 = vector.broadcast %cst_15 : f32 to vector<8x512xf32>
    %42 = arith.mulf %38, %41 : vector<8x512xf32>
    %43 = math.erf %42 : vector<8x512xf32>
    %cst_16 = arith.constant 1.000000e+00 : f32
    %44 = vector.broadcast %cst_16 : f32 to vector<8x512xf32>
    %45 = arith.addf %44, %43 : vector<8x512xf32>
    %46 = arith.mulf %40, %45 : vector<8x512xf32>
    %47 = arith.truncf %46 : vector<8x512xf32> to vector<8x512xbf16>
    %c2_i32_17 = arith.constant 2 : i32
    %48 = tpu.memref_slice %arg18[%c2_i32_17] : memref<7x!tpu.dma_semaphore, #tpu.memory_space<semaphore_mem>> -> memref<1x!tpu.dma_semaphore, #tpu.memory_space<semaphore_mem>>
    %49 = tpu.memref_squeeze %48 : memref<1x!tpu.dma_semaphore, #tpu.memory_space<semaphore_mem>> -> memref<!tpu.dma_semaphore, #tpu.memory_space<semaphore_mem>>
    tpu.wait_dma2 semaphore(%49 : memref<!tpu.dma_semaphore, #tpu.memory_space<semaphore_mem>>) src(%arg5 : memref<512x256xbf16, #tpu.memory_space<any>>) dst(%arg13 : memref<512x256xbf16, #tpu.memory_space<vmem>>)
    %c0_18 = arith.constant 0 : index
    %c0_19 = arith.constant 0 : index
    %50 = vector.load %arg13[%c0_18, %c0_19] : memref<512x256xbf16, #tpu.memory_space<vmem>>, vector<512x256xbf16>
    %cst_20 = arith.constant dense<0.000000e+00> : vector<8x256xf32>
    %51 = tpu.matmul %47, %50, %cst_20 {dimension_numbers = #tpu.dot_dimension_numbers<[1], [0], [0], [1], [0, 0, 1, 1], [], []>} : vector<8x512xbf16>, vector<512x256xbf16>, vector<8x256xf32> -> vector<8x256xf32>
    %c2 = arith.constant 2 : index
    %c0_21 = arith.constant 0 : index
    %52 = vector.load %arg2[%c2, %c0_21] : memref<8x1024xf32, #tpu.memory_space<vmem>>, vector<1x256xf32>
    %53 = vector.broadcast %52 : vector<1x256xf32> to vector<8x256xf32>
    %54 = arith.addf %51, %53 : vector<8x256xf32>
    %cst_22 = arith.constant 5.000000e-01 : f32
    %55 = vector.broadcast %cst_22 : f32 to vector<8x256xf32>
    %56 = arith.mulf %55, %54 : vector<8x256xf32>
    %cst_23 = arith.constant 0.707106769 : f32
    %57 = vector.broadcast %cst_23 : f32 to vector<8x256xf32>
    %58 = arith.mulf %54, %57 : vector<8x256xf32>
    %59 = math.erf %58 : vector<8x256xf32>
    %cst_24 = arith.constant 1.000000e+00 : f32
    %60 = vector.broadcast %cst_24 : f32 to vector<8x256xf32>
    %61 = arith.addf %60, %59 : vector<8x256xf32>
    %62 = arith.mulf %56, %61 : vector<8x256xf32>
    %63 = arith.truncf %62 : vector<8x256xf32> to vector<8x256xbf16>
    %c3_i32_25 = arith.constant 3 : i32
    %64 = tpu.memref_slice %arg18[%c3_i32_25] : memref<7x!tpu.dma_semaphore, #tpu.memory_space<semaphore_mem>> -> memref<1x!tpu.dma_semaphore, #tpu.memory_space<semaphore_mem>>
    %65 = tpu.memref_squeeze %64 : memref<1x!tpu.dma_semaphore, #tpu.memory_space<semaphore_mem>> -> memref<!tpu.dma_semaphore, #tpu.memory_space<semaphore_mem>>
    tpu.wait_dma2 semaphore(%65 : memref<!tpu.dma_semaphore, #tpu.memory_space<semaphore_mem>>) src(%arg6 : memref<256x128xbf16, #tpu.memory_space<any>>) dst(%arg14 : memref<256x128xbf16, #tpu.memory_space<vmem>>)
    %c0_26 = arith.constant 0 : index
    %c0_27 = arith.constant 0 : index
    %66 = vector.load %arg14[%c0_26, %c0_27] : memref<256x128xbf16, #tpu.memory_space<vmem>>, vector<256x128xbf16>
    %cst_28 = arith.constant dense<0.000000e+00> : vector<8x128xf32>
    %67 = tpu.matmul %63, %66, %cst_28 {dimension_numbers = #tpu.dot_dimension_numbers<[1], [0], [0], [1], [0, 0, 1, 1], [], []>} : vector<8x256xbf16>, vector<256x128xbf16>, vector<8x128xf32> -> vector<8x128xf32>
    %c3 = arith.constant 3 : index
    %c0_29 = arith.constant 0 : index
    %68 = vector.load %arg2[%c3, %c0_29] : memref<8x1024xf32, #tpu.memory_space<vmem>>, vector<1x128xf32>
    %69 = vector.broadcast %68 : vector<1x128xf32> to vector<8x128xf32>
    %70 = arith.addf %67, %69 : vector<8x128xf32>
    %cst_30 = arith.constant 5.000000e-01 : f32
    %71 = vector.broadcast %cst_30 : f32 to vector<8x128xf32>
    %72 = arith.mulf %71, %70 : vector<8x128xf32>
    %cst_31 = arith.constant 0.707106769 : f32
    %73 = vector.broadcast %cst_31 : f32 to vector<8x128xf32>
    %74 = arith.mulf %70, %73 : vector<8x128xf32>
    %75 = math.erf %74 : vector<8x128xf32>
    %cst_32 = arith.constant 1.000000e+00 : f32
    %76 = vector.broadcast %cst_32 : f32 to vector<8x128xf32>
    %77 = arith.addf %76, %75 : vector<8x128xf32>
    %78 = arith.mulf %72, %77 : vector<8x128xf32>
    %79 = arith.truncf %78 : vector<8x128xf32> to vector<8x128xbf16>
    %c4_i32_33 = arith.constant 4 : i32
    %80 = tpu.memref_slice %arg18[%c4_i32_33] : memref<7x!tpu.dma_semaphore, #tpu.memory_space<semaphore_mem>> -> memref<1x!tpu.dma_semaphore, #tpu.memory_space<semaphore_mem>>
    %81 = tpu.memref_squeeze %80 : memref<1x!tpu.dma_semaphore, #tpu.memory_space<semaphore_mem>> -> memref<!tpu.dma_semaphore, #tpu.memory_space<semaphore_mem>>
    tpu.wait_dma2 semaphore(%81 : memref<!tpu.dma_semaphore, #tpu.memory_space<semaphore_mem>>) src(%arg7 : memref<128x128xbf16, #tpu.memory_space<any>>) dst(%arg15 : memref<128x128xbf16, #tpu.memory_space<vmem>>)
    %c0_34 = arith.constant 0 : index
    %c0_35 = arith.constant 0 : index
    %82 = vector.load %arg15[%c0_34, %c0_35] : memref<128x128xbf16, #tpu.memory_space<vmem>>, vector<128x128xbf16>
    %cst_36 = arith.constant dense<0.000000e+00> : vector<8x128xf32>
    %83 = tpu.matmul %79, %82, %cst_36 {dimension_numbers = #tpu.dot_dimension_numbers<[1], [0], [0], [1], [0, 0, 1, 1], [], []>} : vector<8x128xbf16>, vector<128x128xbf16>, vector<8x128xf32> -> vector<8x128xf32>
    %c4 = arith.constant 4 : index
    %c0_37 = arith.constant 0 : index
    %84 = vector.load %arg2[%c4, %c0_37] : memref<8x1024xf32, #tpu.memory_space<vmem>>, vector<1x128xf32>
    %85 = vector.broadcast %84 : vector<1x128xf32> to vector<8x128xf32>
    %86 = arith.addf %83, %85 : vector<8x128xf32>
    %cst_38 = arith.constant 5.000000e-01 : f32
    %87 = vector.broadcast %cst_38 : f32 to vector<8x128xf32>
    %88 = arith.mulf %87, %86 : vector<8x128xf32>
    %cst_39 = arith.constant 0.707106769 : f32
    %89 = vector.broadcast %cst_39 : f32 to vector<8x128xf32>
    %90 = arith.mulf %86, %89 : vector<8x128xf32>
    %91 = math.erf %90 : vector<8x128xf32>
    %cst_40 = arith.constant 1.000000e+00 : f32
    %92 = vector.broadcast %cst_40 : f32 to vector<8x128xf32>
    %93 = arith.addf %92, %91 : vector<8x128xf32>
    %94 = arith.mulf %88, %93 : vector<8x128xf32>
    %95 = arith.truncf %94 : vector<8x128xf32> to vector<8x128xbf16>
    %c5_i32_41 = arith.constant 5 : i32
    %96 = tpu.memref_slice %arg18[%c5_i32_41] : memref<7x!tpu.dma_semaphore, #tpu.memory_space<semaphore_mem>> -> memref<1x!tpu.dma_semaphore, #tpu.memory_space<semaphore_mem>>
    %97 = tpu.memref_squeeze %96 : memref<1x!tpu.dma_semaphore, #tpu.memory_space<semaphore_mem>> -> memref<!tpu.dma_semaphore, #tpu.memory_space<semaphore_mem>>
    tpu.wait_dma2 semaphore(%97 : memref<!tpu.dma_semaphore, #tpu.memory_space<semaphore_mem>>) src(%arg8 : memref<128x128xbf16, #tpu.memory_space<any>>) dst(%arg16 : memref<128x128xbf16, #tpu.memory_space<vmem>>)
    %c0_42 = arith.constant 0 : index
    %c0_43 = arith.constant 0 : index
    %98 = vector.load %arg16[%c0_42, %c0_43] : memref<128x128xbf16, #tpu.memory_space<vmem>>, vector<128x128xbf16>
    %cst_44 = arith.constant dense<0.000000e+00> : vector<8x128xf32>
    %99 = tpu.matmul %95, %98, %cst_44 {dimension_numbers = #tpu.dot_dimension_numbers<[1], [0], [0], [1], [0, 0, 1, 1], [], []>} : vector<8x128xbf16>, vector<128x128xbf16>, vector<8x128xf32> -> vector<8x128xf32>
    %c5 = arith.constant 5 : index
    %c0_45 = arith.constant 0 : index
    %100 = vector.load %arg2[%c5, %c0_45] : memref<8x1024xf32, #tpu.memory_space<vmem>>, vector<1x128xf32>
    %101 = vector.broadcast %100 : vector<1x128xf32> to vector<8x128xf32>
    %102 = arith.addf %99, %101 : vector<8x128xf32>
    %cst_46 = arith.constant 5.000000e-01 : f32
    %103 = vector.broadcast %cst_46 : f32 to vector<8x128xf32>
    %104 = arith.mulf %103, %102 : vector<8x128xf32>
    %cst_47 = arith.constant 0.707106769 : f32
    %105 = vector.broadcast %cst_47 : f32 to vector<8x128xf32>
    %106 = arith.mulf %102, %105 : vector<8x128xf32>
    %107 = math.erf %106 : vector<8x128xf32>
    %cst_48 = arith.constant 1.000000e+00 : f32
    %108 = vector.broadcast %cst_48 : f32 to vector<8x128xf32>
    %109 = arith.addf %108, %107 : vector<8x128xf32>
    %110 = arith.mulf %104, %109 : vector<8x128xf32>
    %111 = arith.truncf %110 : vector<8x128xf32> to vector<8x128xbf16>
    %c6_i32_49 = arith.constant 6 : i32
    %112 = tpu.memref_slice %arg18[%c6_i32_49] : memref<7x!tpu.dma_semaphore, #tpu.memory_space<semaphore_mem>> -> memref<1x!tpu.dma_semaphore, #tpu.memory_space<semaphore_mem>>
    %113 = tpu.memref_squeeze %112 : memref<1x!tpu.dma_semaphore, #tpu.memory_space<semaphore_mem>> -> memref<!tpu.dma_semaphore, #tpu.memory_space<semaphore_mem>>
    tpu.wait_dma2 semaphore(%113 : memref<!tpu.dma_semaphore, #tpu.memory_space<semaphore_mem>>) src(%arg9 : memref<128x128xbf16, #tpu.memory_space<any>>) dst(%arg17 : memref<128x128xbf16, #tpu.memory_space<vmem>>)
    %c0_50 = arith.constant 0 : index
    %c0_51 = arith.constant 0 : index
    %114 = vector.load %arg17[%c0_50, %c0_51] : memref<128x128xbf16, #tpu.memory_space<vmem>>, vector<128x128xbf16>
    %cst_52 = arith.constant dense<0.000000e+00> : vector<8x128xf32>
    %115 = tpu.matmul %111, %114, %cst_52 {dimension_numbers = #tpu.dot_dimension_numbers<[1], [0], [0], [1], [0, 0, 1, 1], [], []>} : vector<8x128xbf16>, vector<128x128xbf16>, vector<8x128xf32> -> vector<8x128xf32>
    %c6 = arith.constant 6 : index
    %c0_53 = arith.constant 0 : index
    %116 = vector.load %arg2[%c6, %c0_53] : memref<8x1024xf32, #tpu.memory_space<vmem>>, vector<1x128xf32>
    %117 = vector.broadcast %116 : vector<1x128xf32> to vector<8x128xf32>
    %118 = arith.addf %115, %117 : vector<8x128xf32>
    %c0_54 = arith.constant 0 : index
    %c0_55 = arith.constant 0 : index
    %119 = vector.load %arg10[%c0_54, %c0_55] : memref<8x128xf32, #tpu.memory_space<vmem>>, vector<8x128xf32>
    tpu.vector_store %arg10[%c0_54, %c0_55], %118 {strides = array<i32>} : memref<8x128xf32, #tpu.memory_space<vmem>>, vector<8x128xf32>,
    return
  }
  func.func @transform_0(%arg0: i32) -> (i32, i32) {
    %c0_i32 = arith.constant 0 : i32
    %c0_i32_0 = arith.constant 0 : i32
    return %arg0, %c0_i32 : i32, i32
  }
  func.func @transform_1(%arg0: i32) -> (i32, i32) {
    %c0_i32 = arith.constant 0 : i32
    %c0_i32_0 = arith.constant 0 : i32
    %c0_i32_1 = arith.constant 0 : i32
    return %c0_i32, %c0_i32_0 : i32, i32
  }
  func.func @transform_9(%arg0: i32) -> (i32, i32) {
    %c0_i32 = arith.constant 0 : i32
    %c0_i32_0 = arith.constant 0 : i32
    return %arg0, %c0_i32 : i32, i32
  }
}

</mosaic_0001>

<llo_original>
// kernel: geo_predictor_forward.1
$region0: #{geo_predictor_forward.1}
  #allocation0 [shape = 'u32[]', space=smem, size = 0x4, offset = 0x4, fixed_abs, tag = 'smem constant byte address 0x4 - core index']
  #allocation1 [shape = 'u32[144,128]{1,0:T(1,128)}', space=vmem, size = 0x12000, scoped, tag = 'internal scratch']
  #allocation2 [shape = 'bf16[2048,1024]{1,0:T(16,128)(2,1)}', space=vmem, size = 0x400000, scoped, tag = 'scratch operand']
  #allocation3 [shape = 'bf16[1024,512]{1,0:T(16,128)(2,1)}', space=vmem, size = 0x100000, scoped, tag = 'scratch operand']
  #allocation4 [shape = 'bf16[512,256]{1,0:T(16,128)(2,1)}', space=vmem, size = 0x40000, scoped, tag = 'scratch operand']
  #allocation5 [shape = 'bf16[256,128]{1,0:T(16,128)(2,1)}', space=vmem, size = 0x10000, scoped, tag = 'scratch operand']
  #allocation6 [shape = 'bf16[128,128]{1,0:T(16,128)(2,1)}', space=vmem, size = 0x8000, scoped, tag = 'scratch operand']
  #allocation7 [shape = 'bf16[128,128]{1,0:T(16,128)(2,1)}', space=vmem, size = 0x8000, scoped, tag = 'scratch operand']
  #allocation8 [shape = 'bf16[128,128]{1,0:T(16,128)(2,1)}', space=vmem, size = 0x8000, scoped, tag = 'scratch operand']
  #allocation9 [shape = 's32[7]{0}', space=sflag, size = 0x1c, scoped, tag = 'scratch operand']
  #allocation14 [shape = 's32[]', space=sflag, size = 0x4, offset = 0, fixed_abs, tag = 'sflag constant byte address 0x0 - dummy sync flag']
  #allocation16 [shape = 's32[]', space=sflag, size = 0x4, offset = 0, fixed_abs, tag = 'sflag constant byte address 0x0 - dummy sync flag']
  #allocation18 [shape = 's32[]', space=sflag, size = 0x4, offset = 0, fixed_abs, tag = 'sflag constant byte address 0x0 - dummy sync flag']
  #allocation20 [shape = 's32[]', space=sflag, size = 0x4, offset = 0, fixed_abs, tag = 'sflag constant byte address 0x0 - dummy sync flag']
  #allocation21 [shape = 's32[]', space=sflag, size = 0x4, offset = 0, fixed_abs, tag = 'sflag constant byte address 0x0 - dummy sync flag']
  #allocation22 [shape = 'u32[]', space=smem, size = 0x4, offset = 0x44, fixed_abs, tag = 'smem constant byte address 0x44 - assertion arg 0']
  #allocation23 [shape = 'u32[]', space=smem, size = 0x4, offset = 0x48, fixed_abs, tag = 'smem constant byte address 0x48 - assertion arg 1']
  #allocation24 [shape = 's32[]', space=sflag, size = 0x4, offset = 0, fixed_abs, tag = 'sflag constant byte address 0x0 - dummy sync flag']
  #allocation25 [shape = 's32[]', space=sflag, size = 0x4, offset = 0, fixed_abs, tag = 'sflag constant byte address 0x0 - dummy sync flag']
  #allocation26 [shape = 's32[]', space=sflag, size = 0x4, offset = 0, fixed_abs, tag = 'sflag constant byte address 0x0 - dummy sync flag']
  #allocation27 [shape = 's32[]', space=sflag, size = 0x4, offset = 0, fixed_abs, tag = 'sflag constant byte address 0x0 - dummy sync flag']
  #allocation28 [shape = 's32[]', space=sflag, size = 0x4, offset = 0, fixed_abs, tag = 'sflag constant byte address 0x0 - dummy sync flag']
  #allocation29 [shape = 's32[]', space=sflag, size = 0x4, offset = 0, fixed_abs, tag = 'sflag constant byte address 0x0 - dummy sync flag']
  %s0 = inlined_call_operand.hbm [shape: f32[8,2048], index: 0, kind: input, shape index: {}]
  %s1 = inlined_call_operand.hbm [shape: f32[8,1024], index: 1, kind: input, shape index: {}]
  %s2 = inlined_call_operand.hbm [shape: bf16[2048,1024], index: 2, kind: input, shape index: {}]
  %s3 = inlined_call_operand.hbm [shape: bf16[1024,512], index: 3, kind: input, shape index: {}]
  %s4 = inlined_call_operand.hbm [shape: bf16[512,256], index: 4, kind: input, shape index: {}]
  %s5 = inlined_call_operand.hbm [shape: bf16[256,128], index: 5, kind: input, shape index: {}]
  %s6 = inlined_call_operand.hbm [shape: bf16[128,128], index: 6, kind: input, shape index: {}]
  %s7 = inlined_call_operand.hbm [shape: bf16[128,128], index: 7, kind: input, shape index: {}]
  %s8 = inlined_call_operand.hbm [shape: bf16[128,128], index: 8, kind: input, shape index: {}]
  %s9 = inlined_call_operand.vmem [shape: f32[8,128], index: 9, kind: output, shape index: {}]
  %s10 = sld [smem:[#allocation0]]
  $region42: #{geo_predictor_forward.1} parent=0
    _
  %s12 = ssub.s32 1, %s10
  %s13 = scalar_select 0, %s12, %s10
  $region1: #{geo_predictor_forward.1} parent=0
    #allocation10 [shape = 'u8[65536]{0}', space=vmem, size = 0x10000, scoped, tag = 'input window, operand 0, single buffered']
    #allocation11 [shape = 's32[1]{0}', space=sflag, size = 0x4, scoped, tag = 'scoped memory for geo_predictor_forward.1']
    #allocation12 [shape = 'u8[32768]{0}', space=vmem, size = 0x8000, scoped, tag = 'input window, operand 1, single buffered']
    #allocation13 [shape = 's32[1]{0}', space=sflag, size = 0x4, scoped, tag = 'scoped memory for geo_predictor_forward.1']
    #allocation15 [shape = 'u32[9]{0}', space=smem, size = 0x24, scoped, tag = 'DMA stride descriptor']
    #allocation17 [shape = 'u32[9]{0}', space=smem, size = 0x24, scoped, tag = 'DMA stride descriptor']
    #allocation19 [shape = 'u32[9]{0}', space=smem, size = 0x24, scoped, tag = 'DMA stride descriptor']
    %14 = vsyncpa [#allocation11], 0
    %15 = vsyncpa [#allocation13], 0
    // Predicated region
    $region2: #{geo_predictor_forward.1} parent=1 // pred_check
      _
    $region3: #{geo_predictor_forward.1} parent=1 // pred_check_branch
      %17 = sbr.rel (0) target = $region5
    $region4: #{geo_predictor_forward.1} parent=1 // pred_region
      %s19 = ssub.s32 2048, 2048
      %20 = vsyncadd [#allocation11], %s19
      %s22 = sshll.u32 [#allocation10], 4
      %s23 = int_to_ptr.vmem [resolvable:$true] %s22
      %25 = dma.hbm_to_vmem [thread:$0]  %s0, 2048, %s23, [#allocation11]
    $region5: #{geo_predictor_forward.1} parent=1 // pred_fallthru
      _
    // Predicated region
    $region6: #{geo_predictor_forward.1} parent=1 // pred_check
      _
    $region7: #{geo_predictor_forward.1} parent=1 // pred_check_branch
      %27 = sbr.rel (0) target = $region9
    $region8: #{geo_predictor_forward.1} parent=1 // pred_region
      %s29 = ssub.s32 1024, 1024
      %30 = vsyncadd [#allocation13], %s29
      %s32 = sshll.u32 [#allocation12], 4
      %s33 = int_to_ptr.vmem [resolvable:$true] %s32
      %35 = dma.hbm_to_vmem [thread:$0]  %s1, 1024, %s33, [#allocation13]
    $region9: #{geo_predictor_forward.1} parent=1 // pred_fallthru
      _
    // Predicated region
    $region10: #{geo_predictor_forward.1} parent=1 // pred_check
      _
    $region11: #{geo_predictor_forward.1} parent=1 // pred_check_branch
      %37 = sbr.rel (0) target = $region13
    $region12: #{geo_predictor_forward.1} parent=1 // pred_region
      %38 = dma.done [#allocation11], 2048
    $region13: #{geo_predictor_forward.1} parent=1 // pred_fallthru
      _
    // Predicated region
    $region14: #{geo_predictor_forward.1} parent=1 // pred_check
      _
    $region15: #{geo_predictor_forward.1} parent=1 // pred_check_branch
      %40 = sbr.rel (0) target = $region17
    $region16: #{geo_predictor_forward.1} parent=1 // pred_region
      %41 = dma.done [#allocation13], 1024
    $region17: #{geo_predictor_forward.1} parent=1 // pred_fallthru
      _
    %s44 = sshll.u32 1, 14
    %s45 = sxor.u32 4294967295, %s44
    %s47 = sld [smem:[#allocation0]]
    %s48 = sadd.s32 2, %s47
    %s50 = sshll.u32 7, 26
    %s51 = sxor.u32 4294967295, %s50
    %s52 = sand.u32 0, %s51
    %s53 = sshll.u32 %s48, 26
    %s54 = sor.u32 %s52, %s53
    %s55 = sshll.u32 [#allocation2], 4
    %s56 = int_to_ptr.vmem [resolvable:$true] %s55
    %59 = sst [smem:[#allocation15]] 1024
    %s60 = scalar_lea.smem [#allocation15], 1
    %61 = sst [smem:[%s60]] 1024
    %s62 = scalar_lea.smem [#allocation15], 2
    %63 = sst [smem:[%s62]] 8
    %s64 = scalar_lea.smem [#allocation15], 3
    %65 = sst [smem:[%s64]] 64
    %s66 = scalar_lea.smem [#allocation15], 4
    %67 = sst [smem:[%s66]] 128
    %s68 = scalar_lea.smem [#allocation15], 5
    %69 = sst [smem:[%s68]] 2
    %s70 = scalar_lea.smem [#allocation15], 6
    %71 = sst [smem:[%s70]] 512
    %s72 = scalar_lea.smem [#allocation15], 7
    %73 = sst [smem:[%s72]] 64
    %s74 = scalar_lea.smem [#allocation15], 8
    %75 = sst [smem:[%s74]] 4
    %77 = dma.general %s2, 131072, %s56, [#allocation9], [#allocation14], [#allocation15], %s54, 0
    %s78 = scalar_lea.sflag [#allocation9], 1
    %s80 = sshll.u32 1, 14
    %s81 = sxor.u32 4294967295, %s80
    %s83 = sadd.s32 2, %s47
    %s85 = sshll.u32 7, 26
    %s86 = sxor.u32 4294967295, %s85
    %s87 = sand.u32 0, %s86
    %s88 = sshll.u32 %s83, 26
    %s89 = sor.u32 %s87, %s88
    %s90 = sshll.u32 [#allocation3], 4
    %s91 = int_to_ptr.vmem [resolvable:$true] %s90
    %94 = sst [smem:[#allocation17]] 512
    %s95 = scalar_lea.smem [#allocation17], 1
    %96 = sst [smem:[%s95]] 512
    %s97 = scalar_lea.smem [#allocation17], 2
    %98 = sst [smem:[%s97]] 4
    %s99 = scalar_lea.smem [#allocation17], 3
    %100 = sst [smem:[%s99]] 64
    %s101 = scalar_lea.smem [#allocation17], 4
    %102 = sst [smem:[%s101]] 128
    %s103 = scalar_lea.smem [#allocation17], 5
    %104 = sst [smem:[%s103]] 2
    %s105 = scalar_lea.smem [#allocation17], 6
    %106 = sst [smem:[%s105]] 256
    %s107 = scalar_lea.smem [#allocation17], 7
    %108 = sst [smem:[%s107]] 64
    %s109 = scalar_lea.smem [#allocation17], 8
    %110 = sst [smem:[%s109]] 4
    %112 = dma.general %s3, 32768, %s91, %s78, [#allocation16], [#allocation17], %s89, 0
    %s113 = scalar_lea.sflag [#allocation9], 2
    %s115 = sshll.u32 1, 14
    %s116 = sxor.u32 4294967295, %s115
    %s118 = sadd.s32 2, %s47
    %s120 = sshll.u32 7, 26
    %s121 = sxor.u32 4294967295, %s120
    %s122 = sand.u32 0, %s121
    %s123 = sshll.u32 %s118, 26
    %s124 = sor.u32 %s122, %s123
    %s125 = sshll.u32 [#allocation4], 4
    %s126 = int_to_ptr.vmem [resolvable:$true] %s125
    %129 = sst [smem:[#allocation19]] 256
    %s130 = scalar_lea.smem [#allocation19], 1
    %131 = sst [smem:[%s130]] 256
    %s132 = scalar_lea.smem [#allocation19], 2
    %133 = sst [smem:[%s132]] 2
    %s134 = scalar_lea.smem [#allocation19], 3
    %135 = sst [smem:[%s134]] 64
    %s136 = scalar_lea.smem [#allocation19], 4
    %137 = sst [smem:[%s136]] 128
    %s138 = scalar_lea.smem [#allocation19], 5
    %139 = sst [smem:[%s138]] 2
    %s140 = scalar_lea.smem [#allocation19], 6
    %141 = sst [smem:[%s140]] 128
    %s142 = scalar_lea.smem [#allocation19], 7
    %143 = sst [smem:[%s142]] 64
    %s144 = scalar_lea.smem [#allocation19], 8
    %145 = sst [smem:[%s144]] 4
    %147 = dma.general %s4, 8192, %s126, %s113, [#allocation18], [#allocation19], %s124, 0
    %s148 = scalar_lea.sflag [#allocation9], 3
    // Predicated region
    $region18: #{geo_predictor_forward.1} parent=1 // pred_check
      _
    $region19: #{geo_predictor_forward.1} parent=1 // pred_check_branch
      %150 = sbr.rel target = $region21
    $region20: #{geo_predictor_forward.1} parent=1 // pred_region
      %151 = sst [smem:[#allocation22]] [#allocation21]
      %152 = sst [smem:[#allocation23]] [#allocation20]
    $region21: #{geo_predictor_forward.1} parent=1 // pred_fallthru
      _
    %154 = shalt.err (0)
    %s156 = sshll.u32 [#allocation5], 4
    %s157 = int_to_ptr.vmem [resolvable:$true] %s156
    %159 = dma.hbm_to_vmem [thread:$0]  %s5, 2048, %s157, %s148
    %s160 = scalar_lea.sflag [#allocation9], 4
    // Predicated region
    $region22: #{geo_predictor_forward.1} parent=1 // pred_check
      _
    $region23: #{geo_predictor_forward.1} parent=1 // pred_check_branch
      %162 = sbr.rel target = $region25
    $region24: #{geo_predictor_forward.1} parent=1 // pred_region
      %163 = sst [smem:[#allocation22]] [#allocation25]
      %164 = sst [smem:[#allocation23]] [#allocation24]
    $region25: #{geo_predictor_forward.1} parent=1 // pred_fallthru
      _
    %166 = shalt.err (0)
    %s168 = sshll.u32 [#allocation6], 4
    %s169 = int_to_ptr.vmem [resolvable:$true] %s168
    %171 = dma.hbm_to_vmem [thread:$0]  %s6, 1024, %s169, %s160
    %s172 = scalar_lea.sflag [#allocation9], 5
    // Predicated region
    $region26: #{geo_predictor_forward.1} parent=1 // pred_check
      _
    $region27: #{geo_predictor_forward.1} parent=1 // pred_check_branch
      %174 = sbr.rel target = $region29
    $region28: #{geo_predictor_forward.1} parent=1 // pred_region
      %175 = sst [smem:[#allocation22]] [#allocation27]
      %176 = sst [smem:[#allocation23]] [#allocation26]
    $region29: #{geo_predictor_forward.1} parent=1 // pred_fallthru
      _
    %178 = shalt.err (0)
    %s180 = sshll.u32 [#allocation7], 4
    %s181 = int_to_ptr.vmem [resolvable:$true] %s180
    %183 = dma.hbm_to_vmem [thread:$0]  %s7, 1024, %s181, %s172
    %s184 = scalar_lea.sflag [#allocation9], 6
    // Predicated region
    $region30: #{geo_predictor_forward.1} parent=1 // pred_check
      _
    $region31: #{geo_predictor_forward.1} parent=1 // pred_check_branch
      %186 = sbr.rel target = $region33
    $region32: #{geo_predictor_forward.1} parent=1 // pred_region
      %187 = sst [smem:[#allocation22]] [#allocation29]
      %188 = sst [smem:[#allocation23]] [#allocation28]
    $region33: #{geo_predictor_forward.1} parent=1 // pred_fallthru
      _
    %190 = shalt.err (0)
    %s192 = sshll.u32 [#allocation8], 4
    %s193 = int_to_ptr.vmem [resolvable:$true] %s192
    %195 = dma.hbm_to_vmem [thread:$0]  %s8, 1024, %s193, %s184
    %v196 = vld [vmem:[#allocation10] sm:$0xff]
    %v197 = vld [vmem:[#allocation10 + $0x8] sm:$0xff]
    %v198 = vld [vmem:[#allocation10 + $0x10] sm:$0xff]
    %v199 = vld [vmem:[#allocation10 + $0x18] sm:$0xff]
    %v200 = vld [vmem:[#allocation10 + $0x20] sm:$0xff]
    %v201 = vld [vmem:[#allocation10 + $0x28] sm:$0xff]
    %v202 = vld [vmem:[#allocation10 + $0x30] sm:$0xff]
    %v203 = vld [vmem:[#allocation10 + $0x38] sm:$0xff]
    %v204 = vld [vmem:[#allocation10 + $0x40] sm:$0xff]
    %v205 = vld [vmem:[#allocation10 + $0x48] sm:$0xff]
    %v206 = vld [vmem:[#allocation10 + $0x50] sm:$0xff]
    %v207 = vld [vmem:[#allocation10 + $0x58] sm:$0xff]
    %v208 = vld [vmem:[#allocation10 + $0x60] sm:$0xff]
    %v209 = vld [vmem:[#allocation10 + $0x68] sm:$0xff]
    %v210 = vld [vmem:[#allocation10 + $0x70] sm:$0xff]
    %v211 = vld [vmem:[#allocation10 + $0x78] sm:$0xff]
    %v212 = vpack.c.bf16 %v196, %v196
    %v213 = vpack.c.bf16 %v197, %v197
    %v214 = vpack.c.bf16 %v198, %v198
    %v215 = vpack.c.bf16 %v199, %v199
    %v216 = vpack.c.bf16 %v200, %v200
    %v217 = vpack.c.bf16 %v201, %v201
    %v218 = vpack.c.bf16 %v202, %v202
    %v219 = vpack.c.bf16 %v203, %v203
    %v220 = vpack.c.bf16 %v204, %v204
    %v221 = vpack.c.bf16 %v205, %v205
    %v222 = vpack.c.bf16 %v206, %v206
    %v223 = vpack.c.bf16 %v207, %v207
    %v224 = vpack.c.bf16 %v208, %v208
    %v225 = vpack.c.bf16 %v209, %v209
    %v226 = vpack.c.bf16 %v210, %v210
    %v227 = vpack.c.bf16 %v211, %v211
    %s228 = smul.u32 4, 256
    %s229 = smul.u32 %s228, 8
    %s230 = sshll.u32 %s229, 4
    %231 = dma.done [#allocation9], %s230
    %v232 = vld [vmem:[#allocation2] sm:$0xff]
    %v233 = vld [vmem:[#allocation2 + $0x8] sm:$0xff]
    %v234 = vld [vmem:[#allocation2 + $0x10] sm:$0xff]
    %v235 = vld [vmem:[#allocation2 + $0x18] sm:$0xff]
    %v236 = vld [vmem:[#allocation2 + $0x20] sm:$0xff]
    %v237 = vld [vmem:[#allocation2 + $0x28] sm:$0xff]
    %v238 = vld [vmem:[#allocation2 + $0x30] sm:$0xff]
    %v239 = vld [vmem:[#allocation2 + $0x38] sm:$0xff]
    %v240 = vld [vmem:[#allocation2 + $0x40] sm:$0xff]
    %v241 = vld [vmem:[#allocation2 + $0x48] sm:$0xff]
    %v242 = vld [vmem:[#allocation2 + $0x50] sm:$0xff]
    %v243 = vld [vmem:[#allocation2 + $0x58] sm:$0xff]
    %v244 = vld [vmem:[#allocation2 + $0x60] sm:$0xff]
    %v245 = vld [vmem:[#allocation2 + $0x68] sm:$0xff]
    %v246 = vld [vmem:[#allocation2 + $0x70] sm:$0xff]
    %v247 = vld [vmem:[#allocation2 + $0x78] sm:$0xff]
    %v248 = vld [vmem:[#allocation2 + $0x80] sm:$0xff]
    %v249 = vld [vmem:[#allocation2 + $0x88] sm:$0xff]
    %v250 = vld [vmem:[#allocation2 + $0x90] sm:$0xff]
    %v251 = vld [vmem:[#allocation2 + $0x98] sm:$0xff]
    %v252 = vld [vmem:[#allocation2 + $0xa0] sm:$0xff]
    %v253 = vld [vmem:[#allocation2 + $0xa8] sm:$0xff]
    %v254 = vld [vmem:[#allocation2 + $0xb0] sm:$0xff]
    %v255 = vld [vmem:[#allocation2 + $0xb8] sm:$0xff]
    %v256 = vld [vmem:[#allocation2 + $0xc0] sm:$0xff]
    %v257 = vld [vmem:[#allocation2 + $0xc8] sm:$0xff]
    %v258 = vld [vmem:[#allocation2 + $0xd0] sm:$0xff]
    %v259 = vld [vmem:[#allocation2 + $0xd8] sm:$0xff]
    %v260 = vld [vmem:[#allocation2 + $0xe0] sm:$0xff]
    %v261 = vld [vmem:[#allocation2 + $0xe8] sm:$0xff]
    %v262 = vld [vmem:[#allocation2 + $0xf0] sm:$0xff]
    %v263 = vld [vmem:[#allocation2 + $0xf8] sm:$0xff]
    %v264 = vld [vmem:[#allocation2 + $0x100] sm:$0xff]
    %v265 = vld [vmem:[#allocation2 + $0x108] sm:$0xff]
    %v266 = vld [vmem:[#allocation2 + $0x110] sm:$0xff]
    %v267 = vld [vmem:[#allocation2 + $0x118] sm:$0xff]
    %v268 = vld [vmem:[#allocation2 + $0x120] sm:$0xff]
    %v269 = vld [vmem:[#allocation2 + $0x128] sm:$0xff]
    %v270 = vld [vmem:[#allocation2 + $0x130] sm:$0xff]
    %v271 = vld [vmem:[#allocation2 + $0x138] sm:$0xff]
    %v272 = vld [vmem:[#allocation2 + $0x140] sm:$0xff]
    %v273 = vld [vmem:[#allocation2 + $0x148] sm:$0xff]
    %v274 = vld [vmem:[#allocation2 + $0x150] sm:$0xff]
    %v275 = vld [vmem:[#allocation2 + $0x158] sm:$0xff]
    %v276 = vld [vmem:[#allocation2 + $0x160] sm:$0xff]
    %v277 = vld [vmem:[#allocation2 + $0x168] sm:$0xff]
    %v278 = vld [vmem:[#allocation2 + $0x170] sm:$0xff]
    %v279 = vld [vmem:[#allocation2 + $0x178] sm:$0xff]
    %v280 = vld [vmem:[#allocation2 + $0x180] sm:$0xff]
    %v281 = vld [vmem:[#allocation2 + $0x188] sm:$0xff]
    %v282 = vld [vmem:[#allocation2 + $0x190] sm:$0xff]
    %v283 = vld [vmem:[#allocation2 + $0x198] sm:$0xff]
    %v284 = vld [vmem:[#allocation2 + $0x1a0] sm:$0xff]
    %v285 = vld [vmem:[#allocation2 + $0x1a8] sm:$0xff]
    %v286 = vld [vmem:[#allocation2 + $0x1b0] sm:$0xff]
    %v287 = vld [vmem:[#allocation2 + $0x1b8] sm:$0xff]
    %v288 = vld [vmem:[#allocation2 + $0x1c0] sm:$0xff]
    %v289 = vld [vmem:[#allocation2 + $0x1c8] sm:$0xff]
    %v290 = vld [vmem:[#allocation2 + $0x1d0] sm:$0xff]
    %v291 = vld [vmem:[#allocation2 + $0x1d8] sm:$0xff]
    %v292 = vld [vmem:[#allocation2 + $0x1e0] sm:$0xff]
    %v293 = vld [vmem:[#allocation2 + $0x1e8] sm:$0xff]
    %v294 = vld [vmem:[#allocation2 + $0x1f0] sm:$0xff]
    %v295 = vld [vmem:[#allocation2 + $0x1f8] sm:$0xff]
    %v296 = vld [vmem:[#allocation2 + $0x200] sm:$0xff]
    %v297 = vld [vmem:[#allocation2 + $0x208] sm:$0xff]
    %v298 = vld [vmem:[#allocation2 + $0x210] sm:$0xff]
    %v299 = vld [vmem:[#allocation2 + $0x218] sm:$0xff]
    %v300 = vld [vmem:[#allocation2 + $0x220] sm:$0xff]
    %v301 = vld [vmem:[#allocation2 + $0x228] sm:$0xff]
    %v302 = vld [vmem:[#allocation2 + $0x230] sm:$0xff]
    %v303 = vld [vmem:[#allocation2 + $0x238] sm:$0xff]
    %v304 = vld [vmem:[#allocation2 + $0x240] sm:$0xff]
    %v305 = vld [vmem:[#allocation2 + $0x248] sm:$0xff]
    %v306 = vld [vmem:[#allocation2 + $0x250] sm:$0xff]
    %v307 = vld [vmem:[#allocation2 + $0x258] sm:$0xff]
    %v308 = vld [vmem:[#allocation2 + $0x260] sm:$0xff]
    %v309 = vld [vmem:[#allocation2 + $0x268] sm:$0xff]
    %v310 = vld [vmem:[#allocation2 + $0x270] sm:$0xff]
    %v311 = vld [vmem:[#allocation2 + $0x278] sm:$0xff]
    %v312 = vld [vmem:[#allocation2 + $0x280] sm:$0xff]
    %v313 = vld [vmem:[#allocation2 + $0x288] sm:$0xff]
    %v314 = vld [vmem:[#allocation2 + $0x290] sm:$0xff]
    %v315 = vld [vmem:[#allocation2 + $0x298] sm:$0xff]
    %v316 = vld [vmem:[#allocation2 + $0x2a0] sm:$0xff]
    %v317 = vld [vmem:[#allocation2 + $0x2a8] sm:$0xff]
    %v318 = vld [vmem:[#allocation2 + $0x2b0] sm:$0xff]
    %v319 = vld [vmem:[#allocation2 + $0x2b8] sm:$0xff]
    %v320 = vld [vmem:[#allocation2 + $0x2c0] sm:$0xff]
    %v321 = vld [vmem:[#allocation2 + $0x2c8] sm:$0xff]
    %v322 = vld [vmem:[#allocation2 + $0x2d0] sm:$0xff]
    %v323 = vld [vmem:[#allocation2 + $0x2d8] sm:$0xff]
    %v324 = vld [vmem:[#allocation2 + $0x2e0] sm:$0xff]
    %v325 = vld [vmem:[#allocation2 + $0x2e8] sm:$0xff]
    %v326 = vld [vmem:[#allocation2 + $0x2f0] sm:$0xff]
    %v327 = vld [vmem:[#allocation2 + $0x2f8] sm:$0xff]
    %v328 = vld [vmem:[#allocation2 + $0x300] sm:$0xff]
    %v329 = vld [vmem:[#allocation2 + $0x308] sm:$0xff]
    %v330 = vld [vmem:[#allocation2 + $0x310] sm:$0xff]
    %v331 = vld [vmem:[#allocation2 + $0x318] sm:$0xff]
    %v332 = vld [vmem:[#allocation2 + $0x320] sm:$0xff]
    %v333 = vld [vmem:[#allocation2 + $0x328] sm:$0xff]
    %v334 = vld [vmem:[#allocation2 + $0x330] sm:$0xff]
    %v335 = vld [vmem:[#allocation2 + $0x338] sm:$0xff]
    %v336 = vld [vmem:[#allocation2 + $0x340] sm:$0xff]
    %v337 = vld [vmem:[#allocation2 + $0x348] sm:$0xff]
    %v338 = vld [vmem:[#allocation2 + $0x350] sm:$0xff]
    %v339 = vld [vmem:[#allocation2 + $0x358] sm:$0xff]
    %v340 = vld [vmem:[#allocation2 + $0x360] sm:$0xff]
    %v341 = vld [vmem:[#allocation2 + $0x368] sm:$0xff]
    %v342 = vld [vmem:[#allocation2 + $0x370] sm:$0xff]
    %v343 = vld [vmem:[#allocation2 + $0x378] sm:$0xff]
    %v344 = vld [vmem:[#allocation2 + $0x380] sm:$0xff]
    %v345 = vld [vmem:[#allocation2 + $0x388] sm:$0xff]
    %v346 = vld [vmem:[#allocation2 + $0x390] sm:$0xff]
    %v347 = vld [vmem:[#allocation2 + $0x398] sm:$0xff]
    %v348 = vld [vmem:[#allocation2 + $0x3a0] sm:$0xff]
    %v349 = vld [vmem:[#allocation2 + $0x3a8] sm:$0xff]
    %v350 = vld [vmem:[#allocation2 + $0x3b0] sm:$0xff]
    %v351 = vld [vmem:[#allocation2 + $0x3b8] sm:$0xff]
    %v352 = vld [vmem:[#allocation2 + $0x3c0] sm:$0xff]
    %v353 = vld [vmem:[#allocation2 + $0x3c8] sm:$0xff]
    %v354 = vld [vmem:[#allocation2 + $0x3d0] sm:$0xff]
    %v355 = vld [vmem:[#allocation2 + $0x3d8] sm:$0xff]
    %v356 = vld [vmem:[#allocation2 + $0x3e0] sm:$0xff]
    %v357 = vld [vmem:[#allocation2 + $0x3e8] sm:$0xff]
    %v358 = vld [vmem:[#allocation2 + $0x3f0] sm:$0xff]
    %v359 = vld [vmem:[#allocation2 + $0x3f8] sm:$0xff]
    %v360 = vld [vmem:[#allocation2 + $0x400] sm:$0xff]
    %v361 = vld [vmem:[#allocation2 + $0x408] sm:$0xff]
    %v362 = vld [vmem:[#allocation2 + $0x410] sm:$0xff]
    %v363 = vld [vmem:[#allocation2 + $0x418] sm:$0xff]
    %v364 = vld [vmem:[#allocation2 + $0x420] sm:$0xff]
    %v365 = vld [vmem:[#allocation2 + $0x428] sm:$0xff]
    %v366 = vld [vmem:[#allocation2 + $0x430] sm:$0xff]
    %v367 = vld [vmem:[#allocation2 + $0x438] sm:$0xff]
    %v368 = vld [vmem:[#allocation2 + $0x440] sm:$0xff]
    %v369 = vld [vmem:[#allocation2 + $0x448] sm:$0xff]
    %v370 = vld [vmem:[#allocation2 + $0x450] sm:$0xff]
    %v371 = vld [vmem:[#allocation2 + $0x458] sm:$0xff]
    %v372 = vld [vmem:[#allocation2 + $0x460] sm:$0xff]
    %v373 = vld [vmem:[#allocation2 + $0x468] sm:$0xff]
    %v374 = vld [vmem:[#allocation2 + $0x470] sm:$0xff]
    %v375 = vld [vmem:[#allocation2 + $0x478] sm:$0xff]
    %v376 = vld [vmem:[#allocation2 + $0x480] sm:$0xff]
    %v377 = vld [vmem:[#allocation2 + $0x488] sm:$0xff]
    %v378 = vld [vmem:[#allocation2 + $0x490] sm:$0xff]
    %v379 = vld [vmem:[#allocation2 + $0x498] sm:$0xff]
    %v380 = vld [vmem:[#allocation2 + $0x4a0] sm:$0xff]
    %v381 = vld [vmem:[#allocation2 + $0x4a8] sm:$0xff]
    %v382 = vld [vmem:[#allocation2 + $0x4b0] sm:$0xff]
    %v383 = vld [vmem:[#allocation2 + $0x4b8] sm:$0xff]
    %v384 = vld [vmem:[#allocation2 + $0x4c0] sm:$0xff]
    %v385 = vld [vmem:[#allocation2 + $0x4c8] sm:$0xff]
    %v386 = vld [vmem:[#allocation2 + $0x4d0] sm:$0xff]
    %v387 = vld [vmem:[#allocation2 + $0x4d8] sm:$0xff]
    %v388 = vld [vmem:[#allocation2 + $0x4e0] sm:$0xff]
    %v389 = vld [vmem:[#allocation2 + $0x4e8] sm:$0xff]
    %v390 = vld [vmem:[#allocation2 + $0x4f0] sm:$0xff]
    %v391 = vld [vmem:[#allocation2 + $0x4f8] sm:$0xff]
    %v392 = vld [vmem:[#allocation2 + $0x500] sm:$0xff]
    %v393 = vld [vmem:[#allocation2 + $0x508] sm:$0xff]
    %v394 = vld [vmem:[#allocation2 + $0x510] sm:$0xff]
    %v395 = vld [vmem:[#allocation2 + $0x518] sm:$0xff]
    %v396 = vld [vmem:[#allocation2 + $0x520] sm:$0xff]
    %v397 = vld [vmem:[#allocation2 + $0x528] sm:$0xff]
    %v398 = vld [vmem:[#allocation2 + $0x530] sm:$0xff]
    %v399 = vld [vmem:[#allocation2 + $0x538] sm:$0xff]
    %v400 = vld [vmem:[#allocation2 + $0x540] sm:$0xff]
    %v401 = vld [vmem:[#allocation2 + $0x548] sm:$0xff]
    %v402 = vld [vmem:[#allocation2 + $0x550] sm:$0xff]
    %v403 = vld [vmem:[#allocation2 + $0x558] sm:$0xff]
    %v404 = vld [vmem:[#allocation2 + $0x560] sm:$0xff]
    %v405 = vld [vmem:[#allocation2 + $0x568] sm:$0xff]
    %v406 = vld [vmem:[#allocation2 + $0x570] sm:$0xff]
    %v407 = vld [vmem:[#allocation2 + $0x578] sm:$0xff]
    %v408 = vld [vmem:[#allocation2 + $0x580] sm:$0xff]
    %v409 = vld [vmem:[#allocation2 + $0x588] sm:$0xff]
    %v410 = vld [vmem:[#allocation2 + $0x590] sm:$0xff]
    %v411 = vld [vmem:[#allocation2 + $0x598] sm:$0xff]
    %v412 = vld [vmem:[#allocation2 + $0x5a0] sm:$0xff]
    %v413 = vld [vmem:[#allocation2 + $0x5a8] sm:$0xff]
    %v414 = vld [vmem:[#allocation2 + $0x5b0] sm:$0xff]
    %v415 = vld [vmem:[#allocation2 + $0x5b8] sm:$0xff]
    %v416 = vld [vmem:[#allocation2 + $0x5c0] sm:$0xff]
    %v417 = vld [vmem:[#allocation2 + $0x5c8] sm:$0xff]
    %v418 = vld [vmem:[#allocation2 + $0x5d0] sm:$0xff]
    %v419 = vld [vmem:[#allocation2 + $0x5d8] sm:$0xff]
    %v420 = vld [vmem:[#allocation2 + $0x5e0] sm:$0xff]
    %v421 = vld [vmem:[#allocation2 + $0x5e8] sm:$0xff]
    %v422 = vld [vmem:[#allocation2 + $0x5f0] sm:$0xff]
    %v423 = vld [vmem:[#allocation2 + $0x5f8] sm:$0xff]
    %v424 = vld [vmem:[#allocation2 + $0x600] sm:$0xff]
    %v425 = vld [vmem:[#allocation2 + $0x608] sm:$0xff]
    %v426 = vld [vmem:[#allocation2 + $0x610] sm:$0xff]
    %v427 = vld [vmem:[#allocation2 + $0x618] sm:$0xff]
    %v428 = vld [vmem:[#allocation2 + $0x620] sm:$0xff]
    %v429 = vld [vmem:[#allocation2 + $0x628] sm:$0xff]
    %v430 = vld [vmem:[#allocation2 + $0x630] sm:$0xff]
    %v431 = vld [vmem:[#allocation2 + $0x638] sm:$0xff]
    %v432 = vld [vmem:[#allocation2 + $0x640] sm:$0xff]
    %v433 = vld [vmem:[#allocation2 + $0x648] sm:$0xff]
    %v434 = vld [vmem:[#allocation2 + $0x650] sm:$0xff]
    %v435 = vld [vmem:[#allocation2 + $0x658] sm:$0xff]
    %v436 = vld [vmem:[#allocation2 + $0x660] sm:$0xff]
    %v437 = vld [vmem:[#allocation2 + $0x668] sm:$0xff]
    %v438 = vld [vmem:[#allocation2 + $0x670] sm:$0xff]
    %v439 = vld [vmem:[#allocation2 + $0x678] sm:$0xff]
    %v440 = vld [vmem:[#allocation2 + $0x680] sm:$0xff]
    %v441 = vld [vmem:[#allocation2 + $0x688] sm:$0xff]
    %v442 = vld [vmem:[#allocation2 + $0x690] sm:$0xff]
    %v443 = vld [vmem:[#allocation2 + $0x698] sm:$0xff]
    %v444 = vld [vmem:[#allocation2 + $0x6a0] sm:$0xff]
    %v445 = vld [vmem:[#allocation2 + $0x6a8] sm:$0xff]
    %v446 = vld [vmem:[#allocation2 + $0x6b0] sm:$0xff]
    %v447 = vld [vmem:[#allocation2 + $0x6b8] sm:$0xff]
    %v448 = vld [vmem:[#allocation2 + $0x6c0] sm:$0xff]
    %v449 = vld [vmem:[#allocation2 + $0x6c8] sm:$0xff]
    %v450 = vld [vmem:[#allocation2 + $0x6d0] sm:$0xff]
    %v451 = vld [vmem:[#allocation2 + $0x6d8] sm:$0xff]
    %v452 = vld [vmem:[#allocation2 + $0x6e0] sm:$0xff]
    %v453 = vld [vmem:[#allocation2 + $0x6e8] sm:$0xff]
    %v454 = vld [vmem:[#allocation2 + $0x6f0] sm:$0xff]
    %v455 = vld [vmem:[#allocation2 + $0x6f8] sm:$0xff]
    %v456 = vld [vmem:[#allocation2 + $0x700] sm:$0xff]
    %v457 = vld [vmem:[#allocation2 + $0x708] sm:$0xff]
    %v458 = vld [vmem:[#allocation2 + $0x710] sm:$0xff]
    %v459 = vld [vmem:[#allocation2 + $0x718] sm:$0xff]
    %v460 = vld [vmem:[#allocation2 + $0x720] sm:$0xff]
    %v461 = vld [vmem:[#allocation2 + $0x728] sm:$0xff]
    %v462 = vld [vmem:[#allocation2 + $0x730] sm:$0xff]
    %v463 = vld [vmem:[#allocation2 + $0x738] sm:$0xff]
    %v464 = vld [vmem:[#allocation2 + $0x740] sm:$0xff]
    %v465 = vld [vmem:[#allocation2 + $0x748] sm:$0xff]
    %v466 = vld [vmem:[#allocation2 + $0x750] sm:$0xff]
    %v467 = vld [vmem:[#allocation2 + $0x758] sm:$0xff]
    %v468 = vld [vmem:[#allocation2 + $0x760] sm:$0xff]
    %v469 = vld [vmem:[#allocation2 + $0x768] sm:$0xff]
    %v470 = vld [vmem:[#allocation2 + $0x770] sm:$0xff]
    %v471 = vld [vmem:[#allocation2 + $0x778] sm:$0xff]
    %v472 = vld [vmem:[#allocation2 + $0x780] sm:$0xff]
    %v473 = vld [vmem:[#allocation2 + $0x788] sm:$0xff]
    %v474 = vld [vmem:[#allocation2 + $0x790] sm:$0xff]
    %v475 = vld [vmem:[#allocation2 + $0x798] sm:$0xff]
    %v476 = vld [vmem:[#allocation2 + $0x7a0] sm:$0xff]
    %v477 = vld [vmem:[#allocation2 + $0x7a8] sm:$0xff]
    %v478 = vld [vmem:[#allocation2 + $0x7b0] sm:$0xff]
    %v479 = vld [vmem:[#allocation2 + $0x7b8] sm:$0xff]
    %v480 = vld [vmem:[#allocation2 + $0x7c0] sm:$0xff]
    %v481 = vld [vmem:[#allocation2 + $0x7c8] sm:$0xff]
    %v482 = vld [vmem:[#allocation2 + $0x7d0] sm:$0xff]
    %v483 = vld [vmem:[#allocation2 + $0x7d8] sm:$0xff]
    %v484 = vld [vmem:[#allocation2 + $0x7e0] sm:$0xff]
    %v485 = vld [vmem:[#allocation2 + $0x7e8] sm:$0xff]
    %v486 = vld [vmem:[#allocation2 + $0x7f0] sm:$0xff]
    %v487 = vld [vmem:[#allocation2 + $0x7f8] sm:$0xff]
    %v488 = vld [vmem:[#allocation2 + $0x800] sm:$0xff]
    %v489 = vld [vmem:[#allocation2 + $0x808] sm:$0xff]
    %v490 = vld [vmem:[#allocation2 + $0x810] sm:$0xff]
    %v491 = vld [vmem:[#allocation2 + $0x818] sm:$0xff]
    %v492 = vld [vmem:[#allocation2 + $0x820] sm:$0xff]
    %v493 = vld [vmem:[#allocation2 + $0x828] sm:$0xff]
    %v494 = vld [vmem:[#allocation2 + $0x830] sm:$0xff]
    %v495 = vld [vmem:[#allocation2 + $0x838] sm:$0xff]
    %v496 = vld [vmem:[#allocation2 + $0x840] sm:$0xff]
    %v497 = vld [vmem:[#allocation2 + $0x848] sm:$0xff]
    %v498 = vld [vmem:[#allocation2 + $0x850] sm:$0xff]
    %v499 = vld [vmem:[#allocation2 + $0x858] sm:$0xff]
    %v500 = vld [vmem:[#allocation2 + $0x860] sm:$0xff]
    %v501 = vld [vmem:[#allocation2 + $0x868] sm:$0xff]
    %v502 = vld [vmem:[#allocation2 + $0x870] sm:$0xff]
    %v503 = vld [vmem:[#allocation2 + $0x878] sm:$0xff]
    %v504 = vld [vmem:[#allocation2 + $0x880] sm:$0xff]
    %v505 = vld [vmem:[#allocation2 + $0x888] sm:$0xff]
    %v506 = vld [vmem:[#allocation2 + $0x890] sm:$0xff]
    %v507 = vld [vmem:[#allocation2 + $0x898] sm:$0xff]
    %v508 = vld [vmem:[#allocation2 + $0x8a0] sm:$0xff]
    %v509 = vld [vmem:[#allocation2 + $0x8a8] sm:$0xff]
    %v510 = vld [vmem:[#allocation2 + $0x8b0] sm:$0xff]
    %v511 = vld [vmem:[#allocation2 + $0x8b8] sm:$0xff]
    %v512 = vld [vmem:[#allocation2 + $0x8c0] sm:$0xff]
    %v513 = vld [vmem:[#allocation2 + $0x8c8] sm:$0xff]
    %v514 = vld [vmem:[#allocation2 + $0x8d0] sm:$0xff]
    %v515 = vld [vmem:[#allocation2 + $0x8d8] sm:$0xff]
    %v516 = vld [vmem:[#allocation2 + $0x8e0] sm:$0xff]
    %v517 = vld [vmem:[#allocation2 + $0x8e8] sm:$0xff]
    %v518 = vld [vmem:[#allocation2 + $0x8f0] sm:$0xff]
    %v519 = vld [vmem:[#allocation2 + $0x8f8] sm:$0xff]
    %v520 = vld [vmem:[#allocation2 + $0x900] sm:$0xff]
    %v521 = vld [vmem:[#allocation2 + $0x908] sm:$0xff]
    %v522 = vld [vmem:[#allocation2 + $0x910] sm:$0xff]
    %v523 = vld [vmem:[#allocation2 + $0x918] sm:$0xff]
    %v524 = vld [vmem:[#allocation2 + $0x920] sm:$0xff]
    %v525 = vld [vmem:[#allocation2 + $0x928] sm:$0xff]
    %v526 = vld [vmem:[#allocation2 + $0x930] sm:$0xff]
    %v527 = vld [vmem:[#allocation2 + $0x938] sm:$0xff]
    %v528 = vld [vmem:[#allocation2 + $0x940] sm:$0xff]
    %v529 = vld [vmem:[#allocation2 + $0x948] sm:$0xff]
    %v530 = vld [vmem:[#allocation2 + $0x950] sm:$0xff]
    %v531 = vld [vmem:[#allocation2 + $0x958] sm:$0xff]
    %v532 = vld [vmem:[#allocation2 + $0x960] sm:$0xff]
    %v533 = vld [vmem:[#allocation2 + $0x968] sm:$0xff]
    %v534 = vld [vmem:[#allocation2 + $0x970] sm:$0xff]
    %v535 = vld [vmem:[#allocation2 + $0x978] sm:$0xff]
    %v536 = vld [vmem:[#allocation2 + $0x980] sm:$0xff]
    %v537 = vld [vmem:[#allocation2 + $0x988] sm:$0xff]
    %v538 = vld [vmem:[#allocation2 + $0x990] sm:$0xff]
    %v539 = vld [vmem:[#allocation2 + $0x998] sm:$0xff]
    %v540 = vld [vmem:[#allocation2 + $0x9a0] sm:$0xff]
    %v541 = vld [vmem:[#allocation2 + $0x9a8] sm:$0xff]
    %v542 = vld [vmem:[#allocation2 + $0x9b0] sm:$0xff]
    %v543 = vld [vmem:[#allocation2 + $0x9b8] sm:$0xff]
    %v544 = vld [vmem:[#allocation2 + $0x9c0] sm:$0xff]
    %v545 = vld [vmem:[#allocation2 + $0x9c8] sm:$0xff]
    %v546 = vld [vmem:[#allocation2 + $0x9d0] sm:$0xff]
    %v547 = vld [vmem:[#allocation2 + $0x9d8] sm:$0xff]
    %v548 = vld [vmem:[#allocation2 + $0x9e0] sm:$0xff]
    %v549 = vld [vmem:[#allocation2 + $0x9e8] sm:$0xff]
    %v550 = vld [vmem:[#allocation2 + $0x9f0] sm:$0xff]
    %v551 = vld [vmem:[#allocation2 + $0x9f8] sm:$0xff]
    %v552 = vld [vmem:[#allocation2 + $0xa00] sm:$0xff]
    %v553 = vld [vmem:[#allocation2 + $0xa08] sm:$0xff]
    %v554 = vld [vmem:[#allocation2 + $0xa10] sm:$0xff]
    %v555 = vld [vmem:[#allocation2 + $0xa18] sm:$0xff]
    %v556 = vld [vmem:[#allocation2 + $0xa20] sm:$0xff]
    %v557 = vld [vmem:[#allocation2 + $0xa28] sm:$0xff]
    %v558 = vld [vmem:[#allocation2 + $0xa30] sm:$0xff]
    %v559 = vld [vmem:[#allocation2 + $0xa38] sm:$0xff]
    %v560 = vld [vmem:[#allocation2 + $0xa40] sm:$0xff]
    %v561 = vld [vmem:[#allocation2 + $0xa48] sm:$0xff]
    %v562 = vld [vmem:[#allocation2 + $0xa50] sm:$0xff]
    %v563 = vld [vmem:[#allocation2 + $0xa58] sm:$0xff]
    %v564 = vld [vmem:[#allocation2 + $0xa60] sm:$0xff]
    %v565 = vld [vmem:[#allocation2 + $0xa68] sm:$0xff]
    %v566 = vld [vmem:[#allocation2 + $0xa70] sm:$0xff]
    %v567 = vld [vmem:[#allocation2 + $0xa78] sm:$0xff]
    %v568 = vld [vmem:[#allocation2 + $0xa80] sm:$0xff]
    %v569 = vld [vmem:[#allocation2 + $0xa88] sm:$0xff]
    %v570 = vld [vmem:[#allocation2 + $0xa90] sm:$0xff]
    %v571 = vld [vmem:[#allocation2 + $0xa98] sm:$0xff]
    %v572 = vld [vmem:[#allocation2 + $0xaa0] sm:$0xff]
    %v573 = vld [vmem:[#allocation2 + $0xaa8] sm:$0xff]
    %v574 = vld [vmem:[#allocation2 + $0xab0] sm:$0xff]
    %v575 = vld [vmem:[#allocation2 + $0xab8] sm:$0xff]
    %v576 = vld [vmem:[#allocation2 + $0xac0] sm:$0xff]
    %v577 = vld [vmem:[#allocation2 + $0xac8] sm:$0xff]
    %v578 = vld [vmem:[#allocation2 + $0xad0] sm:$0xff]
    %v579 = vld [vmem:[#allocation2 + $0xad8] sm:$0xff]
    %v580 = vld [vmem:[#allocation2 + $0xae0] sm:$0xff]
    %v581 = vld [vmem:[#allocation2 + $0xae8] sm:$0xff]
    %v582 = vld [vmem:[#allocation2 + $0xaf0] sm:$0xff]
    %v583 = vld [vmem:[#allocation2 + $0xaf8] sm:$0xff]
    %v584 = vld [vmem:[#allocation2 + $0xb00] sm:$0xff]
    %v585 = vld [vmem:[#allocation2 + $0xb08] sm:$0xff]
    %v586 = vld [vmem:[#allocation2 + $0xb10] sm:$0xff]
    %v587 = vld [vmem:[#allocation2 + $0xb18] sm:$0xff]
    %v588 = vld [vmem:[#allocation2 + $0xb20] sm:$0xff]
    %v589 = vld [vmem:[#allocation2 + $0xb28] sm:$0xff]
    %v590 = vld [vmem:[#allocation2 + $0xb30] sm:$0xff]
    %v591 = vld [vmem:[#allocation2 + $0xb38] sm:$0xff]
    %v592 = vld [vmem:[#allocation2 + $0xb40] sm:$0xff]
    %v593 = vld [vmem:[#allocation2 + $0xb48] sm:$0xff]
    %v594 = vld [vmem:[#allocation2 + $0xb50] sm:$0xff]
    %v595 = vld [vmem:[#allocation2 + $0xb58] sm:$0xff]
    %v596 = vld [vmem:[#allocation2 + $0xb60] sm:$0xff]
    %v597 = vld [vmem:[#allocation2 + $0xb68] sm:$0xff]
    %v598 = vld [vmem:[#allocation2 + $0xb70] sm:$0xff]
    %v599 = vld [vmem:[#allocation2 + $0xb78] sm:$0xff]
    %v600 = vld [vmem:[#allocation2 + $0xb80] sm:$0xff]
    %v601 = vld [vmem:[#allocation2 + $0xb88] sm:$0xff]
    %v602 = vld [vmem:[#allocation2 + $0xb90] sm:$0xff]
    %v603 = vld [vmem:[#allocation2 + $0xb98] sm:$0xff]
    %v604 = vld [vmem:[#allocation2 + $0xba0] sm:$0xff]
    %v605 = vld [vmem:[#allocation2 + $0xba8] sm:$0xff]
    %v606 = vld [vmem:[#allocation2 + $0xbb0] sm:$0xff]
    %v607 = vld [vmem:[#allocation2 + $0xbb8] sm:$0xff]
    %v608 = vld [vmem:[#allocation2 + $0xbc0] sm:$0xff]
    %v609 = vld [vmem:[#allocation2 + $0xbc8] sm:$0xff]
    %v610 = vld [vmem:[#allocation2 + $0xbd0] sm:$0xff]
    %v611 = vld [vmem:[#allocation2 + $0xbd8] sm:$0xff]
    %v612 = vld [vmem:[#allocation2 + $0xbe0] sm:$0xff]
    %v613 = vld [vmem:[#allocation2 + $0xbe8] sm:$0xff]
    %v614 = vld [vmem:[#allocation2 + $0xbf0] sm:$0xff]
    %v615 = vld [vmem:[#allocation2 + $0xbf8] sm:$0xff]
    %v616 = vld [vmem:[#allocation2 + $0xc00] sm:$0xff]
    %v617 = vld [vmem:[#allocation2 + $0xc08] sm:$0xff]
    %v618 = vld [vmem:[#allocation2 + $0xc10] sm:$0xff]
    %v619 = vld [vmem:[#allocation2 + $0xc18] sm:$0xff]
    %v620 = vld [vmem:[#allocation2 + $0xc20] sm:$0xff]
    %v621 = vld [vmem:[#allocation2 + $0xc28] sm:$0xff]
    %v622 = vld [vmem:[#allocation2 + $0xc30] sm:$0xff]
    %v623 = vld [vmem:[#allocation2 + $0xc38] sm:$0xff]
    %v624 = vld [vmem:[#allocation2 + $0xc40] sm:$0xff]
    %v625 = vld [vmem:[#allocation2 + $0xc48] sm:$0xff]
    %v626 = vld [vmem:[#allocation2 + $0xc50] sm:$0xff]
    %v627 = vld [vmem:[#allocation2 + $0xc58] sm:$0xff]
    %v628 = vld [vmem:[#allocation2 + $0xc60] sm:$0xff]
    %v629 = vld [vmem:[#allocation2 + $0xc68] sm:$0xff]
    %v630 = vld [vmem:[#allocation2 + $0xc70] sm:$0xff]
    %v631 = vld [vmem:[#allocation2 + $0xc78] sm:$0xff]
    %v632 = vld [vmem:[#allocation2 + $0xc80] sm:$0xff]
    %v633 = vld [vmem:[#allocation2 + $0xc88] sm:$0xff]
    %v634 = vld [vmem:[#allocation2 + $0xc90] sm:$0xff]
    %v635 = vld [vmem:[#allocation2 + $0xc98] sm:$0xff]
    %v636 = vld [vmem:[#allocation2 + $0xca0] sm:$0xff]
    %v637 = vld [vmem:[#allocation2 + $0xca8] sm:$0xff]
    %v638 = vld [vmem:[#allocation2 + $0xcb0] sm:$0xff]
    %v639 = vld [vmem:[#allocation2 + $0xcb8] sm:$0xff]
    %v640 = vld [vmem:[#allocation2 + $0xcc0] sm:$0xff]
    %v641 = vld [vmem:[#allocation2 + $0xcc8] sm:$0xff]
    %v642 = vld [vmem:[#allocation2 + $0xcd0] sm:$0xff]
    %v643 = vld [vmem:[#allocation2 + $0xcd8] sm:$0xff]
    %v644 = vld [vmem:[#allocation2 + $0xce0] sm:$0xff]
    %v645 = vld [vmem:[#allocation2 + $0xce8] sm:$0xff]
    %v646 = vld [vmem:[#allocation2 + $0xcf0] sm:$0xff]
    %v647 = vld [vmem:[#allocation2 + $0xcf8] sm:$0xff]
    %v648 = vld [vmem:[#allocation2 + $0xd00] sm:$0xff]
    %v649 = vld [vmem:[#allocation2 + $0xd08] sm:$0xff]
    %v650 = vld [vmem:[#allocation2 + $0xd10] sm:$0xff]
    %v651 = vld [vmem:[#allocation2 + $0xd18] sm:$0xff]
    %v652 = vld [vmem:[#allocation2 + $0xd20] sm:$0xff]
    %v653 = vld [vmem:[#allocation2 + $0xd28] sm:$0xff]
    %v654 = vld [vmem:[#allocation2 + $0xd30] sm:$0xff]
    %v655 = vld [vmem:[#allocation2 + $0xd38] sm:$0xff]
    %v656 = vld [vmem:[#allocation2 + $0xd40] sm:$0xff]
    %v657 = vld [vmem:[#allocation2 + $0xd48] sm:$0xff]
    %v658 = vld [vmem:[#allocation2 + $0xd50] sm:$0xff]
    %v659 = vld [vmem:[#allocation2 + $0xd58] sm:$0xff]
    %v660 = vld [vmem:[#allocation2 + $0xd60] sm:$0xff]
    %v661 = vld [vmem:[#allocation2 + $0xd68] sm:$0xff]
    %v662 = vld [vmem:[#allocation2 + $0xd70] sm:$0xff]
    %v663 = vld [vmem:[#allocation2 + $0xd78] sm:$0xff]
    %v664 = vld [vmem:[#allocation2 + $0xd80] sm:$0xff]
    %v665 = vld [vmem:[#allocation2 + $0xd88] sm:$0xff]
    %v666 = vld [vmem:[#allocation2 + $0xd90] sm:$0xff]
    %v667 = vld [vmem:[#allocation2 + $0xd98] sm:$0xff]
    %v668 = vld [vmem:[#allocation2 + $0xda0] sm:$0xff]
    %v669 = vld [vmem:[#allocation2 + $0xda8] sm:$0xff]
    %v670 = vld [vmem:[#allocation2 + $0xdb0] sm:$0xff]
    %v671 = vld [vmem:[#allocation2 + $0xdb8] sm:$0xff]
    %v672 = vld [vmem:[#allocation2 + $0xdc0] sm:$0xff]
    %v673 = vld [vmem:[#allocation2 + $0xdc8] sm:$0xff]
    %v674 = vld [vmem:[#allocation2 + $0xdd0] sm:$0xff]
    %v675 = vld [vmem:[#allocation2 + $0xdd8] sm:$0xff]
    %v676 = vld [vmem:[#allocation2 + $0xde0] sm:$0xff]
    %v677 = vld [vmem:[#allocation2 + $0xde8] sm:$0xff]
    %v678 = vld [vmem:[#allocation2 + $0xdf0] sm:$0xff]
    %v679 = vld [vmem:[#allocation2 + $0xdf8] sm:$0xff]
    %v680 = vld [vmem:[#allocation2 + $0xe00] sm:$0xff]
    %v681 = vld [vmem:[#allocation2 + $0xe08] sm:$0xff]
    %v682 = vld [vmem:[#allocation2 + $0xe10] sm:$0xff]
    %v683 = vld [vmem:[#allocation2 + $0xe18] sm:$0xff]
    %v684 = vld [vmem:[#allocation2 + $0xe20] sm:$0xff]
    %v685 = vld [vmem:[#allocation2 + $0xe28] sm:$0xff]
    %v686 = vld [vmem:[#allocation2 + $0xe30] sm:$0xff]
    %v687 = vld [vmem:[#allocation2 + $0xe38] sm:$0xff]
    %v688 = vld [vmem:[#allocation2 + $0xe40] sm:$0xff]
    %v689 = vld [vmem:[#allocation2 + $0xe48] sm:$0xff]
    %v690 = vld [vmem:[#allocation2 + $0xe50] sm:$0xff]
    %v691 = vld [vmem:[#allocation2 + $0xe58] sm:$0xff]
    %v692 = vld [vmem:[#allocation2 + $0xe60] sm:$0xff]
    %v693 = vld [vmem:[#allocation2 + $0xe68] sm:$0xff]
    %v694 = vld [vmem:[#allocation2 + $0xe70] sm:$0xff]
    %v695 = vld [vmem:[#allocation2 + $0xe78] sm:$0xff]
    %v696 = vld [vmem:[#allocation2 + $0xe80] sm:$0xff]
    %v697 = vld [vmem:[#allocation2 + $0xe88] sm:$0xff]
    %v698 = vld [vmem:[#allocation2 + $0xe90] sm:$0xff]
    %v699 = vld [vmem:[#allocation2 + $0xe98] sm:$0xff]
    %v700 = vld [vmem:[#allocation2 + $0xea0] sm:$0xff]
    %v701 = vld [vmem:[#allocation2 + $0xea8] sm:$0xff]
    %v702 = vld [vmem:[#allocation2 + $0xeb0] sm:$0xff]
    %v703 = vld [vmem:[#allocation2 + $0xeb8] sm:$0xff]
    %v704 = vld [vmem:[#allocation2 + $0xec0] sm:$0xff]
    %v705 = vld [vmem:[#allocation2 + $0xec8] sm:$0xff]
    %v706 = vld [vmem:[#allocation2 + $0xed0] sm:$0xff]
    %v707 = vld [vmem:[#allocation2 + $0xed8] sm:$0xff]
    %v708 = vld [vmem:[#allocation2 + $0xee0] sm:$0xff]
    %v709 = vld [vmem:[#allocation2 + $0xee8] sm:$0xff]
    %v710 = vld [vmem:[#allocation2 + $0xef0] sm:$0xff]
    %v711 = vld [vmem:[#allocation2 + $0xef8] sm:$0xff]
    %v712 = vld [vmem:[#allocation2 + $0xf00] sm:$0xff]
    %v713 = vld [vmem:[#allocation2 + $0xf08] sm:$0xff]
    %v714 = vld [vmem:[#allocation2 + $0xf10] sm:$0xff]
    %v715 = vld [vmem:[#allocation2 + $0xf18] sm:$0xff]
    %v716 = vld [vmem:[#allocation2 + $0xf20] sm:$0xff]
    %v717 = vld [vmem:[#allocation2 + $0xf28] sm:$0xff]
    %v718 = vld [vmem:[#allocation2 + $0xf30] sm:$0xff]
    %v719 = vld [vmem:[#allocation2 + $0xf38] sm:$0xff]
    %v720 = vld [vmem:[#allocation2 + $0xf40] sm:$0xff]
    %v721 = vld [vmem:[#allocation2 + $0xf48] sm:$0xff]
    %v722 = vld [vmem:[#allocation2 + $0xf50] sm:$0xff]
    %v723 = vld [vmem:[#allocation2 + $0xf58] sm:$0xff]
    %v724 = vld [vmem:[#allocation2 + $0xf60] sm:$0xff]
    %v725 = vld [vmem:[#allocation2 + $0xf68] sm:$0xff]
    %v726 = vld [vmem:[#allocation2 + $0xf70] sm:$0xff]
    %v727 = vld [vmem:[#allocation2 + $0xf78] sm:$0xff]
    %v728 = vld [vmem:[#allocation2 + $0xf80] sm:$0xff]
    %v729 = vld [vmem:[#allocation2 + $0xf88] sm:$0xff]
    %v730 = vld [vmem:[#allocation2 + $0xf90] sm:$0xff]
    %v731 = vld [vmem:[#allocation2 + $0xf98] sm:$0xff]
    %v732 = vld [vmem:[#allocation2 + $0xfa0] sm:$0xff]
    %v733 = vld [vmem:[#allocation2 + $0xfa8] sm:$0xff]
    %v734 = vld [vmem:[#allocation2 + $0xfb0] sm:$0xff]
    %v735 = vld [vmem:[#allocation2 + $0xfb8] sm:$0xff]
    %v736 = vld [vmem:[#allocation2 + $0xfc0] sm:$0xff]
    %v737 = vld [vmem:[#allocation2 + $0xfc8] sm:$0xff]
    %v738 = vld [vmem:[#allocation2 + $0xfd0] sm:$0xff]
    %v739 = vld [vmem:[#allocation2 + $0xfd8] sm:$0xff]
    %v740 = vld [vmem:[#allocation2 + $0xfe0] sm:$0xff]
    %v741 = vld [vmem:[#allocation2 + $0xfe8] sm:$0xff]
    %v742 = vld [vmem:[#allocation2 + $0xff0] sm:$0xff]
    %v743 = vld [vmem:[#allocation2 + $0xff8] sm:$0xff]
    %v744 = vld [vmem:[#allocation2 + $0x1000] sm:$0xff]
    %v745 = vld [vmem:[#allocation2 + $0x1008] sm:$0xff]
    %v746 = vld [vmem:[#allocation2 + $0x1010] sm:$0xff]
    %v747 = vld [vmem:[#allocation2 + $0x1018] sm:$0xff]
    %v748 = vld [vmem:[#allocation2 + $0x1020] sm:$0xff]
    %v749 = vld [vmem:[#allocation2 + $0x1028] sm:$0xff]
    %v750 = vld [vmem:[#allocation2 + $0x1030] sm:$0xff]
    %v751 = vld [vmem:[#allocation2 + $0x1038] sm:$0xff]
    %v752 = vld [vmem:[#allocation2 + $0x1040] sm:$0xff]
    %v753 = vld [vmem:[#allocation2 + $0x1048] sm:$0xff]
    %v754 = vld [vmem:[#allocation2 + $0x1050] sm:$0xff]
    %v755 = vld [vmem:[#allocation2 + $0x1058] sm:$0xff]
    %v756 = vld [vmem:[#allocation2 + $0x1060] sm:$0xff]
    %v757 = vld [vmem:[#allocation2 + $0x1068] sm:$0xff]
    %v758 = vld [vmem:[#allocation2 + $0x1070] sm:$0xff]
    %v759 = vld [vmem:[#allocation2 + $0x1078] sm:$0xff]
    %v760 = vld [vmem:[#allocation2 + $0x1080] sm:$0xff]
    %v761 = vld [vmem:[#allocation2 + $0x1088] sm:$0xff]
    %v762 = vld [vmem:[#allocation2 + $0x1090] sm:$0xff]
    %v763 = vld [vmem:[#allocation2 + $0x1098] sm:$0xff]
    %v764 = vld [vmem:[#allocation2 + $0x10a0] sm:$0xff]
    %v765 = vld [vmem:[#allocation2 + $0x10a8] sm:$0xff]
    %v766 = vld [vmem:[#allocation2 + $0x10b0] sm:$0xff]
    %v767 = vld [vmem:[#allocation2 + $0x10b8] sm:$0xff]
    %v768 = vld [vmem:[#allocation2 + $0x10c0] sm:$0xff]
    %v769 = vld [vmem:[#allocation2 + $0x10c8] sm:$0xff]
    %v770 = vld [vmem:[#allocation2 + $0x10d0] sm:$0xff]
    %v771 = vld [vmem:[#allocation2 + $0x10d8] sm:$0xff]
    %v772 = vld [vmem:[#allocation2 + $0x10e0] sm:$0xff]
    %v773 = vld [vmem:[#allocation2 + $0x10e8] sm:$0xff]
    %v774 = vld [vmem:[#allocation2 + $0x10f0] sm:$0xff]
    %v775 = vld [vmem:[#allocation2 + $0x10f8] sm:$0xff]
    %v776 = vld [vmem:[#allocation2 + $0x1100] sm:$0xff]
    %v777 = vld [vmem:[#allocation2 + $0x1108] sm:$0xff]
    %v778 = vld [vmem:[#allocation2 + $0x1110] sm:$0xff]
    %v779 = vld [vmem:[#allocation2 + $0x1118] sm:$0xff]
    %v780 = vld [vmem:[#allocation2 + $0x1120] sm:$0xff]
    %v781 = vld [vmem:[#allocation2 + $0x1128] sm:$0xff]
    %v782 = vld [vmem:[#allocation2 + $0x1130] sm:$0xff]
    %v783 = vld [vmem:[#allocation2 + $0x1138] sm:$0xff]
    %v784 = vld [vmem:[#allocation2 + $0x1140] sm:$0xff]
    %v785 = vld [vmem:[#allocation2 + $0x1148] sm:$0xff]
    %v786 = vld [vmem:[#allocation2 + $0x1150] sm:$0xff]
    %v787 = vld [vmem:[#allocation2 + $0x1158] sm:$0xff]
    %v788 = vld [vmem:[#allocation2 + $0x1160] sm:$0xff]
    %v789 = vld [vmem:[#allocation2 + $0x1168] sm:$0xff]
    %v790 = vld [vmem:[#allocation2 + $0x1170] sm:$0xff]
    %v791 = vld [vmem:[#allocation2 + $0x1178] sm:$0xff]
    %v792 = vld [vmem:[#allocation2 + $0x1180] sm:$0xff]
    %v793 = vld [vmem:[#allocation2 + $0x1188] sm:$0xff]
    %v794 = vld [vmem:[#allocation2 + $0x1190] sm:$0xff]
    %v795 = vld [vmem:[#allocation2 + $0x1198] sm:$0xff]
    %v796 = vld [vmem:[#allocation2 + $0x11a0] sm:$0xff]
    %v797 = vld [vmem:[#allocation2 + $0x11a8] sm:$0xff]
    %v798 = vld [vmem:[#allocation2 + $0x11b0] sm:$0xff]
    %v799 = vld [vmem:[#allocation2 + $0x11b8] sm:$0xff]
    %v800 = vld [vmem:[#allocation2 + $0x11c0] sm:$0xff]
    %v801 = vld [vmem:[#allocation2 + $0x11c8] sm:$0xff]
    %v802 = vld [vmem:[#allocation2 + $0x11d0] sm:$0xff]
    %v803 = vld [vmem:[#allocation2 + $0x11d8] sm:$0xff]
    %v804 = vld [vmem:[#allocation2 + $0x11e0] sm:$0xff]
    %v805 = vld [vmem:[#allocation2 + $0x11e8] sm:$0xff]
    %v806 = vld [vmem:[#allocation2 + $0x11f0] sm:$0xff]
    %v807 = vld [vmem:[#allocation2 + $0x11f8] sm:$0xff]
    %v808 = vld [vmem:[#allocation2 + $0x1200] sm:$0xff]
    %v809 = vld [vmem:[#allocation2 + $0x1208] sm:$0xff]
    %v810 = vld [vmem:[#allocation2 + $0x1210] sm:$0xff]
    %v811 = vld [vmem:[#allocation2 + $0x1218] sm:$0xff]
    %v812 = vld [vmem:[#allocation2 + $0x1220] sm:$0xff]
    %v813 = vld [vmem:[#allocation2 + $0x1228] sm:$0xff]
    %v814 = vld [vmem:[#allocation2 + $0x1230] sm:$0xff]
    %v815 = vld [vmem:[#allocation2 + $0x1238] sm:$0xff]
    %v816 = vld [vmem:[#allocation2 + $0x1240] sm:$0xff]
    %v817 = vld [vmem:[#allocation2 + $0x1248] sm:$0xff]
    %v818 = vld [vmem:[#allocation2 + $0x1250] sm:$0xff]
    %v819 = vld [vmem:[#allocation2 + $0x1258] sm:$0xff]
    %v820 = vld [vmem:[#allocation2 + $0x1260] sm:$0xff]
    %v821 = vld [vmem:[#allocation2 + $0x1268] sm:$0xff]
    %v822 = vld [vmem:[#allocation2 + $0x1270] sm:$0xff]
    %v823 = vld [vmem:[#allocation2 + $0x1278] sm:$0xff]
    %v824 = vld [vmem:[#allocation2 + $0x1280] sm:$0xff]
    %v825 = vld [vmem:[#allocation2 + $0x1288] sm:$0xff]
    %v826 = vld [vmem:[#allocation2 + $0x1290] sm:$0xff]
    %v827 = vld [vmem:[#allocation2 + $0x1298] sm:$0xff]
    %v828 = vld [vmem:[#allocation2 + $0x12a0] sm:$0xff]
    %v829 = vld [vmem:[#allocation2 + $0x12a8] sm:$0xff]
    %v830 = vld [vmem:[#allocation2 + $0x12b0] sm:$0xff]
    %v831 = vld [vmem:[#allocation2 + $0x12b8] sm:$0xff]
    %v832 = vld [vmem:[#allocation2 + $0x12c0] sm:$0xff]
    %v833 = vld [vmem:[#allocation2 + $0x12c8] sm:$0xff]
    %v834 = vld [vmem:[#allocation2 + $0x12d0] sm:$0xff]
    %v835 = vld [vmem:[#allocation2 + $0x12d8] sm:$0xff]
    %v836 = vld [vmem:[#allocation2 + $0x12e0] sm:$0xff]
    %v837 = vld [vmem:[#allocation2 + $0x12e8] sm:$0xff]
    %v838 = vld [vmem:[#allocation2 + $0x12f0] sm:$0xff]
    %v839 = vld [vmem:[#allocation2 + $0x12f8] sm:$0xff]
    %v840 = vld [vmem:[#allocation2 + $0x1300] sm:$0xff]
    %v841 = vld [vmem:[#allocation2 + $0x1308] sm:$0xff]
    %v842 = vld [vmem:[#allocation2 + $0x1310] sm:$0xff]
    %v843 = vld [vmem:[#allocation2 + $0x1318] sm:$0xff]
    %v844 = vld [vmem:[#allocation2 + $0x1320] sm:$0xff]
    %v845 = vld [vmem:[#allocation2 + $0x1328] sm:$0xff]
    %v846 = vld [vmem:[#allocation2 + $0x1330] sm:$0xff]
    %v847 = vld [vmem:[#allocation2 + $0x1338] sm:$0xff]
    %v848 = vld [vmem:[#allocation2 + $0x1340] sm:$0xff]
    %v849 = vld [vmem:[#allocation2 + $0x1348] sm:$0xff]
    %v850 = vld [vmem:[#allocation2 + $0x1350] sm:$0xff]
    %v851 = vld [vmem:[#allocation2 + $0x1358] sm:$0xff]
    %v852 = vld [vmem:[#allocation2 + $0x1360] sm:$0xff]
    %v853 = vld [vmem:[#allocation2 + $0x1368] sm:$0xff]
    %v854 = vld [vmem:[#allocation2 + $0x1370] sm:$0xff]
    %v855 = vld [vmem:[#allocation2 + $0x1378] sm:$0xff]
    %v856 = vld [vmem:[#allocation2 + $0x1380] sm:$0xff]
    %v857 = vld [vmem:[#allocation2 + $0x1388] sm:$0xff]
    %v858 = vld [vmem:[#allocation2 + $0x1390] sm:$0xff]
    %v859 = vld [vmem:[#allocation2 + $0x1398] sm:$0xff]
    %v860 = vld [vmem:[#allocation2 + $0x13a0] sm:$0xff]
    %v861 = vld [vmem:[#allocation2 + $0x13a8] sm:$0xff]
    %v862 = vld [vmem:[#allocation2 + $0x13b0] sm:$0xff]
    %v863 = vld [vmem:[#allocation2 + $0x13b8] sm:$0xff]
    %v864 = vld [vmem:[#allocation2 + $0x13c0] sm:$0xff]
    %v865 = vld [vmem:[#allocation2 + $0x13c8] sm:$0xff]
    %v866 = vld [vmem:[#allocation2 + $0x13d0] sm:$0xff]
    %v867 = vld [vmem:[#allocation2 + $0x13d8] sm:$0xff]
    %v868 = vld [vmem:[#allocation2 + $0x13e0] sm:$0xff]
    %v869 = vld [vmem:[#allocation2 + $0x13e8] sm:$0xff]
    %v870 = vld [vmem:[#allocation2 + $0x13f0] sm:$0xff]
    %v871 = vld [vmem:[#allocation2 + $0x13f8] sm:$0xff]
    %v872 = vld [vmem:[#allocation2 + $0x1400] sm:$0xff]
    %v873 = vld [vmem:[#allocation2 + $0x1408] sm:$0xff]
    %v874 = vld [vmem:[#allocation2 + $0x1410] sm:$0xff]
    %v875 = vld [vmem:[#allocation2 + $0x1418] sm:$0xff]
    %v876 = vld [vmem:[#allocation2 + $0x1420] sm:$0xff]
    %v877 = vld [vmem:[#allocation2 + $0x1428] sm:$0xff]
    %v878 = vld [vmem:[#allocation2 + $0x1430] sm:$0xff]
    %v879 = vld [vmem:[#allocation2 + $0x1438] sm:$0xff]
    %v880 = vld [vmem:[#allocation2 + $0x1440] sm:$0xff]
    %v881 = vld [vmem:[#allocation2 + $0x1448] sm:$0xff]
    %v882 = vld [vmem:[#allocation2 + $0x1450] sm:$0xff]
    %v883 = vld [vmem:[#allocation2 + $0x1458] sm:$0xff]
    %v884 = vld [vmem:[#allocation2 + $0x1460] sm:$0xff]
    %v885 = vld [vmem:[#allocation2 + $0x1468] sm:$0xff]
    %v886 = vld [vmem:[#allocation2 + $0x1470] sm:$0xff]
    %v887 = vld [vmem:[#allocation2 + $0x1478] sm:$0xff]
    %v888 = vld [vmem:[#allocation2 + $0x1480] sm:$0xff]
    %v889 = vld [vmem:[#allocation2 + $0x1488] sm:$0xff]
    %v890 = vld [vmem:[#allocation2 + $0x1490] sm:$0xff]
    %v891 = vld [vmem:[#allocation2 + $0x1498] sm:$0xff]
    %v892 = vld [vmem:[#allocation2 + $0x14a0] sm:$0xff]
    %v893 = vld [vmem:[#allocation2 + $0x14a8] sm:$0xff]
    %v894 = vld [vmem:[#allocation2 + $0x14b0] sm:$0xff]
    %v895 = vld [vmem:[#allocation2 + $0x14b8] sm:$0xff]
    %v896 = vld [vmem:[#allocation2 + $0x14c0] sm:$0xff]
    %v897 = vld [vmem:[#allocation2 + $0x14c8] sm:$0xff]
    %v898 = vld [vmem:[#allocation2 + $0x14d0] sm:$0xff]
    %v899 = vld [vmem:[#allocation2 + $0x14d8] sm:$0xff]
    %v900 = vld [vmem:[#allocation2 + $0x14e0] sm:$0xff]
    %v901 = vld [vmem:[#allocation2 + $0x14e8] sm:$0xff]
    %v902 = vld [vmem:[#allocation2 + $0x14f0] sm:$0xff]
    %v903 = vld [vmem:[#allocation2 + $0x14f8] sm:$0xff]
    %v904 = vld [vmem:[#allocation2 + $0x1500] sm:$0xff]
    %v905 = vld [vmem:[#allocation2 + $0x1508] sm:$0xff]
    %v906 = vld [vmem:[#allocation2 + $0x1510] sm:$0xff]
    %v907 = vld [vmem:[#allocation2 + $0x1518] sm:$0xff]
    %v908 = vld [vmem:[#allocation2 + $0x1520] sm:$0xff]
    %v909 = vld [vmem:[#allocation2 + $0x1528] sm:$0xff]
    %v910 = vld [vmem:[#allocation2 + $0x1530] sm:$0xff]
    %v911 = vld [vmem:[#allocation2 + $0x1538] sm:$0xff]
    %v912 = vld [vmem:[#allocation2 + $0x1540] sm:$0xff]
    %v913 = vld [vmem:[#allocation2 + $0x1548] sm:$0xff]
    %v914 = vld [vmem:[#allocation2 + $0x1550] sm:$0xff]
    %v915 = vld [vmem:[#allocation2 + $0x1558] sm:$0xff]
    %v916 = vld [vmem:[#allocation2 + $0x1560] sm:$0xff]
    %v917 = vld [vmem:[#allocation2 + $0x1568] sm:$0xff]
    %v918 = vld [vmem:[#allocation2 + $0x1570] sm:$0xff]
    %v919 = vld [vmem:[#allocation2 + $0x1578] sm:$0xff]
    %v920 = vld [vmem:[#allocation2 + $0x1580] sm:$0xff]
    %v921 = vld [vmem:[#allocation2 + $0x1588] sm:$0xff]
    %v922 = vld [vmem:[#allocation2 + $0x1590] sm:$0xff]
    %v923 = vld [vmem:[#allocation2 + $0x1598] sm:$0xff]
    %v924 = vld [vmem:[#allocation2 + $0x15a0] sm:$0xff]
    %v925 = vld [vmem:[#allocation2 + $0x15a8] sm:$0xff]
    %v926 = vld [vmem:[#allocation2 + $0x15b0] sm:$0xff]
    %v927 = vld [vmem:[#allocation2 + $0x15b8] sm:$0xff]
    %v928 = vld [vmem:[#allocation2 + $0x15c0] sm:$0xff]
    %v929 = vld [vmem:[#allocation2 + $0x15c8] sm:$0xff]
    %v930 = vld [vmem:[#allocation2 + $0x15d0] sm:$0xff]
    %v931 = vld [vmem:[#allocation2 + $0x15d8] sm:$0xff]
    %v932 = vld [vmem:[#allocation2 + $0x15e0] sm:$0xff]
    %v933 = vld [vmem:[#allocation2 + $0x15e8] sm:$0xff]
    %v934 = vld [vmem:[#allocation2 + $0x15f0] sm:$0xff]
    %v935 = vld [vmem:[#allocation2 + $0x15f8] sm:$0xff]
    %v936 = vld [vmem:[#allocation2 + $0x1600] sm:$0xff]
    %v937 = vld [vmem:[#allocation2 + $0x1608] sm:$0xff]
    %v938 = vld [vmem:[#allocation2 + $0x1610] sm:$0xff]
    %v939 = vld [vmem:[#allocation2 + $0x1618] sm:$0xff]
    %v940 = vld [vmem:[#allocation2 + $0x1620] sm:$0xff]
    %v941 = vld [vmem:[#allocation2 + $0x1628] sm:$0xff]
    %v942 = vld [vmem:[#allocation2 + $0x1630] sm:$0xff]
    %v943 = vld [vmem:[#allocation2 + $0x1638] sm:$0xff]
    %v944 = vld [vmem:[#allocation2 + $0x1640] sm:$0xff]
    %v945 = vld [vmem:[#allocation2 + $0x1648] sm:$0xff]
    %v946 = vld [vmem:[#allocation2 + $0x1650] sm:$0xff]
    %v947 = vld [vmem:[#allocation2 + $0x1658] sm:$0xff]
    %v948 = vld [vmem:[#allocation2 + $0x1660] sm:$0xff]
    %v949 = vld [vmem:[#allocation2 + $0x1668] sm:$0xff]
    %v950 = vld [vmem:[#allocation2 + $0x1670] sm:$0xff]
    %v951 = vld [vmem:[#allocation2 + $0x1678] sm:$0xff]
    %v952 = vld [vmem:[#allocation2 + $0x1680] sm:$0xff]
    %v953 = vld [vmem:[#allocation2 + $0x1688] sm:$0xff]
    %v954 = vld [vmem:[#allocation2 + $0x1690] sm:$0xff]
    %v955 = vld [vmem:[#allocation2 + $0x1698] sm:$0xff]
    %v956 = vld [vmem:[#allocation2 + $0x16a0] sm:$0xff]
    %v957 = vld [vmem:[#allocation2 + $0x16a8] sm:$0xff]
    %v958 = vld [vmem:[#allocation2 + $0x16b0] sm:$0xff]
    %v959 = vld [vmem:[#allocation2 + $0x16b8] sm:$0xff]
    %v960 = vld [vmem:[#allocation2 + $0x16c0] sm:$0xff]
    %v961 = vld [vmem:[#allocation2 + $0x16c8] sm:$0xff]
    %v962 = vld [vmem:[#allocation2 + $0x16d0] sm:$0xff]
    %v963 = vld [vmem:[#allocation2 + $0x16d8] sm:$0xff]
    %v964 = vld [vmem:[#allocation2 + $0x16e0] sm:$0xff]
    %v965 = vld [vmem:[#allocation2 + $0x16e8] sm:$0xff]
    %v966 = vld [vmem:[#allocation2 + $0x16f0] sm:$0xff]
    %v967 = vld [vmem:[#allocation2 + $0x16f8] sm:$0xff]
    %v968 = vld [vmem:[#allocation2 + $0x1700] sm:$0xff]
    %v969 = vld [vmem:[#allocation2 + $0x1708] sm:$0xff]
    %v970 = vld [vmem:[#allocation2 + $0x1710] sm:$0xff]
    %v971 = vld [vmem:[#allocation2 + $0x1718] sm:$0xff]
    %v972 = vld [vmem:[#allocation2 + $0x1720] sm:$0xff]
    %v973 = vld [vmem:[#allocation2 + $0x1728] sm:$0xff]
    %v974 = vld [vmem:[#allocation2 + $0x1730] sm:$0xff]
    %v975 = vld [vmem:[#allocation2 + $0x1738] sm:$0xff]
    %v976 = vld [vmem:[#allocation2 + $0x1740] sm:$0xff]
    %v977 = vld [vmem:[#allocation2 + $0x1748] sm:$0xff]
    %v978 = vld [vmem:[#allocation2 + $0x1750] sm:$0xff]
    %v979 = vld [vmem:[#allocation2 + $0x1758] sm:$0xff]
    %v980 = vld [vmem:[#allocation2 + $0x1760] sm:$0xff]
    %v981 = vld [vmem:[#allocation2 + $0x1768] sm:$0xff]
    %v982 = vld [vmem:[#allocation2 + $0x1770] sm:$0xff]
    %v983 = vld [vmem:[#allocation2 + $0x1778] sm:$0xff]
    %v984 = vld [vmem:[#allocation2 + $0x1780] sm:$0xff]
    %v985 = vld [vmem:[#allocation2 + $0x1788] sm:$0xff]
    %v986 = vld [vmem:[#allocation2 + $0x1790] sm:$0xff]
    %v987 = vld [vmem:[#allocation2 + $0x1798] sm:$0xff]
    %v988 = vld [vmem:[#allocation2 + $0x17a0] sm:$0xff]
    %v989 = vld [vmem:[#allocation2 + $0x17a8] sm:$0xff]
    %v990 = vld [vmem:[#allocation2 + $0x17b0] sm:$0xff]
    %v991 = vld [vmem:[#allocation2 + $0x17b8] sm:$0xff]
    %v992 = vld [vmem:[#allocation2 + $0x17c0] sm:$0xff]
    %v993 = vld [vmem:[#allocation2 + $0x17c8] sm:$0xff]
    %v994 = vld [vmem:[#allocation2 + $0x17d0] sm:$0xff]
    %v995 = vld [vmem:[#allocation2 + $0x17d8] sm:$0xff]
    %v996 = vld [vmem:[#allocation2 + $0x17e0] sm:$0xff]
    %v997 = vld [vmem:[#allocation2 + $0x17e8] sm:$0xff]
    %v998 = vld [vmem:[#allocation2 + $0x17f0] sm:$0xff]
    %v999 = vld [vmem:[#allocation2 + $0x17f8] sm:$0xff]
    %v1000 = vld [vmem:[#allocation2 + $0x1800] sm:$0xff]
    %v1001 = vld [vmem:[#allocation2 + $0x1808] sm:$0xff]
    %v1002 = vld [vmem:[#allocation2 + $0x1810] sm:$0xff]
    %v1003 = vld [vmem:[#allocation2 + $0x1818] sm:$0xff]
    %v1004 = vld [vmem:[#allocation2 + $0x1820] sm:$0xff]
    %v1005 = vld [vmem:[#allocation2 + $0x1828] sm:$0xff]
    %v1006 = vld [vmem:[#allocation2 + $0x1830] sm:$0xff]
    %v1007 = vld [vmem:[#allocation2 + $0x1838] sm:$0xff]
    %v1008 = vld [vmem:[#allocation2 + $0x1840] sm:$0xff]
    %v1009 = vld [vmem:[#allocation2 + $0x1848] sm:$0xff]
    %v1010 = vld [vmem:[#allocation2 + $0x1850] sm:$0xff]
    %v1011 = vld [vmem:[#allocation2 + $0x1858] sm:$0xff]
    %v1012 = vld [vmem:[#allocation2 + $0x1860] sm:$0xff]
    %v1013 = vld [vmem:[#allocation2 + $0x1868] sm:$0xff]
    %v1014 = vld [vmem:[#allocation2 + $0x1870] sm:$0xff]
    %v1015 = vld [vmem:[#allocation2 + $0x1878] sm:$0xff]
    %v1016 = vld [vmem:[#allocation2 + $0x1880] sm:$0xff]
    %v1017 = vld [vmem:[#allocation2 + $0x1888] sm:$0xff]
    %v1018 = vld [vmem:[#allocation2 + $0x1890] sm:$0xff]
    %v1019 = vld [vmem:[#allocation2 + $0x1898] sm:$0xff]
    %v1020 = vld [vmem:[#allocation2 + $0x18a0] sm:$0xff]
    %v1021 = vld [vmem:[#allocation2 + $0x18a8] sm:$0xff]
    %v1022 = vld [vmem:[#allocation2 + $0x18b0] sm:$0xff]
    %v1023 = vld [vmem:[#allocation2 + $0x18b8] sm:$0xff]
    %v1024 = vld [vmem:[#allocation2 + $0x18c0] sm:$0xff]
    %v1025 = vld [vmem:[#allocation2 + $0x18c8] sm:$0xff]
    %v1026 = vld [vmem:[#allocation2 + $0x18d0] sm:$0xff]
    %v1027 = vld [vmem:[#allocation2 + $0x18d8] sm:$0xff]
    %v1028 = vld [vmem:[#allocation2 + $0x18e0] sm:$0xff]
    %v1029 = vld [vmem:[#allocation2 + $0x18e8] sm:$0xff]
    %v1030 = vld [vmem:[#allocation2 + $0x18f0] sm:$0xff]
    %v1031 = vld [vmem:[#allocation2 + $0x18f8] sm:$0xff]
    %v1032 = vld [vmem:[#allocation2 + $0x1900] sm:$0xff]
    %v1033 = vld [vmem:[#allocation2 + $0x1908] sm:$0xff]
    %v1034 = vld [vmem:[#allocation2 + $0x1910] sm:$0xff]
    %v1035 = vld [vmem:[#allocation2 + $0x1918] sm:$0xff]
    %v1036 = vld [vmem:[#allocation2 + $0x1920] sm:$0xff]
    %v1037 = vld [vmem:[#allocation2 + $0x1928] sm:$0xff]
    %v1038 = vld [vmem:[#allocation2 + $0x1930] sm:$0xff]
    %v1039 = vld [vmem:[#allocation2 + $0x1938] sm:$0xff]
    %v1040 = vld [vmem:[#allocation2 + $0x1940] sm:$0xff]
    %v1041 = vld [vmem:[#allocation2 + $0x1948] sm:$0xff]
    %v1042 = vld [vmem:[#allocation2 + $0x1950] sm:$0xff]
    %v1043 = vld [vmem:[#allocation2 + $0x1958] sm:$0xff]
    %v1044 = vld [vmem:[#allocation2 + $0x1960] sm:$0xff]
    %v1045 = vld [vmem:[#allocation2 + $0x1968] sm:$0xff]
    %v1046 = vld [vmem:[#allocation2 + $0x1970] sm:$0xff]
    %v1047 = vld [vmem:[#allocation2 + $0x1978] sm:$0xff]
    %v1048 = vld [vmem:[#allocation2 + $0x1980] sm:$0xff]
    %v1049 = vld [vmem:[#allocation2 + $0x1988] sm:$0xff]
    %v1050 = vld [vmem:[#allocation2 + $0x1990] sm:$0xff]
    %v1051 = vld [vmem:[#allocation2 + $0x1998] sm:$0xff]
    %v1052 = vld [vmem:[#allocation2 + $0x19a0] sm:$0xff]
    %v1053 = vld [vmem:[#allocation2 + $0x19a8] sm:$0xff]
    %v1054 = vld [vmem:[#allocation2 + $0x19b0] sm:$0xff]
    %v1055 = vld [vmem:[#allocation2 + $0x19b8] sm:$0xff]
    %v1056 = vld [vmem:[#allocation2 + $0x19c0] sm:$0xff]
    %v1057 = vld [vmem:[#allocation2 + $0x19c8] sm:$0xff]
    %v1058 = vld [vmem:[#allocation2 + $0x19d0] sm:$0xff]
    %v1059 = vld [vmem:[#allocation2 + $0x19d8] sm:$0xff]
    %v1060 = vld [vmem:[#allocation2 + $0x19e0] sm:$0xff]
    %v1061 = vld [vmem:[#allocation2 + $0x19e8] sm:$0xff]
    %v1062 = vld [vmem:[#allocation2 + $0x19f0] sm:$0xff]
    %v1063 = vld [vmem:[#allocation2 + $0x19f8] sm:$0xff]
    %v1064 = vld [vmem:[#allocation2 + $0x1a00] sm:$0xff]
    %v1065 = vld [vmem:[#allocation2 + $0x1a08] sm:$0xff]
    %v1066 = vld [vmem:[#allocation2 + $0x1a10] sm:$0xff]
    %v1067 = vld [vmem:[#allocation2 + $0x1a18] sm:$0xff]
    %v1068 = vld [vmem:[#allocation2 + $0x1a20] sm:$0xff]
    %v1069 = vld [vmem:[#allocation2 + $0x1a28] sm:$0xff]
    %v1070 = vld [vmem:[#allocation2 + $0x1a30] sm:$0xff]
    %v1071 = vld [vmem:[#allocation2 + $0x1a38] sm:$0xff]
    %v1072 = vld [vmem:[#allocation2 + $0x1a40] sm:$0xff]
    %v1073 = vld [vmem:[#allocation2 + $0x1a48] sm:$0xff]
    %v1074 = vld [vmem:[#allocation2 + $0x1a50] sm:$0xff]
    %v1075 = vld [vmem:[#allocation2 + $0x1a58] sm:$0xff]
    %v1076 = vld [vmem:[#allocation2 + $0x1a60] sm:$0xff]
    %v1077 = vld [vmem:[#allocation2 + $0x1a68] sm:$0xff]
    %v1078 = vld [vmem:[#allocation2 + $0x1a70] sm:$0xff]
    %v1079 = vld [vmem:[#allocation2 + $0x1a78] sm:$0xff]
    %v1080 = vld [vmem:[#allocation2 + $0x1a80] sm:$0xff]
    %v1081 = vld [vmem:[#allocation2 + $0x1a88] sm:$0xff]
    %v1082 = vld [vmem:[#allocation2 + $0x1a90] sm:$0xff]
    %v1083 = vld [vmem:[#allocation2 + $0x1a98] sm:$0xff]
    %v1084 = vld [vmem:[#allocation2 + $0x1aa0] sm:$0xff]
    %v1085 = vld [vmem:[#allocation2 + $0x1aa8] sm:$0xff]
    %v1086 = vld [vmem:[#allocation2 + $0x1ab0] sm:$0xff]
    %v1087 = vld [vmem:[#allocation2 + $0x1ab8] sm:$0xff]
    %v1088 = vld [vmem:[#allocation2 + $0x1ac0] sm:$0xff]
    %v1089 = vld [vmem:[#allocation2 + $0x1ac8] sm:$0xff]
    %v1090 = vld [vmem:[#allocation2 + $0x1ad0] sm:$0xff]
    %v1091 = vld [vmem:[#allocation2 + $0x1ad8] sm:$0xff]
    %v1092 = vld [vmem:[#allocation2 + $0x1ae0] sm:$0xff]
    %v1093 = vld [vmem:[#allocation2 + $0x1ae8] sm:$0xff]
    %v1094 = vld [vmem:[#allocation2 + $0x1af0] sm:$0xff]
    %v1095 = vld [vmem:[#allocation2 + $0x1af8] sm:$0xff]
    %v1096 = vld [vmem:[#allocation2 + $0x1b00] sm:$0xff]
    %v1097 = vld [vmem:[#allocation2 + $0x1b08] sm:$0xff]
    %v1098 = vld [vmem:[#allocation2 + $0x1b10] sm:$0xff]
    %v1099 = vld [vmem:[#allocation2 + $0x1b18] sm:$0xff]
    %v1100 = vld [vmem:[#allocation2 + $0x1b20] sm:$0xff]
    %v1101 = vld [vmem:[#allocation2 + $0x1b28] sm:$0xff]
    %v1102 = vld [vmem:[#allocation2 + $0x1b30] sm:$0xff]
    %v1103 = vld [vmem:[#allocation2 + $0x1b38] sm:$0xff]
    %v1104 = vld [vmem:[#allocation2 + $0x1b40] sm:$0xff]
    %v1105 = vld [vmem:[#allocation2 + $0x1b48] sm:$0xff]
    %v1106 = vld [vmem:[#allocation2 + $0x1b50] sm:$0xff]
    %v1107 = vld [vmem:[#allocation2 + $0x1b58] sm:$0xff]
    %v1108 = vld [vmem:[#allocation2 + $0x1b60] sm:$0xff]
    %v1109 = vld [vmem:[#allocation2 + $0x1b68] sm:$0xff]
    %v1110 = vld [vmem:[#allocation2 + $0x1b70] sm:$0xff]
    %v1111 = vld [vmem:[#allocation2 + $0x1b78] sm:$0xff]
    %v1112 = vld [vmem:[#allocation2 + $0x1b80] sm:$0xff]
    %v1113 = vld [vmem:[#allocation2 + $0x1b88] sm:$0xff]
    %v1114 = vld [vmem:[#allocation2 + $0x1b90] sm:$0xff]
    %v1115 = vld [vmem:[#allocation2 + $0x1b98] sm:$0xff]
    %v1116 = vld [vmem:[#allocation2 + $0x1ba0] sm:$0xff]
    %v1117 = vld [vmem:[#allocation2 + $0x1ba8] sm:$0xff]
    %v1118 = vld [vmem:[#allocation2 + $0x1bb0] sm:$0xff]
    %v1119 = vld [vmem:[#allocation2 + $0x1bb8] sm:$0xff]
    %v1120 = vld [vmem:[#allocation2 + $0x1bc0] sm:$0xff]
    %v1121 = vld [vmem:[#allocation2 + $0x1bc8] sm:$0xff]
    %v1122 = vld [vmem:[#allocation2 + $0x1bd0] sm:$0xff]
    %v1123 = vld [vmem:[#allocation2 + $0x1bd8] sm:$0xff]
    %v1124 = vld [vmem:[#allocation2 + $0x1be0] sm:$0xff]
    %v1125 = vld [vmem:[#allocation2 + $0x1be8] sm:$0xff]
    %v1126 = vld [vmem:[#allocation2 + $0x1bf0] sm:$0xff]
    %v1127 = vld [vmem:[#allocation2 + $0x1bf8] sm:$0xff]
    %v1128 = vld [vmem:[#allocation2 + $0x1c00] sm:$0xff]
    %v1129 = vld [vmem:[#allocation2 + $0x1c08] sm:$0xff]
    %v1130 = vld [vmem:[#allocation2 + $0x1c10] sm:$0xff]
    %v1131 = vld [vmem:[#allocation2 + $0x1c18] sm:$0xff]
    %v1132 = vld [vmem:[#allocation2 + $0x1c20] sm:$0xff]
    %v1133 = vld [vmem:[#allocation2 + $0x1c28] sm:$0xff]
    %v1134 = vld [vmem:[#allocation2 + $0x1c30] sm:$0xff]
    %v1135 = vld [vmem:[#allocation2 + $0x1c38] sm:$0xff]
    %v1136 = vld [vmem:[#allocation2 + $0x1c40] sm:$0xff]
    %v1137 = vld [vmem:[#allocation2 + $0x1c48] sm:$0xff]
    %v1138 = vld [vmem:[#allocation2 + $0x1c50] sm:$0xff]
    %v1139 = vld [vmem:[#allocation2 + $0x1c58] sm:$0xff]
    %v1140 = vld [vmem:[#allocation2 + $0x1c60] sm:$0xff]
    %v1141 = vld [vmem:[#allocation2 + $0x1c68] sm:$0xff]
    %v1142 = vld [vmem:[#allocation2 + $0x1c70] sm:$0xff]
    %v1143 = vld [vmem:[#allocation2 + $0x1c78] sm:$0xff]
    %v1144 = vld [vmem:[#allocation2 + $0x1c80] sm:$0xff]
    %v1145 = vld [vmem:[#allocation2 + $0x1c88] sm:$0xff]
    %v1146 = vld [vmem:[#allocation2 + $0x1c90] sm:$0xff]
    %v1147 = vld [vmem:[#allocation2 + $0x1c98] sm:$0xff]
    %v1148 = vld [vmem:[#allocation2 + $0x1ca0] sm:$0xff]
    %v1149 = vld [vmem:[#allocation2 + $0x1ca8] sm:$0xff]
    %v1150 = vld [vmem:[#allocation2 + $0x1cb0] sm:$0xff]
    %v1151 = vld [vmem:[#allocation2 + $0x1cb8] sm:$0xff]
    %v1152 = vld [vmem:[#allocation2 + $0x1cc0] sm:$0xff]
    %v1153 = vld [vmem:[#allocation2 + $0x1cc8] sm:$0xff]
    %v1154 = vld [vmem:[#allocation2 + $0x1cd0] sm:$0xff]
    %v1155 = vld [vmem:[#allocation2 + $0x1cd8] sm:$0xff]
    %v1156 = vld [vmem:[#allocation2 + $0x1ce0] sm:$0xff]
    %v1157 = vld [vmem:[#allocation2 + $0x1ce8] sm:$0xff]
    %v1158 = vld [vmem:[#allocation2 + $0x1cf0] sm:$0xff]
    %v1159 = vld [vmem:[#allocation2 + $0x1cf8] sm:$0xff]
    %v1160 = vld [vmem:[#allocation2 + $0x1d00] sm:$0xff]
    %v1161 = vld [vmem:[#allocation2 + $0x1d08] sm:$0xff]
    %v1162 = vld [vmem:[#allocation2 + $0x1d10] sm:$0xff]
    %v1163 = vld [vmem:[#allocation2 + $0x1d18] sm:$0xff]
    %v1164 = vld [vmem:[#allocation2 + $0x1d20] sm:$0xff]
    %v1165 = vld [vmem:[#allocation2 + $0x1d28] sm:$0xff]
    %v1166 = vld [vmem:[#allocation2 + $0x1d30] sm:$0xff]
    %v1167 = vld [vmem:[#allocation2 + $0x1d38] sm:$0xff]
    %v1168 = vld [vmem:[#allocation2 + $0x1d40] sm:$0xff]
    %v1169 = vld [vmem:[#allocation2 + $0x1d48] sm:$0xff]
    %v1170 = vld [vmem:[#allocation2 + $0x1d50] sm:$0xff]
    %v1171 = vld [vmem:[#allocation2 + $0x1d58] sm:$0xff]
    %v1172 = vld [vmem:[#allocation2 + $0x1d60] sm:$0xff]
    %v1173 = vld [vmem:[#allocation2 + $0x1d68] sm:$0xff]
    %v1174 = vld [vmem:[#allocation2 + $0x1d70] sm:$0xff]
    %v1175 = vld [vmem:[#allocation2 + $0x1d78] sm:$0xff]
    %v1176 = vld [vmem:[#allocation2 + $0x1d80] sm:$0xff]
    %v1177 = vld [vmem:[#allocation2 + $0x1d88] sm:$0xff]
    %v1178 = vld [vmem:[#allocation2 + $0x1d90] sm:$0xff]
    %v1179 = vld [vmem:[#allocation2 + $0x1d98] sm:$0xff]
    %v1180 = vld [vmem:[#allocation2 + $0x1da0] sm:$0xff]
    %v1181 = vld [vmem:[#allocation2 + $0x1da8] sm:$0xff]
    %v1182 = vld [vmem:[#allocation2 + $0x1db0] sm:$0xff]
    %v1183 = vld [vmem:[#allocation2 + $0x1db8] sm:$0xff]
    %v1184 = vld [vmem:[#allocation2 + $0x1dc0] sm:$0xff]
    %v1185 = vld [vmem:[#allocation2 + $0x1dc8] sm:$0xff]
    %v1186 = vld [vmem:[#allocation2 + $0x1dd0] sm:$0xff]
    %v1187 = vld [vmem:[#allocation2 + $0x1dd8] sm:$0xff]
    %v1188 = vld [vmem:[#allocation2 + $0x1de0] sm:$0xff]
    %v1189 = vld [vmem:[#allocation2 + $0x1de8] sm:$0xff]
    %v1190 = vld [vmem:[#allocation2 + $0x1df0] sm:$0xff]
    %v1191 = vld [vmem:[#allocation2 + $0x1df8] sm:$0xff]
    %v1192 = vld [vmem:[#allocation2 + $0x1e00] sm:$0xff]
    %v1193 = vld [vmem:[#allocation2 + $0x1e08] sm:$0xff]
    %v1194 = vld [vmem:[#allocation2 + $0x1e10] sm:$0xff]
    %v1195 = vld [vmem:[#allocation2 + $0x1e18] sm:$0xff]
    %v1196 = vld [vmem:[#allocation2 + $0x1e20] sm:$0xff]
    %v1197 = vld [vmem:[#allocation2 + $0x1e28] sm:$0xff]
    %v1198 = vld [vmem:[#allocation2 + $0x1e30] sm:$0xff]
    %v1199 = vld [vmem:[#allocation2 + $0x1e38] sm:$0xff]
    %v1200 = vld [vmem:[#allocation2 + $0x1e40] sm:$0xff]
    %v1201 = vld [vmem:[#allocation2 + $0x1e48] sm:$0xff]
    %v1202 = vld [vmem:[#allocation2 + $0x1e50] sm:$0xff]
    %v1203 = vld [vmem:[#allocation2 + $0x1e58] sm:$0xff]
    %v1204 = vld [vmem:[#allocation2 + $0x1e60] sm:$0xff]
    %v1205 = vld [vmem:[#allocation2 + $0x1e68] sm:$0xff]
    %v1206 = vld [vmem:[#allocation2 + $0x1e70] sm:$0xff]
    %v1207 = vld [vmem:[#allocation2 + $0x1e78] sm:$0xff]
    %v1208 = vld [vmem:[#allocation2 + $0x1e80] sm:$0xff]
    %v1209 = vld [vmem:[#allocation2 + $0x1e88] sm:$0xff]
    %v1210 = vld [vmem:[#allocation2 + $0x1e90] sm:$0xff]
    %v1211 = vld [vmem:[#allocation2 + $0x1e98] sm:$0xff]
    %v1212 = vld [vmem:[#allocation2 + $0x1ea0] sm:$0xff]
    %v1213 = vld [vmem:[#allocation2 + $0x1ea8] sm:$0xff]
    %v1214 = vld [vmem:[#allocation2 + $0x1eb0] sm:$0xff]
    %v1215 = vld [vmem:[#allocation2 + $0x1eb8] sm:$0xff]
    %v1216 = vld [vmem:[#allocation2 + $0x1ec0] sm:$0xff]
    %v1217 = vld [vmem:[#allocation2 + $0x1ec8] sm:$0xff]
    %v1218 = vld [vmem:[#allocation2 + $0x1ed0] sm:$0xff]
    %v1219 = vld [vmem:[#allocation2 + $0x1ed8] sm:$0xff]
    %v1220 = vld [vmem:[#allocation2 + $0x1ee0] sm:$0xff]
    %v1221 = vld [vmem:[#allocation2 + $0x1ee8] sm:$0xff]
    %v1222 = vld [vmem:[#allocation2 + $0x1ef0] sm:$0xff]
    %v1223 = vld [vmem:[#allocation2 + $0x1ef8] sm:$0xff]
    %v1224 = vld [vmem:[#allocation2 + $0x1f00] sm:$0xff]
    %v1225 = vld [vmem:[#allocation2 + $0x1f08] sm:$0xff]
    %v1226 = vld [vmem:[#allocation2 + $0x1f10] sm:$0xff]
    %v1227 = vld [vmem:[#allocation2 + $0x1f18] sm:$0xff]
    %v1228 = vld [vmem:[#allocation2 + $0x1f20] sm:$0xff]
    %v1229 = vld [vmem:[#allocation2 + $0x1f28] sm:$0xff]
    %v1230 = vld [vmem:[#allocation2 + $0x1f30] sm:$0xff]
    %v1231 = vld [vmem:[#allocation2 + $0x1f38] sm:$0xff]
    %v1232 = vld [vmem:[#allocation2 + $0x1f40] sm:$0xff]
    %v1233 = vld [vmem:[#allocation2 + $0x1f48] sm:$0xff]
    %v1234 = vld [vmem:[#allocation2 + $0x1f50] sm:$0xff]
    %v1235 = vld [vmem:[#allocation2 + $0x1f58] sm:$0xff]
    %v1236 = vld [vmem:[#allocation2 + $0x1f60] sm:$0xff]
    %v1237 = vld [vmem:[#allocation2 + $0x1f68] sm:$0xff]
    %v1238 = vld [vmem:[#allocation2 + $0x1f70] sm:$0xff]
    %v1239 = vld [vmem:[#allocation2 + $0x1f78] sm:$0xff]
    %v1240 = vld [vmem:[#allocation2 + $0x1f80] sm:$0xff]
    %v1241 = vld [vmem:[#allocation2 + $0x1f88] sm:$0xff]
    %v1242 = vld [vmem:[#allocation2 + $0x1f90] sm:$0xff]
    %v1243 = vld [vmem:[#allocation2 + $0x1f98] sm:$0xff]
    %v1244 = vld [vmem:[#allocation2 + $0x1fa0] sm:$0xff]
    %v1245 = vld [vmem:[#allocation2 + $0x1fa8] sm:$0xff]
    %v1246 = vld [vmem:[#allocation2 + $0x1fb0] sm:$0xff]
    %v1247 = vld [vmem:[#allocation2 + $0x1fb8] sm:$0xff]
    %v1248 = vld [vmem:[#allocation2 + $0x1fc0] sm:$0xff]
    %v1249 = vld [vmem:[#allocation2 + $0x1fc8] sm:$0xff]
    %v1250 = vld [vmem:[#allocation2 + $0x1fd0] sm:$0xff]
    %v1251 = vld [vmem:[#allocation2 + $0x1fd8] sm:$0xff]
    %v1252 = vld [vmem:[#allocation2 + $0x1fe0] sm:$0xff]
    %v1253 = vld [vmem:[#allocation2 + $0x1fe8] sm:$0xff]
    %v1254 = vld [vmem:[#allocation2 + $0x1ff0] sm:$0xff]
    %v1255 = vld [vmem:[#allocation2 + $0x1ff8] sm:$0xff]
    %v1256 = vld [vmem:[#allocation12] ss:$8 sm:$0xf]
    %v1257 = vld [vmem:[#allocation12] ss:$8 sm:$0xf0]
    %v1258 = vor.u32 %v1256, %v1257
    %v1260 = vlaneseq
    %v1261 = vshrl.u32 %v1260, 7
    %v1262 = vsub.s32 0, %v1261
    %v1263 = vrot.slane %v1258, %v1262
    %v1264 = vlaneseq
    %v1265 = vshrl.u32 %v1264, 7
    %v1266 = vsub.s32 1, %v1265
    %v1267 = vrot.slane %v1258, %v1266
    %v1268 = vlaneseq
    %v1269 = vshrl.u32 %v1268, 7
    %v1270 = vsub.s32 2, %v1269
    %v1271 = vrot.slane %v1258, %v1270
    %v1272 = vlaneseq
    %v1273 = vshrl.u32 %v1272, 7
    %v1274 = vsub.s32 3, %v1273
    %v1275 = vrot.slane %v1258, %v1274
    %v1276 = vlaneseq
    %v1277 = vshrl.u32 %v1276, 7
    %v1278 = vsub.s32 4, %v1277
    %v1279 = vrot.slane %v1258, %v1278
    %v1280 = vlaneseq
    %v1281 = vshrl.u32 %v1280, 7
    %v1282 = vsub.s32 5, %v1281
    %v1283 = vrot.slane %v1258, %v1282
    %v1284 = vlaneseq
    %v1285 = vshrl.u32 %v1284, 7
    %v1286 = vsub.s32 6, %v1285
    %v1287 = vrot.slane %v1258, %v1286
    %v1288 = vlaneseq
    %v1289 = vshrl.u32 %v1288, 7
    %v1290 = vsub.s32 7, %v1289
    %v1291 = vrot.slane %v1258, %v1290
    %1300 = vmatprep.subr.bf16.mxu0 %v233
    %1301 = vmatpush1.bf16.msra.mxu0 %v232
    %1302 = vmatprep.subr.bf16.mxu0 %v241
    %1303 = vmatpush1.bf16.msra.mxu0 %v240
    %1304 = vmatprep.subr.bf16.mxu0 %v249
    %1305 = vmatpush1.bf16.msra.mxu0 %v248
    %1306 = vmatprep.subr.bf16.mxu0 %v257
    %1307 = vmatpush1.bf16.msra.mxu0 %v256
    %1308 = vmatprep.subr.bf16.mxu0 %v265
    %1309 = vmatpush1.bf16.msra.mxu0 %v264
    %1310 = vmatprep.subr.bf16.mxu0 %v273
    %1311 = vmatpush1.bf16.msra.mxu0 %v272
    %1312 = vmatprep.subr.bf16.mxu0 %v281
    %1313 = vmatpush1.bf16.msra.mxu0 %v280
    %1314 = vmatprep.subr.bf16.mxu0 %v289
    %1315 = vmatpush1.bf16.msra.mxu0 %v288
    %1316 = vmatprep.subr.bf16.mxu0 %v297
    %1317 = vmatpush1.bf16.msra.mxu0 %v296
    %1318 = vmatprep.subr.bf16.mxu0 %v305
    %1319 = vmatpush1.bf16.msra.mxu0 %v304
    %1320 = vmatprep.subr.bf16.mxu0 %v313
    %1321 = vmatpush1.bf16.msra.mxu0 %v312
    %1322 = vmatprep.subr.bf16.mxu0 %v321
    %1323 = vmatpush1.bf16.msra.mxu0 %v320
    %1324 = vmatprep.subr.bf16.mxu0 %v329
    %1325 = vmatpush1.bf16.msra.mxu0 %v328
    %1326 = vmatprep.subr.bf16.mxu0 %v337
    %1327 = vmatpush1.bf16.msra.mxu0 %v336
    %1328 = vmatprep.subr.bf16.mxu0 %v345
    %1329 = vmatpush1.bf16.msra.mxu0 %v344
    %1330 = vmatprep.subr.bf16.mxu0 %v353
    %1331 = vmatpush1.bf16.msra.mxu0 %v352
    %1332 = vmatprep.mubr.bf16.mxu0 %v213
    %1333 = vmatmul.mubr.bf16.gmra.mrb[0].mxu0 %v212
    %v1334 = vpop.f32.mrb[0].mxu0
    %v1335 = vadd.f32 %v1263, %v1334
    %v1336 = vpop.f32.mrb[0].mxu0
    %v1337 = vadd.f32 %v1267, %v1336
    %v1338 = vpop.f32.mrb[0].mxu0
    %v1339 = vpop.f32.mrb[0].mxu0
    %1340 = vdwg.mxu0
    %1341 = vmatprep.subr.bf16.mxu0 %v361
    %1342 = vmatpush1.bf16.msra.mxu0 %v360
    %1343 = vmatprep.subr.bf16.mxu0 %v369
    %1344 = vmatpush1.bf16.msra.mxu0 %v368
    %1345 = vmatprep.subr.bf16.mxu0 %v377
    %1346 = vmatpush1.bf16.msra.mxu0 %v376
    %1347 = vmatprep.subr.bf16.mxu0 %v385
    %1348 = vmatpush1.bf16.msra.mxu0 %v384
    %1349 = vmatprep.subr.bf16.mxu0 %v393
    %1350 = vmatpush1.bf16.msra.mxu0 %v392
    %1351 = vmatprep.subr.bf16.mxu0 %v401
    %1352 = vmatpush1.bf16.msra.mxu0 %v400
    %1353 = vmatprep.subr.bf16.mxu0 %v409
    %1354 = vmatpush1.bf16.msra.mxu0 %v408
    %1355 = vmatprep.subr.bf16.mxu0 %v417
    %1356 = vmatpush1.bf16.msra.mxu0 %v416
    %1357 = vmatprep.subr.bf16.mxu0 %v425
    %1358 = vmatpush1.bf16.msra.mxu0 %v424
    %1359 = vmatprep.subr.bf16.mxu0 %v433
    %1360 = vmatpush1.bf16.msra.mxu0 %v432
    %1361 = vmatprep.subr.bf16.mxu0 %v441
    %1362 = vmatpush1.bf16.msra.mxu0 %v440
    %1363 = vmatprep.subr.bf16.mxu0 %v449
    %1364 = vmatpush1.bf16.msra.mxu0 %v448
    %1365 = vmatprep.subr.bf16.mxu0 %v457
    %1366 = vmatpush1.bf16.msra.mxu0 %v456
    %1367 = vmatprep.subr.bf16.mxu0 %v465
    %1368 = vmatpush1.bf16.msra.mxu0 %v464
    %1369 = vmatprep.subr.bf16.mxu0 %v473
    %1370 = vmatpush1.bf16.msra.mxu0 %v472
    %1371 = vmatprep.subr.bf16.mxu0 %v481
    %1372 = vmatpush1.bf16.msra.mxu0 %v480
    %1373 = vmatprep.mubr.bf16.mxu0 %v215
    %1374 = vmatmul.mubr.bf16.gmra.mrb[0].mxu0 %v214
    %v1375 = vpop.f32.mrb[0].mxu0
    %v1376 = vadd.f32 %v1335, %v1375
    %v1377 = vpop.f32.mrb[0].mxu0
    %v1378 = vadd.f32 %v1337, %v1377
    %v1379 = vpop.f32.mrb[0].mxu0
    %v1380 = vpop.f32.mrb[0].mxu0
    %1381 = vdwg.mxu0
    %1382 = vmatprep.subr.bf16.mxu0 %v489
    %1383 = vmatpush1.bf16.msra.mxu0 %v488
    %1384 = vmatprep.subr.bf16.mxu0 %v497
    %1385 = vmatpush1.bf16.msra.mxu0 %v496
    %1386 = vmatprep.subr.bf16.mxu0 %v505
    %1387 = vmatpush1.bf16.msra.mxu0 %v504
    %1388 = vmatprep.subr.bf16.mxu0 %v513
    %1389 = vmatpush1.bf16.msra.mxu0 %v512
    %1390 = vmatprep.subr.bf16.mxu0 %v521
    %1391 = vmatpush1.bf16.msra.mxu0 %v520
    %1392 = vmatprep.subr.bf16.mxu0 %v529
    %1393 = vmatpush1.bf16.msra.mxu0 %v528
    %1394 = vmatprep.subr.bf16.mxu0 %v537
    %1395 = vmatpush1.bf16.msra.mxu0 %v536
    %1396 = vmatprep.subr.bf16.mxu0 %v545
    %1397 = vmatpush1.bf16.msra.mxu0 %v544
    %1398 = vmatprep.subr.bf16.mxu0 %v553
    %1399 = vmatpush1.bf16.msra.mxu0 %v552
    %1400 = vmatprep.subr.bf16.mxu0 %v561
    %1401 = vmatpush1.bf16.msra.mxu0 %v560
    %1402 = vmatprep.subr.bf16.mxu0 %v569
    %1403 = vmatpush1.bf16.msra.mxu0 %v568
    %1404 = vmatprep.subr.bf16.mxu0 %v577
    %1405 = vmatpush1.bf16.msra.mxu0 %v576
    %1406 = vmatprep.subr.bf16.mxu0 %v585
    %1407 = vmatpush1.bf16.msra.mxu0 %v584
    %1408 = vmatprep.subr.bf16.mxu0 %v593
    %1409 = vmatpush1.bf16.msra.mxu0 %v592
    %1410 = vmatprep.subr.bf16.mxu0 %v601
    %1411 = vmatpush1.bf16.msra.mxu0 %v600
    %1412 = vmatprep.subr.bf16.mxu0 %v609
    %1413 = vmatpush1.bf16.msra.mxu0 %v608
    %1414 = vmatprep.mubr.bf16.mxu0 %v217
    %1415 = vmatmul.mubr.bf16.gmra.mrb[0].mxu0 %v216
    %v1416 = vpop.f32.mrb[0].mxu0
    %v1417 = vadd.f32 %v1376, %v1416
    %v1418 = vpop.f32.mrb[0].mxu0
    %v1419 = vadd.f32 %v1378, %v1418
    %v1420 = vpop.f32.mrb[0].mxu0
    %v1421 = vpop.f32.mrb[0].mxu0
    %1422 = vdwg.mxu0
    %1423 = vmatprep.subr.bf16.mxu0 %v617
    %1424 = vmatpush1.bf16.msra.mxu0 %v616
    %1425 = vmatprep.subr.bf16.mxu0 %v625
    %1426 = vmatpush1.bf16.msra.mxu0 %v624
    %1427 = vmatprep.subr.bf16.mxu0 %v633
    %1428 = vmatpush1.bf16.msra.mxu0 %v632
    %1429 = vmatprep.subr.bf16.mxu0 %v641
    %1430 = vmatpush1.bf16.msra.mxu0 %v640
    %1431 = vmatprep.subr.bf16.mxu0 %v649
    %1432 = vmatpush1.bf16.msra.mxu0 %v648
    %1433 = vmatprep.subr.bf16.mxu0 %v657
    %1434 = vmatpush1.bf16.msra.mxu0 %v656
    %1435 = vmatprep.subr.bf16.mxu0 %v665
    %1436 = vmatpush1.bf16.msra.mxu0 %v664
    %1437 = vmatprep.subr.bf16.mxu0 %v673
    %1438 = vmatpush1.bf16.msra.mxu0 %v672
    %1439 = vmatprep.subr.bf16.mxu0 %v681
    %1440 = vmatpush1.bf16.msra.mxu0 %v680
    %1441 = vmatprep.subr.bf16.mxu0 %v689
    %1442 = vmatpush1.bf16.msra.mxu0 %v688
    %1443 = vmatprep.subr.bf16.mxu0 %v697
    %1444 = vmatpush1.bf16.msra.mxu0 %v696
    %1445 = vmatprep.subr.bf16.mxu0 %v705
    %1446 = vmatpush1.bf16.msra.mxu0 %v704
    %1447 = vmatprep.subr.bf16.mxu0 %v713
    %1448 = vmatpush1.bf16.msra.mxu0 %v712
    %1449 = vmatprep.subr.bf16.mxu0 %v721
    %1450 = vmatpush1.bf16.msra.mxu0 %v720
    %1451 = vmatprep.subr.bf16.mxu0 %v729
    %1452 = vmatpush1.bf16.msra.mxu0 %v728
    %1453 = vmatprep.subr.bf16.mxu0 %v737
    %1454 = vmatpush1.bf16.msra.mxu0 %v736
    %1455 = vmatprep.mubr.bf16.mxu0 %v219
    %1456 = vmatmul.mubr.bf16.gmra.mrb[0].mxu0 %v218
    %v1457 = vpop.f32.mrb[0].mxu0
    %v1458 = vadd.f32 %v1417, %v1457
    %v1459 = vpop.f32.mrb[0].mxu0
    %v1460 = vadd.f32 %v1419, %v1459
    %v1461 = vpop.f32.mrb[0].mxu0
    %v1462 = vpop.f32.mrb[0].mxu0
    %1463 = vdwg.mxu0
    %1464 = vmatprep.subr.bf16.mxu0 %v745
    %1465 = vmatpush1.bf16.msra.mxu0 %v744
    %1466 = vmatprep.subr.bf16.mxu0 %v753
    %1467 = vmatpush1.bf16.msra.mxu0 %v752
    %1468 = vmatprep.subr.bf16.mxu0 %v761
    %1469 = vmatpush1.bf16.msra.mxu0 %v760
    %1470 = vmatprep.subr.bf16.mxu0 %v769
    %1471 = vmatpush1.bf16.msra.mxu0 %v768
    %1472 = vmatprep.subr.bf16.mxu0 %v777
    %1473 = vmatpush1.bf16.msra.mxu0 %v776
    %1474 = vmatprep.subr.bf16.mxu0 %v785
    %1475 = vmatpush1.bf16.msra.mxu0 %v784
    %1476 = vmatprep.subr.bf16.mxu0 %v793
    %1477 = vmatpush1.bf16.msra.mxu0 %v792
    %1478 = vmatprep.subr.bf16.mxu0 %v801
    %1479 = vmatpush1.bf16.msra.mxu0 %v800
    %1480 = vmatprep.subr.bf16.mxu0 %v809
    %1481 = vmatpush1.bf16.msra.mxu0 %v808
    %1482 = vmatprep.subr.bf16.mxu0 %v817
    %1483 = vmatpush1.bf16.msra.mxu0 %v816
    %1484 = vmatprep.subr.bf16.mxu0 %v825
    %1485 = vmatpush1.bf16.msra.mxu0 %v824
    %1486 = vmatprep.subr.bf16.mxu0 %v833
    %1487 = vmatpush1.bf16.msra.mxu0 %v832
    %1488 = vmatprep.subr.bf16.mxu0 %v841
    %1489 = vmatpush1.bf16.msra.mxu0 %v840
    %1490 = vmatprep.subr.bf16.mxu0 %v849
    %1491 = vmatpush1.bf16.msra.mxu0 %v848
    %1492 = vmatprep.subr.bf16.mxu0 %v857
    %1493 = vmatpush1.bf16.msra.mxu0 %v856
    %1494 = vmatprep.subr.bf16.mxu0 %v865
    %1495 = vmatpush1.bf16.msra.mxu0 %v864
    %1496 = vmatprep.mubr.bf16.mxu0 %v221
    %1497 = vmatmul.mubr.bf16.gmra.mrb[0].mxu0 %v220
    %v1498 = vpop.f32.mrb[0].mxu0
    %v1499 = vadd.f32 %v1458, %v1498
    %v1500 = vpop.f32.mrb[0].mxu0
    %v1501 = vadd.f32 %v1460, %v1500
    %v1502 = vpop.f32.mrb[0].mxu0
    %v1503 = vpop.f32.mrb[0].mxu0
    %1504 = vdwg.mxu0
    %1505 = vmatprep.subr.bf16.mxu0 %v873
    %1506 = vmatpush1.bf16.msra.mxu0 %v872
    %1507 = vmatprep.subr.bf16.mxu0 %v881
    %1508 = vmatpush1.bf16.msra.mxu0 %v880
    %1509 = vmatprep.subr.bf16.mxu0 %v889
    %1510 = vmatpush1.bf16.msra.mxu0 %v888
    %1511 = vmatprep.subr.bf16.mxu0 %v897
    %1512 = vmatpush1.bf16.msra.mxu0 %v896
    %1513 = vmatprep.subr.bf16.mxu0 %v905
    %1514 = vmatpush1.bf16.msra.mxu0 %v904
    %1515 = vmatprep.subr.bf16.mxu0 %v913
    %1516 = vmatpush1.bf16.msra.mxu0 %v912
    %1517 = vmatprep.subr.bf16.mxu0 %v921
    %1518 = vmatpush1.bf16.msra.mxu0 %v920
    %1519 = vmatprep.subr.bf16.mxu0 %v929
    %1520 = vmatpush1.bf16.msra.mxu0 %v928
    %1521 = vmatprep.subr.bf16.mxu0 %v937
    %1522 = vmatpush1.bf16.msra.mxu0 %v936
    %1523 = vmatprep.subr.bf16.mxu0 %v945
    %1524 = vmatpush1.bf16.msra.mxu0 %v944
    %1525 = vmatprep.subr.bf16.mxu0 %v953
    %1526 = vmatpush1.bf16.msra.mxu0 %v952
    %1527 = vmatprep.subr.bf16.mxu0 %v961
    %1528 = vmatpush1.bf16.msra.mxu0 %v960
    %1529 = vmatprep.subr.bf16.mxu0 %v969
    %1530 = vmatpush1.bf16.msra.mxu0 %v968
    %1531 = vmatprep.subr.bf16.mxu0 %v977
    %1532 = vmatpush1.bf16.msra.mxu0 %v976
    %1533 = vmatprep.subr.bf16.mxu0 %v985
    %1534 = vmatpush1.bf16.msra.mxu0 %v984
    %1535 = vmatprep.subr.bf16.mxu0 %v993
    %1536 = vmatpush1.bf16.msra.mxu0 %v992
    %1537 = vmatprep.mubr.bf16.mxu0 %v223
    %1538 = vmatmul.mubr.bf16.gmra.mrb[0].mxu0 %v222
    %v1539 = vpop.f32.mrb[0].mxu0
    %v1540 = vadd.f32 %v1499, %v1539
    %v1541 = vpop.f32.mrb[0].mxu0
    %v1542 = vadd.f32 %v1501, %v1541
    %v1543 = vpop.f32.mrb[0].mxu0
    %v1544 = vpop.f32.mrb[0].mxu0
    %1545 = vdwg.mxu0
    %1546 = vmatprep.subr.bf16.mxu0 %v1001
    %1547 = vmatpush1.bf16.msra.mxu0 %v1000
    %1548 = vmatprep.subr.bf16.mxu0 %v1009
    %1549 = vmatpush1.bf16.msra.mxu0 %v1008
    %1550 = vmatprep.subr.bf16.mxu0 %v1017
    %1551 = vmatpush1.bf16.msra.mxu0 %v1016
    %1552 = vmatprep.subr.bf16.mxu0 %v1025
    %1553 = vmatpush1.bf16.msra.mxu0 %v1024
    %1554 = vmatprep.subr.bf16.mxu0 %v1033
    %1555 = vmatpush1.bf16.msra.mxu0 %v1032
    %1556 = vmatprep.subr.bf16.mxu0 %v1041
    %1557 = vmatpush1.bf16.msra.mxu0 %v1040
    %1558 = vmatprep.subr.bf16.mxu0 %v1049
    %1559 = vmatpush1.bf16.msra.mxu0 %v1048
    %1560 = vmatprep.subr.bf16.mxu0 %v1057
    %1561 = vmatpush1.bf16.msra.mxu0 %v1056
    %1562 = vmatprep.subr.bf16.mxu0 %v1065
    %1563 = vmatpush1.bf16.msra.mxu0 %v1064
    %1564 = vmatprep.subr.bf16.mxu0 %v1073
    %1565 = vmatpush1.bf16.msra.mxu0 %v1072
    %1566 = vmatprep.subr.bf16.mxu0 %v1081
    %1567 = vmatpush1.bf16.msra.mxu0 %v1080
    %1568 = vmatprep.subr.bf16.mxu0 %v1089
    %1569 = vmatpush1.bf16.msra.mxu0 %v1088
    %1570 = vmatprep.subr.bf16.mxu0 %v1097
    %1571 = vmatpush1.bf16.msra.mxu0 %v1096
    %1572 = vmatprep.subr.bf16.mxu0 %v1105
    %1573 = vmatpush1.bf16.msra.mxu0 %v1104
    %1574 = vmatprep.subr.bf16.mxu0 %v1113
    %1575 = vmatpush1.bf16.msra.mxu0 %v1112
    %1576 = vmatprep.subr.bf16.mxu0 %v1121
    %1577 = vmatpush1.bf16.msra.mxu0 %v1120
    %1578 = vmatprep.mubr.bf16.mxu0 %v225
    %1579 = vmatmul.mubr.bf16.gmra.mrb[0].mxu0 %v224
    %v1580 = vpop.f32.mrb[0].mxu0
    %v1581 = vadd.f32 %v1540, %v1580
    %v1582 = vpop.f32.mrb[0].mxu0
    %v1583 = vadd.f32 %v1542, %v1582
    %v1584 = vpop.f32.mrb[0].mxu0
    %v1585 = vpop.f32.mrb[0].mxu0
    %1586 = vdwg.mxu0
    %1587 = vmatprep.subr.bf16.mxu0 %v1129
    %1588 = vmatpush1.bf16.msra.mxu0 %v1128
    %1589 = vmatprep.subr.bf16.mxu0 %v1137
    %1590 = vmatpush1.bf16.msra.mxu0 %v1136
    %1591 = vmatprep.subr.bf16.mxu0 %v1145
    %1592 = vmatpush1.bf16.msra.mxu0 %v1144
    %1593 = vmatprep.subr.bf16.mxu0 %v1153
    %1594 = vmatpush1.bf16.msra.mxu0 %v1152
    %1595 = vmatprep.subr.bf16.mxu0 %v1161
    %1596 = vmatpush1.bf16.msra.mxu0 %v1160
    %1597 = vmatprep.subr.bf16.mxu0 %v1169
    %1598 = vmatpush1.bf16.msra.mxu0 %v1168
    %1599 = vmatprep.subr.bf16.mxu0 %v1177
    %1600 = vmatpush1.bf16.msra.mxu0 %v1176
    %1601 = vmatprep.subr.bf16.mxu0 %v1185
    %1602 = vmatpush1.bf16.msra.mxu0 %v1184
    %1603 = vmatprep.subr.bf16.mxu0 %v1193
    %1604 = vmatpush1.bf16.msra.mxu0 %v1192
    %1605 = vmatprep.subr.bf16.mxu0 %v1201
    %1606 = vmatpush1.bf16.msra.mxu0 %v1200
    %1607 = vmatprep.subr.bf16.mxu0 %v1209
    %1608 = vmatpush1.bf16.msra.mxu0 %v1208
    %1609 = vmatprep.subr.bf16.mxu0 %v1217
    %1610 = vmatpush1.bf16.msra.mxu0 %v1216
    %1611 = vmatprep.subr.bf16.mxu0 %v1225
    %1612 = vmatpush1.bf16.msra.mxu0 %v1224
    %1613 = vmatprep.subr.bf16.mxu0 %v1233
    %1614 = vmatpush1.bf16.msra.mxu0 %v1232
    %1615 = vmatprep.subr.bf16.mxu0 %v1241
    %1616 = vmatpush1.bf16.msra.mxu0 %v1240
    %1617 = vmatprep.subr.bf16.mxu0 %v1249
    %1618 = vmatpush1.bf16.msra.mxu0 %v1248
    %1619 = vmatprep.mubr.bf16.mxu0 %v227
    %1620 = vmatmul.mubr.bf16.gmra.mrb[0].mxu0 %v226
    %v1621 = vpop.f32.mrb[0].mxu0
    %v1622 = vadd.f32 %v1581, %v1621
    %v1623 = vpop.f32.mrb[0].mxu0
    %v1624 = vadd.f32 %v1583, %v1623
    %v1625 = vpop.f32.mrb[0].mxu0
    %v1626 = vpop.f32.mrb[0].mxu0
    %1627 = vdwg.mxu0
    %1628 = vmatprep.subr.bf16.mxu0 %v235
    %1629 = vmatpush1.bf16.msra.mxu0 %v234
    %1630 = vmatprep.subr.bf16.mxu0 %v243
    %1631 = vmatpush1.bf16.msra.mxu0 %v242
    %1632 = vmatprep.subr.bf16.mxu0 %v251
    %1633 = vmatpush1.bf16.msra.mxu0 %v250
    %1634 = vmatprep.subr.bf16.mxu0 %v259
    %1635 = vmatpush1.bf16.msra.mxu0 %v258
    %1636 = vmatprep.subr.bf16.mxu0 %v267
    %1637 = vmatpush1.bf16.msra.mxu0 %v266
    %1638 = vmatprep.subr.bf16.mxu0 %v275
    %1639 = vmatpush1.bf16.msra.mxu0 %v274
    %1640 = vmatprep.subr.bf16.mxu0 %v283
    %1641 = vmatpush1.bf16.msra.mxu0 %v282
    %1642 = vmatprep.subr.bf16.mxu0 %v291
    %1643 = vmatpush1.bf16.msra.mxu0 %v290
    %1644 = vmatprep.subr.bf16.mxu0 %v299
    %1645 = vmatpush1.bf16.msra.mxu0 %v298
    %1646 = vmatprep.subr.bf16.mxu0 %v307
    %1647 = vmatpush1.bf16.msra.mxu0 %v306
    %1648 = vmatprep.subr.bf16.mxu0 %v315
    %1649 = vmatpush1.bf16.msra.mxu0 %v314
    %1650 = vmatprep.subr.bf16.mxu0 %v323
    %1651 = vmatpush1.bf16.msra.mxu0 %v322
    %1652 = vmatprep.subr.bf16.mxu0 %v331
    %1653 = vmatpush1.bf16.msra.mxu0 %v330
    %1654 = vmatprep.subr.bf16.mxu0 %v339
    %1655 = vmatpush1.bf16.msra.mxu0 %v338
    %1656 = vmatprep.subr.bf16.mxu0 %v347
    %1657 = vmatpush1.bf16.msra.mxu0 %v346
    %1658 = vmatprep.subr.bf16.mxu0 %v355
    %1659 = vmatpush1.bf16.msra.mxu0 %v354
    %1660 = vmatprep.mubr.bf16.mxu0 %v213
    %1661 = vmatmul.mubr.bf16.gmra.mrb[0].mxu0 %v212
    %v1662 = vpop.f32.mrb[0].mxu0
    %v1663 = vadd.f32 %v1271, %v1662
    %v1664 = vpop.f32.mrb[0].mxu0
    %v1665 = vadd.f32 %v1275, %v1664
    %v1666 = vpop.f32.mrb[0].mxu0
    %v1667 = vpop.f32.mrb[0].mxu0
    %1668 = vdwg.mxu0
    %1669 = vmatprep.subr.bf16.mxu0 %v363
    %1670 = vmatpush1.bf16.msra.mxu0 %v362
    %1671 = vmatprep.subr.bf16.mxu0 %v371
    %1672 = vmatpush1.bf16.msra.mxu0 %v370
    %1673 = vmatprep.subr.bf16.mxu0 %v379
    %1674 = vmatpush1.bf16.msra.mxu0 %v378
    %1675 = vmatprep.subr.bf16.mxu0 %v387
    %1676 = vmatpush1.bf16.msra.mxu0 %v386
    %1677 = vmatprep.subr.bf16.mxu0 %v395
    %1678 = vmatpush1.bf16.msra.mxu0 %v394
    %1679 = vmatprep.subr.bf16.mxu0 %v403
    %1680 = vmatpush1.bf16.msra.mxu0 %v402
    %1681 = vmatprep.subr.bf16.mxu0 %v411
    %1682 = vmatpush1.bf16.msra.mxu0 %v410
    %1683 = vmatprep.subr.bf16.mxu0 %v419
    %1684 = vmatpush1.bf16.msra.mxu0 %v418
    %1685 = vmatprep.subr.bf16.mxu0 %v427
    %1686 = vmatpush1.bf16.msra.mxu0 %v426
    %1687 = vmatprep.subr.bf16.mxu0 %v435
    %1688 = vmatpush1.bf16.msra.mxu0 %v434
    %1689 = vmatprep.subr.bf16.mxu0 %v443
    %1690 = vmatpush1.bf16.msra.mxu0 %v442
    %1691 = vmatprep.subr.bf16.mxu0 %v451
    %1692 = vmatpush1.bf16.msra.mxu0 %v450
    %1693 = vmatprep.subr.bf16.mxu0 %v459
    %1694 = vmatpush1.bf16.msra.mxu0 %v458
    %1695 = vmatprep.subr.bf16.mxu0 %v467
    %1696 = vmatpush1.bf16.msra.mxu0 %v466
    %1697 = vmatprep.subr.bf16.mxu0 %v475
    %1698 = vmatpush1.bf16.msra.mxu0 %v474
    %1699 = vmatprep.subr.bf16.mxu0 %v483
    %1700 = vmatpush1.bf16.msra.mxu0 %v482
    %1701 = vmatprep.mubr.bf16.mxu0 %v215
    %1702 = vmatmul.mubr.bf16.gmra.mrb[0].mxu0 %v214
    %v1703 = vpop.f32.mrb[0].mxu0
    %v1704 = vadd.f32 %v1663, %v1703
    %v1705 = vpop.f32.mrb[0].mxu0
    %v1706 = vadd.f32 %v1665, %v1705
    %v1707 = vpop.f32.mrb[0].mxu0
    %v1708 = vpop.f32.mrb[0].mxu0
    %1709 = vdwg.mxu0
    %1710 = vmatprep.subr.bf16.mxu0 %v491
    %1711 = vmatpush1.bf16.msra.mxu0 %v490
    %1712 = vmatprep.subr.bf16.mxu0 %v499
    %1713 = vmatpush1.bf16.msra.mxu0 %v498
    %1714 = vmatprep.subr.bf16.mxu0 %v507
    %1715 = vmatpush1.bf16.msra.mxu0 %v506
    %1716 = vmatprep.subr.bf16.mxu0 %v515
    %1717 = vmatpush1.bf16.msra.mxu0 %v514
    %1718 = vmatprep.subr.bf16.mxu0 %v523
    %1719 = vmatpush1.bf16.msra.mxu0 %v522
    %1720 = vmatprep.subr.bf16.mxu0 %v531
    %1721 = vmatpush1.bf16.msra.mxu0 %v530
    %1722 = vmatprep.subr.bf16.mxu0 %v539
    %1723 = vmatpush1.bf16.msra.mxu0 %v538
    %1724 = vmatprep.subr.bf16.mxu0 %v547
    %1725 = vmatpush1.bf16.msra.mxu0 %v546
    %1726 = vmatprep.subr.bf16.mxu0 %v555
    %1727 = vmatpush1.bf16.msra.mxu0 %v554
    %1728 = vmatprep.subr.bf16.mxu0 %v563
    %1729 = vmatpush1.bf16.msra.mxu0 %v562
    %1730 = vmatprep.subr.bf16.mxu0 %v571
    %1731 = vmatpush1.bf16.msra.mxu0 %v570
    %1732 = vmatprep.subr.bf16.mxu0 %v579
    %1733 = vmatpush1.bf16.msra.mxu0 %v578
    %1734 = vmatprep.subr.bf16.mxu0 %v587
    %1735 = vmatpush1.bf16.msra.mxu0 %v586
    %1736 = vmatprep.subr.bf16.mxu0 %v595
    %1737 = vmatpush1.bf16.msra.mxu0 %v594
    %1738 = vmatprep.subr.bf16.mxu0 %v603
    %1739 = vmatpush1.bf16.msra.mxu0 %v602
    %1740 = vmatprep.subr.bf16.mxu0 %v611
    %1741 = vmatpush1.bf16.msra.mxu0 %v610
    %1742 = vmatprep.mubr.bf16.mxu0 %v217
    %1743 = vmatmul.mubr.bf16.gmra.mrb[0].mxu0 %v216
    %v1744 = vpop.f32.mrb[0].mxu0
    %v1745 = vadd.f32 %v1704, %v1744
    %v1746 = vpop.f32.mrb[0].mxu0
    %v1747 = vadd.f32 %v1706, %v1746
    %v1748 = vpop.f32.mrb[0].mxu0
    %v1749 = vpop.f32.mrb[0].mxu0
    %1750 = vdwg.mxu0
    %1751 = vmatprep.subr.bf16.mxu0 %v619
    %1752 = vmatpush1.bf16.msra.mxu0 %v618
    %1753 = vmatprep.subr.bf16.mxu0 %v627
    %1754 = vmatpush1.bf16.msra.mxu0 %v626
    %1755 = vmatprep.subr.bf16.mxu0 %v635
    %1756 = vmatpush1.bf16.msra.mxu0 %v634
    %1757 = vmatprep.subr.bf16.mxu0 %v643
    %1758 = vmatpush1.bf16.msra.mxu0 %v642
    %1759 = vmatprep.subr.bf16.mxu0 %v651
    %1760 = vmatpush1.bf16.msra.mxu0 %v650
    %1761 = vmatprep.subr.bf16.mxu0 %v659
    %1762 = vmatpush1.bf16.msra.mxu0 %v658
    %1763 = vmatprep.subr.bf16.mxu0 %v667
    %1764 = vmatpush1.bf16.msra.mxu0 %v666
    %1765 = vmatprep.subr.bf16.mxu0 %v675
    %1766 = vmatpush1.bf16.msra.mxu0 %v674
    %1767 = vmatprep.subr.bf16.mxu0 %v683
    %1768 = vmatpush1.bf16.msra.mxu0 %v682
    %1769 = vmatprep.subr.bf16.mxu0 %v691
    %1770 = vmatpush1.bf16.msra.mxu0 %v690
    %1771 = vmatprep.subr.bf16.mxu0 %v699
    %1772 = vmatpush1.bf16.msra.mxu0 %v698
    %1773 = vmatprep.subr.bf16.mxu0 %v707
    %1774 = vmatpush1.bf16.msra.mxu0 %v706
    %1775 = vmatprep.subr.bf16.mxu0 %v715
    %1776 = vmatpush1.bf16.msra.mxu0 %v714
    %1777 = vmatprep.subr.bf16.mxu0 %v723
    %1778 = vmatpush1.bf16.msra.mxu0 %v722
    %1779 = vmatprep.subr.bf16.mxu0 %v731
    %1780 = vmatpush1.bf16.msra.mxu0 %v730
    %1781 = vmatprep.subr.bf16.mxu0 %v739
    %1782 = vmatpush1.bf16.msra.mxu0 %v738
    %1783 = vmatprep.mubr.bf16.mxu0 %v219
    %1784 = vmatmul.mubr.bf16.gmra.mrb[0].mxu0 %v218
    %v1785 = vpop.f32.mrb[0].mxu0
    %v1786 = vadd.f32 %v1745, %v1785
    %v1787 = vpop.f32.mrb[0].mxu0
    %v1788 = vadd.f32 %v1747, %v1787
    %v1789 = vpop.f32.mrb[0].mxu0
    %v1790 = vpop.f32.mrb[0].mxu0
    %1791 = vdwg.mxu0
    %1792 = vmatprep.subr.bf16.mxu0 %v747
    %1793 = vmatpush1.bf16.msra.mxu0 %v746
    %1794 = vmatprep.subr.bf16.mxu0 %v755
    %1795 = vmatpush1.bf16.msra.mxu0 %v754
    %1796 = vmatprep.subr.bf16.mxu0 %v763
    %1797 = vmatpush1.bf16.msra.mxu0 %v762
    %1798 = vmatprep.subr.bf16.mxu0 %v771
    %1799 = vmatpush1.bf16.msra.mxu0 %v770
    %1800 = vmatprep.subr.bf16.mxu0 %v779
    %1801 = vmatpush1.bf16.msra.mxu0 %v778
    %1802 = vmatprep.subr.bf16.mxu0 %v787
    %1803 = vmatpush1.bf16.msra.mxu0 %v786
    %1804 = vmatprep.subr.bf16.mxu0 %v795
    %1805 = vmatpush1.bf16.msra.mxu0 %v794
    %1806 = vmatprep.subr.bf16.mxu0 %v803
    %1807 = vmatpush1.bf16.msra.mxu0 %v802
    %1808 = vmatprep.subr.bf16.mxu0 %v811
    %1809 = vmatpush1.bf16.msra.mxu0 %v810
    %1810 = vmatprep.subr.bf16.mxu0 %v819
    %1811 = vmatpush1.bf16.msra.mxu0 %v818
    %1812 = vmatprep.subr.bf16.mxu0 %v827
    %1813 = vmatpush1.bf16.msra.mxu0 %v826
    %1814 = vmatprep.subr.bf16.mxu0 %v835
    %1815 = vmatpush1.bf16.msra.mxu0 %v834
    %1816 = vmatprep.subr.bf16.mxu0 %v843
    %1817 = vmatpush1.bf16.msra.mxu0 %v842
    %1818 = vmatprep.subr.bf16.mxu0 %v851
    %1819 = vmatpush1.bf16.msra.mxu0 %v850
    %1820 = vmatprep.subr.bf16.mxu0 %v859
    %1821 = vmatpush1.bf16.msra.mxu0 %v858
    %1822 = vmatprep.subr.bf16.mxu0 %v867
    %1823 = vmatpush1.bf16.msra.mxu0 %v866
    %1824 = vmatprep.mubr.bf16.mxu0 %v221
    %1825 = vmatmul.mubr.bf16.gmra.mrb[0].mxu0 %v220
    %v1826 = vpop.f32.mrb[0].mxu0
    %v1827 = vadd.f32 %v1786, %v1826
    %v1828 = vpop.f32.mrb[0].mxu0
    %v1829 = vadd.f32 %v1788, %v1828
    %v1830 = vpop.f32.mrb[0].mxu0
    %v1831 = vpop.f32.mrb[0].mxu0
    %1832 = vdwg.mxu0
    %1833 = vmatprep.subr.bf16.mxu0 %v875
    %1834 = vmatpush1.bf16.msra.mxu0 %v874
    %1835 = vmatprep.subr.bf16.mxu0 %v883
    %1836 = vmatpush1.bf16.msra.mxu0 %v882
    %1837 = vmatprep.subr.bf16.mxu0 %v891
    %1838 = vmatpush1.bf16.msra.mxu0 %v890
    %1839 = vmatprep.subr.bf16.mxu0 %v899
    %1840 = vmatpush1.bf16.msra.mxu0 %v898
    %1841 = vmatprep.subr.bf16.mxu0 %v907
    %1842 = vmatpush1.bf16.msra.mxu0 %v906
    %1843 = vmatprep.subr.bf16.mxu0 %v915
    %1844 = vmatpush1.bf16.msra.mxu0 %v914
    %1845 = vmatprep.subr.bf16.mxu0 %v923
    %1846 = vmatpush1.bf16.msra.mxu0 %v922
    %1847 = vmatprep.subr.bf16.mxu0 %v931
    %1848 = vmatpush1.bf16.msra.mxu0 %v930
    %1849 = vmatprep.subr.bf16.mxu0 %v939
    %1850 = vmatpush1.bf16.msra.mxu0 %v938
    %1851 = vmatprep.subr.bf16.mxu0 %v947
    %1852 = vmatpush1.bf16.msra.mxu0 %v946
    %1853 = vmatprep.subr.bf16.mxu0 %v955
    %1854 = vmatpush1.bf16.msra.mxu0 %v954
    %1855 = vmatprep.subr.bf16.mxu0 %v963
    %1856 = vmatpush1.bf16.msra.mxu0 %v962
    %1857 = vmatprep.subr.bf16.mxu0 %v971
    %1858 = vmatpush1.bf16.msra.mxu0 %v970
    %1859 = vmatprep.subr.bf16.mxu0 %v979
    %1860 = vmatpush1.bf16.msra.mxu0 %v978
    %1861 = vmatprep.subr.bf16.mxu0 %v987
    %1862 = vmatpush1.bf16.msra.mxu0 %v986
    %1863 = vmatprep.subr.bf16.mxu0 %v995
    %1864 = vmatpush1.bf16.msra.mxu0 %v994
    %1865 = vmatprep.mubr.bf16.mxu0 %v223
    %1866 = vmatmul.mubr.bf16.gmra.mrb[0].mxu0 %v222
    %v1867 = vpop.f32.mrb[0].mxu0
    %v1868 = vadd.f32 %v1827, %v1867
    %v1869 = vpop.f32.mrb[0].mxu0
    %v1870 = vadd.f32 %v1829, %v1869
    %v1871 = vpop.f32.mrb[0].mxu0
    %v1872 = vpop.f32.mrb[0].mxu0
    %1873 = vdwg.mxu0
    %1874 = vmatprep.subr.bf16.mxu0 %v1003
    %1875 = vmatpush1.bf16.msra.mxu0 %v1002
    %1876 = vmatprep.subr.bf16.mxu0 %v1011
    %1877 = vmatpush1.bf16.msra.mxu0 %v1010
    %1878 = vmatprep.subr.bf16.mxu0 %v1019
    %1879 = vmatpush1.bf16.msra.mxu0 %v1018
    %1880 = vmatprep.subr.bf16.mxu0 %v1027
    %1881 = vmatpush1.bf16.msra.mxu0 %v1026
    %1882 = vmatprep.subr.bf16.mxu0 %v1035
    %1883 = vmatpush1.bf16.msra.mxu0 %v1034
    %1884 = vmatprep.subr.bf16.mxu0 %v1043
    %1885 = vmatpush1.bf16.msra.mxu0 %v1042
    %1886 = vmatprep.subr.bf16.mxu0 %v1051
    %1887 = vmatpush1.bf16.msra.mxu0 %v1050
    %1888 = vmatprep.subr.bf16.mxu0 %v1059
    %1889 = vmatpush1.bf16.msra.mxu0 %v1058
    %1890 = vmatprep.subr.bf16.mxu0 %v1067
    %1891 = vmatpush1.bf16.msra.mxu0 %v1066
    %1892 = vmatprep.subr.bf16.mxu0 %v1075
    %1893 = vmatpush1.bf16.msra.mxu0 %v1074
    %1894 = vmatprep.subr.bf16.mxu0 %v1083
    %1895 = vmatpush1.bf16.msra.mxu0 %v1082
    %1896 = vmatprep.subr.bf16.mxu0 %v1091
    %1897 = vmatpush1.bf16.msra.mxu0 %v1090
    %1898 = vmatprep.subr.bf16.mxu0 %v1099
    %1899 = vmatpush1.bf16.msra.mxu0 %v1098
    %1900 = vmatprep.subr.bf16.mxu0 %v1107
    %1901 = vmatpush1.bf16.msra.mxu0 %v1106
    %1902 = vmatprep.subr.bf16.mxu0 %v1115
    %1903 = vmatpush1.bf16.msra.mxu0 %v1114
    %1904 = vmatprep.subr.bf16.mxu0 %v1123
    %1905 = vmatpush1.bf16.msra.mxu0 %v1122
    %1906 = vmatprep.mubr.bf16.mxu0 %v225
    %1907 = vmatmul.mubr.bf16.gmra.mrb[0].mxu0 %v224
    %v1908 = vpop.f32.mrb[0].mxu0
    %v1909 = vadd.f32 %v1868, %v1908
    %v1910 = vpop.f32.mrb[0].mxu0
    %v1911 = vadd.f32 %v1870, %v1910
    %v1912 = vpop.f32.mrb[0].mxu0
    %v1913 = vpop.f32.mrb[0].mxu0
    %1914 = vdwg.mxu0
    %1915 = vmatprep.subr.bf16.mxu0 %v1131
    %1916 = vmatpush1.bf16.msra.mxu0 %v1130
    %1917 = vmatprep.subr.bf16.mxu0 %v1139
    %1918 = vmatpush1.bf16.msra.mxu0 %v1138
    %1919 = vmatprep.subr.bf16.mxu0 %v1147
    %1920 = vmatpush1.bf16.msra.mxu0 %v1146
    %1921 = vmatprep.subr.bf16.mxu0 %v1155
    %1922 = vmatpush1.bf16.msra.mxu0 %v1154
    %1923 = vmatprep.subr.bf16.mxu0 %v1163
    %1924 = vmatpush1.bf16.msra.mxu0 %v1162
    %1925 = vmatprep.subr.bf16.mxu0 %v1171
    %1926 = vmatpush1.bf16.msra.mxu0 %v1170
    %1927 = vmatprep.subr.bf16.mxu0 %v1179
    %1928 = vmatpush1.bf16.msra.mxu0 %v1178
    %1929 = vmatprep.subr.bf16.mxu0 %v1187
    %1930 = vmatpush1.bf16.msra.mxu0 %v1186
    %1931 = vmatprep.subr.bf16.mxu0 %v1195
    %1932 = vmatpush1.bf16.msra.mxu0 %v1194
    %1933 = vmatprep.subr.bf16.mxu0 %v1203
    %1934 = vmatpush1.bf16.msra.mxu0 %v1202
    %1935 = vmatprep.subr.bf16.mxu0 %v1211
    %1936 = vmatpush1.bf16.msra.mxu0 %v1210
    %1937 = vmatprep.subr.bf16.mxu0 %v1219
    %1938 = vmatpush1.bf16.msra.mxu0 %v1218
    %1939 = vmatprep.subr.bf16.mxu0 %v1227
    %1940 = vmatpush1.bf16.msra.mxu0 %v1226
    %1941 = vmatprep.subr.bf16.mxu0 %v1235
    %1942 = vmatpush1.bf16.msra.mxu0 %v1234
    %1943 = vmatprep.subr.bf16.mxu0 %v1243
    %1944 = vmatpush1.bf16.msra.mxu0 %v1242
    %1945 = vmatprep.subr.bf16.mxu0 %v1251
    %1946 = vmatpush1.bf16.msra.mxu0 %v1250
    %1947 = vmatprep.mubr.bf16.mxu0 %v227
    %1948 = vmatmul.mubr.bf16.gmra.mrb[0].mxu0 %v226
    %v1949 = vpop.f32.mrb[0].mxu0
    %v1950 = vadd.f32 %v1909, %v1949
    %v1951 = vpop.f32.mrb[0].mxu0
    %v1952 = vadd.f32 %v1911, %v1951
    %v1953 = vpop.f32.mrb[0].mxu0
    %v1954 = vpop.f32.mrb[0].mxu0
    %1955 = vdwg.mxu0
    %1956 = vmatprep.subr.bf16.mxu0 %v237
    %1957 = vmatpush1.bf16.msra.mxu0 %v236
    %1958 = vmatprep.subr.bf16.mxu0 %v245
    %1959 = vmatpush1.bf16.msra.mxu0 %v244
    %1960 = vmatprep.subr.bf16.mxu0 %v253
    %1961 = vmatpush1.bf16.msra.mxu0 %v252
    %1962 = vmatprep.subr.bf16.mxu0 %v261
    %1963 = vmatpush1.bf16.msra.mxu0 %v260
    %1964 = vmatprep.subr.bf16.mxu0 %v269
    %1965 = vmatpush1.bf16.msra.mxu0 %v268
    %1966 = vmatprep.subr.bf16.mxu0 %v277
    %1967 = vmatpush1.bf16.msra.mxu0 %v276
    %1968 = vmatprep.subr.bf16.mxu0 %v285
    %1969 = vmatpush1.bf16.msra.mxu0 %v284
    %1970 = vmatprep.subr.bf16.mxu0 %v293
    %1971 = vmatpush1.bf16.msra.mxu0 %v292
    %1972 = vmatprep.subr.bf16.mxu0 %v301
    %1973 = vmatpush1.bf16.msra.mxu0 %v300
    %1974 = vmatprep.subr.bf16.mxu0 %v309
    %1975 = vmatpush1.bf16.msra.mxu0 %v308
    %1976 = vmatprep.subr.bf16.mxu0 %v317
    %1977 = vmatpush1.bf16.msra.mxu0 %v316
    %1978 = vmatprep.subr.bf16.mxu0 %v325
    %1979 = vmatpush1.bf16.msra.mxu0 %v324
    %1980 = vmatprep.subr.bf16.mxu0 %v333
    %1981 = vmatpush1.bf16.msra.mxu0 %v332
    %1982 = vmatprep.subr.bf16.mxu0 %v341
    %1983 = vmatpush1.bf16.msra.mxu0 %v340
    %1984 = vmatprep.subr.bf16.mxu0 %v349
    %1985 = vmatpush1.bf16.msra.mxu0 %v348
    %1986 = vmatprep.subr.bf16.mxu0 %v357
    %1987 = vmatpush1.bf16.msra.mxu0 %v356
    %1988 = vmatprep.mubr.bf16.mxu0 %v213
    %1989 = vmatmul.mubr.bf16.gmra.mrb[0].mxu0 %v212
    %v1990 = vpop.f32.mrb[0].mxu0
    %v1991 = vadd.f32 %v1279, %v1990
    %v1992 = vpop.f32.mrb[0].mxu0
    %v1993 = vadd.f32 %v1283, %v1992
    %v1994 = vpop.f32.mrb[0].mxu0
    %v1995 = vpop.f32.mrb[0].mxu0
    %1996 = vdwg.mxu0
    %1997 = vmatprep.subr.bf16.mxu0 %v365
    %1998 = vmatpush1.bf16.msra.mxu0 %v364
    %1999 = vmatprep.subr.bf16.mxu0 %v373
    %2000 = vmatpush1.bf16.msra.mxu0 %v372
    %2001 = vmatprep.subr.bf16.mxu0 %v381
    %2002 = vmatpush1.bf16.msra.mxu0 %v380
    %2003 = vmatprep.subr.bf16.mxu0 %v389
    %2004 = vmatpush1.bf16.msra.mxu0 %v388
    %2005 = vmatprep.subr.bf16.mxu0 %v397
    %2006 = vmatpush1.bf16.msra.mxu0 %v396
    %2007 = vmatprep.subr.bf16.mxu0 %v405
    %2008 = vmatpush1.bf16.msra.mxu0 %v404
    %2009 = vmatprep.subr.bf16.mxu0 %v413
    %2010 = vmatpush1.bf16.msra.mxu0 %v412
    %2011 = vmatprep.subr.bf16.mxu0 %v421
    %2012 = vmatpush1.bf16.msra.mxu0 %v420
    %2013 = vmatprep.subr.bf16.mxu0 %v429
    %2014 = vmatpush1.bf16.msra.mxu0 %v428
    %2015 = vmatprep.subr.bf16.mxu0 %v437
    %2016 = vmatpush1.bf16.msra.mxu0 %v436
    %2017 = vmatprep.subr.bf16.mxu0 %v445
    %2018 = vmatpush1.bf16.msra.mxu0 %v444
    %2019 = vmatprep.subr.bf16.mxu0 %v453
    %2020 = vmatpush1.bf16.msra.mxu0 %v452
    %2021 = vmatprep.subr.bf16.mxu0 %v461
    %2022 = vmatpush1.bf16.msra.mxu0 %v460
    %2023 = vmatprep.subr.bf16.mxu0 %v469
    %2024 = vmatpush1.bf16.msra.mxu0 %v468
    %2025 = vmatprep.subr.bf16.mxu0 %v477
    %2026 = vmatpush1.bf16.msra.mxu0 %v476
    %2027 = vmatprep.subr.bf16.mxu0 %v485
    %2028 = vmatpush1.bf16.msra.mxu0 %v484
    %2029 = vmatprep.mubr.bf16.mxu0 %v215
    %2030 = vmatmul.mubr.bf16.gmra.mrb[0].mxu0 %v214
    %v2031 = vpop.f32.mrb[0].mxu0
    %v2032 = vadd.f32 %v1991, %v2031
    %v2033 = vpop.f32.mrb[0].mxu0
    %v2034 = vadd.f32 %v1993, %v2033
    %v2035 = vpop.f32.mrb[0].mxu0
    %v2036 = vpop.f32.mrb[0].mxu0
    %2037 = vdwg.mxu0
    %2038 = vmatprep.subr.bf16.mxu0 %v493
    %2039 = vmatpush1.bf16.msra.mxu0 %v492
    %2040 = vmatprep.subr.bf16.mxu0 %v501
    %2041 = vmatpush1.bf16.msra.mxu0 %v500
    %2042 = vmatprep.subr.bf16.mxu0 %v509
    %2043 = vmatpush1.bf16.msra.mxu0 %v508
    %2044 = vmatprep.subr.bf16.mxu0 %v517
    %2045 = vmatpush1.bf16.msra.mxu0 %v516
    %2046 = vmatprep.subr.bf16.mxu0 %v525
    %2047 = vmatpush1.bf16.msra.mxu0 %v524
    %2048 = vmatprep.subr.bf16.mxu0 %v533
    %2049 = vmatpush1.bf16.msra.mxu0 %v532
    %2050 = vmatprep.subr.bf16.mxu0 %v541
    %2051 = vmatpush1.bf16.msra.mxu0 %v540
    %2052 = vmatprep.subr.bf16.mxu0 %v549
    %2053 = vmatpush1.bf16.msra.mxu0 %v548
    %2054 = vmatprep.subr.bf16.mxu0 %v557
    %2055 = vmatpush1.bf16.msra.mxu0 %v556
    %2056 = vmatprep.subr.bf16.mxu0 %v565
    %2057 = vmatpush1.bf16.msra.mxu0 %v564
    %2058 = vmatprep.subr.bf16.mxu0 %v573
    %2059 = vmatpush1.bf16.msra.mxu0 %v572
    %2060 = vmatprep.subr.bf16.mxu0 %v581
    %2061 = vmatpush1.bf16.msra.mxu0 %v580
    %2062 = vmatprep.subr.bf16.mxu0 %v589
    %2063 = vmatpush1.bf16.msra.mxu0 %v588
    %2064 = vmatprep.subr.bf16.mxu0 %v597
    %2065 = vmatpush1.bf16.msra.mxu0 %v596
    %2066 = vmatprep.subr.bf16.mxu0 %v605
    %2067 = vmatpush1.bf16.msra.mxu0 %v604
    %2068 = vmatprep.subr.bf16.mxu0 %v613
    %2069 = vmatpush1.bf16.msra.mxu0 %v612
    %2070 = vmatprep.mubr.bf16.mxu0 %v217
    %2071 = vmatmul.mubr.bf16.gmra.mrb[0].mxu0 %v216
    %v2072 = vpop.f32.mrb[0].mxu0
    %v2073 = vadd.f32 %v2032, %v2072
    %v2074 = vpop.f32.mrb[0].mxu0
    %v2075 = vadd.f32 %v2034, %v2074
    %v2076 = vpop.f32.mrb[0].mxu0
    %v2077 = vpop.f32.mrb[0].mxu0
    %2078 = vdwg.mxu0
    %2079 = vmatprep.subr.bf16.mxu0 %v621
    %2080 = vmatpush1.bf16.msra.mxu0 %v620
    %2081 = vmatprep.subr.bf16.mxu0 %v629
    %2082 = vmatpush1.bf16.msra.mxu0 %v628
    %2083 = vmatprep.subr.bf16.mxu0 %v637
    %2084 = vmatpush1.bf16.msra.mxu0 %v636
    %2085 = vmatprep.subr.bf16.mxu0 %v645
    %2086 = vmatpush1.bf16.msra.mxu0 %v644
    %2087 = vmatprep.subr.bf16.mxu0 %v653
    %2088 = vmatpush1.bf16.msra.mxu0 %v652
    %2089 = vmatprep.subr.bf16.mxu0 %v661
    %2090 = vmatpush1.bf16.msra.mxu0 %v660
    %2091 = vmatprep.subr.bf16.mxu0 %v669
    %2092 = vmatpush1.bf16.msra.mxu0 %v668
    %2093 = vmatprep.subr.bf16.mxu0 %v677
    %2094 = vmatpush1.bf16.msra.mxu0 %v676
    %2095 = vmatprep.subr.bf16.mxu0 %v685
    %2096 = vmatpush1.bf16.msra.mxu0 %v684
    %2097 = vmatprep.subr.bf16.mxu0 %v693
    %2098 = vmatpush1.bf16.msra.mxu0 %v692
    %2099 = vmatprep.subr.bf16.mxu0 %v701
    %2100 = vmatpush1.bf16.msra.mxu0 %v700
    %2101 = vmatprep.subr.bf16.mxu0 %v709
    %2102 = vmatpush1.bf16.msra.mxu0 %v708
    %2103 = vmatprep.subr.bf16.mxu0 %v717
    %2104 = vmatpush1.bf16.msra.mxu0 %v716
    %2105 = vmatprep.subr.bf16.mxu0 %v725
    %2106 = vmatpush1.bf16.msra.mxu0 %v724
    %2107 = vmatprep.subr.bf16.mxu0 %v733
    %2108 = vmatpush1.bf16.msra.mxu0 %v732
    %2109 = vmatprep.subr.bf16.mxu0 %v741
    %2110 = vmatpush1.bf16.msra.mxu0 %v740
    %2111 = vmatprep.mubr.bf16.mxu0 %v219
    %2112 = vmatmul.mubr.bf16.gmra.mrb[0].mxu0 %v218
    %v2113 = vpop.f32.mrb[0].mxu0
    %v2114 = vadd.f32 %v2073, %v2113
    %v2115 = vpop.f32.mrb[0].mxu0
    %v2116 = vadd.f32 %v2075, %v2115
    %v2117 = vpop.f32.mrb[0].mxu0
    %v2118 = vpop.f32.mrb[0].mxu0
    %2119 = vdwg.mxu0
    %2120 = vmatprep.subr.bf16.mxu0 %v749
    %2121 = vmatpush1.bf16.msra.mxu0 %v748
    %2122 = vmatprep.subr.bf16.mxu0 %v757
    %2123 = vmatpush1.bf16.msra.mxu0 %v756
    %2124 = vmatprep.subr.bf16.mxu0 %v765
    %2125 = vmatpush1.bf16.msra.mxu0 %v764
    %2126 = vmatprep.subr.bf16.mxu0 %v773
    %2127 = vmatpush1.bf16.msra.mxu0 %v772
    %2128 = vmatprep.subr.bf16.mxu0 %v781
    %2129 = vmatpush1.bf16.msra.mxu0 %v780
    %2130 = vmatprep.subr.bf16.mxu0 %v789
    %2131 = vmatpush1.bf16.msra.mxu0 %v788
    %2132 = vmatprep.subr.bf16.mxu0 %v797
    %2133 = vmatpush1.bf16.msra.mxu0 %v796
    %2134 = vmatprep.subr.bf16.mxu0 %v805
    %2135 = vmatpush1.bf16.msra.mxu0 %v804
    %2136 = vmatprep.subr.bf16.mxu0 %v813
    %2137 = vmatpush1.bf16.msra.mxu0 %v812
    %2138 = vmatprep.subr.bf16.mxu0 %v821
    %2139 = vmatpush1.bf16.msra.mxu0 %v820
    %2140 = vmatprep.subr.bf16.mxu0 %v829
    %2141 = vmatpush1.bf16.msra.mxu0 %v828
    %2142 = vmatprep.subr.bf16.mxu0 %v837
    %2143 = vmatpush1.bf16.msra.mxu0 %v836
    %2144 = vmatprep.subr.bf16.mxu0 %v845
    %2145 = vmatpush1.bf16.msra.mxu0 %v844
    %2146 = vmatprep.subr.bf16.mxu0 %v853
    %2147 = vmatpush1.bf16.msra.mxu0 %v852
    %2148 = vmatprep.subr.bf16.mxu0 %v861
    %2149 = vmatpush1.bf16.msra.mxu0 %v860
    %2150 = vmatprep.subr.bf16.mxu0 %v869
    %2151 = vmatpush1.bf16.msra.mxu0 %v868
    %2152 = vmatprep.mubr.bf16.mxu0 %v221
    %2153 = vmatmul.mubr.bf16.gmra.mrb[0].mxu0 %v220
    %v2154 = vpop.f32.mrb[0].mxu0
    %v2155 = vadd.f32 %v2114, %v2154
    %v2156 = vpop.f32.mrb[0].mxu0
    %v2157 = vadd.f32 %v2116, %v2156
    %v2158 = vpop.f32.mrb[0].mxu0
    %v2159 = vpop.f32.mrb[0].mxu0
    %2160 = vdwg.mxu0
    %2161 = vmatprep.subr.bf16.mxu0 %v877
    %2162 = vmatpush1.bf16.msra.mxu0 %v876
    %2163 = vmatprep.subr.bf16.mxu0 %v885
    %2164 = vmatpush1.bf16.msra.mxu0 %v884
    %2165 = vmatprep.subr.bf16.mxu0 %v893
    %2166 = vmatpush1.bf16.msra.mxu0 %v892
    %2167 = vmatprep.subr.bf16.mxu0 %v901
    %2168 = vmatpush1.bf16.msra.mxu0 %v900
    %2169 = vmatprep.subr.bf16.mxu0 %v909
    %2170 = vmatpush1.bf16.msra.mxu0 %v908
    %2171 = vmatprep.subr.bf16.mxu0 %v917
    %2172 = vmatpush1.bf16.msra.mxu0 %v916
    %2173 = vmatprep.subr.bf16.mxu0 %v925
    %2174 = vmatpush1.bf16.msra.mxu0 %v924
    %2175 = vmatprep.subr.bf16.mxu0 %v933
    %2176 = vmatpush1.bf16.msra.mxu0 %v932
    %2177 = vmatprep.subr.bf16.mxu0 %v941
    %2178 = vmatpush1.bf16.msra.mxu0 %v940
    %2179 = vmatprep.subr.bf16.mxu0 %v949
    %2180 = vmatpush1.bf16.msra.mxu0 %v948
    %2181 = vmatprep.subr.bf16.mxu0 %v957
    %2182 = vmatpush1.bf16.msra.mxu0 %v956
    %2183 = vmatprep.subr.bf16.mxu0 %v965
    %2184 = vmatpush1.bf16.msra.mxu0 %v964
    %2185 = vmatprep.subr.bf16.mxu0 %v973
    %2186 = vmatpush1.bf16.msra.mxu0 %v972
    %2187 = vmatprep.subr.bf16.mxu0 %v981
    %2188 = vmatpush1.bf16.msra.mxu0 %v980
    %2189 = vmatprep.subr.bf16.mxu0 %v989
    %2190 = vmatpush1.bf16.msra.mxu0 %v988
    %2191 = vmatprep.subr.bf16.mxu0 %v997
    %2192 = vmatpush1.bf16.msra.mxu0 %v996
    %2193 = vmatprep.mubr.bf16.mxu0 %v223
    %2194 = vmatmul.mubr.bf16.gmra.mrb[0].mxu0 %v222
    %v2195 = vpop.f32.mrb[0].mxu0
    %v2196 = vadd.f32 %v2155, %v2195
    %v2197 = vpop.f32.mrb[0].mxu0
    %v2198 = vadd.f32 %v2157, %v2197
    %v2199 = vpop.f32.mrb[0].mxu0
    %v2200 = vpop.f32.mrb[0].mxu0
    %2201 = vdwg.mxu0
    %2202 = vmatprep.subr.bf16.mxu0 %v1005
    %2203 = vmatpush1.bf16.msra.mxu0 %v1004
    %2204 = vmatprep.subr.bf16.mxu0 %v1013
    %2205 = vmatpush1.bf16.msra.mxu0 %v1012
    %2206 = vmatprep.subr.bf16.mxu0 %v1021
    %2207 = vmatpush1.bf16.msra.mxu0 %v1020
    %2208 = vmatprep.subr.bf16.mxu0 %v1029
    %2209 = vmatpush1.bf16.msra.mxu0 %v1028
    %2210 = vmatprep.subr.bf16.mxu0 %v1037
    %2211 = vmatpush1.bf16.msra.mxu0 %v1036
    %2212 = vmatprep.subr.bf16.mxu0 %v1045
    %2213 = vmatpush1.bf16.msra.mxu0 %v1044
    %2214 = vmatprep.subr.bf16.mxu0 %v1053
    %2215 = vmatpush1.bf16.msra.mxu0 %v1052
    %2216 = vmatprep.subr.bf16.mxu0 %v1061
    %2217 = vmatpush1.bf16.msra.mxu0 %v1060
    %2218 = vmatprep.subr.bf16.mxu0 %v1069
    %2219 = vmatpush1.bf16.msra.mxu0 %v1068
    %2220 = vmatprep.subr.bf16.mxu0 %v1077
    %2221 = vmatpush1.bf16.msra.mxu0 %v1076
    %2222 = vmatprep.subr.bf16.mxu0 %v1085
    %2223 = vmatpush1.bf16.msra.mxu0 %v1084
    %2224 = vmatprep.subr.bf16.mxu0 %v1093
    %2225 = vmatpush1.bf16.msra.mxu0 %v1092
    %2226 = vmatprep.subr.bf16.mxu0 %v1101
    %2227 = vmatpush1.bf16.msra.mxu0 %v1100
    %2228 = vmatprep.subr.bf16.mxu0 %v1109
    %2229 = vmatpush1.bf16.msra.mxu0 %v1108
    %2230 = vmatprep.subr.bf16.mxu0 %v1117
    %2231 = vmatpush1.bf16.msra.mxu0 %v1116
    %2232 = vmatprep.subr.bf16.mxu0 %v1125
    %2233 = vmatpush1.bf16.msra.mxu0 %v1124
    %2234 = vmatprep.mubr.bf16.mxu0 %v225
    %2235 = vmatmul.mubr.bf16.gmra.mrb[0].mxu0 %v224
    %v2236 = vpop.f32.mrb[0].mxu0
    %v2237 = vadd.f32 %v2196, %v2236
    %v2238 = vpop.f32.mrb[0].mxu0
    %v2239 = vadd.f32 %v2198, %v2238
    %v2240 = vpop.f32.mrb[0].mxu0
    %v2241 = vpop.f32.mrb[0].mxu0
    %2242 = vdwg.mxu0
    %2243 = vmatprep.subr.bf16.mxu0 %v1133
    %2244 = vmatpush1.bf16.msra.mxu0 %v1132
    %2245 = vmatprep.subr.bf16.mxu0 %v1141
    %2246 = vmatpush1.bf16.msra.mxu0 %v1140
    %2247 = vmatprep.subr.bf16.mxu0 %v1149
    %2248 = vmatpush1.bf16.msra.mxu0 %v1148
    %2249 = vmatprep.subr.bf16.mxu0 %v1157
    %2250 = vmatpush1.bf16.msra.mxu0 %v1156
    %2251 = vmatprep.subr.bf16.mxu0 %v1165
    %2252 = vmatpush1.bf16.msra.mxu0 %v1164
    %2253 = vmatprep.subr.bf16.mxu0 %v1173
    %2254 = vmatpush1.bf16.msra.mxu0 %v1172
    %2255 = vmatprep.subr.bf16.mxu0 %v1181
    %2256 = vmatpush1.bf16.msra.mxu0 %v1180
    %2257 = vmatprep.subr.bf16.mxu0 %v1189
    %2258 = vmatpush1.bf16.msra.mxu0 %v1188
    %2259 = vmatprep.subr.bf16.mxu0 %v1197
    %2260 = vmatpush1.bf16.msra.mxu0 %v1196
    %2261 = vmatprep.subr.bf16.mxu0 %v1205
    %2262 = vmatpush1.bf16.msra.mxu0 %v1204
    %2263 = vmatprep.subr.bf16.mxu0 %v1213
    %2264 = vmatpush1.bf16.msra.mxu0 %v1212
    %2265 = vmatprep.subr.bf16.mxu0 %v1221
    %2266 = vmatpush1.bf16.msra.mxu0 %v1220
    %2267 = vmatprep.subr.bf16.mxu0 %v1229
    %2268 = vmatpush1.bf16.msra.mxu0 %v1228
    %2269 = vmatprep.subr.bf16.mxu0 %v1237
    %2270 = vmatpush1.bf16.msra.mxu0 %v1236
    %2271 = vmatprep.subr.bf16.mxu0 %v1245
    %2272 = vmatpush1.bf16.msra.mxu0 %v1244
    %2273 = vmatprep.subr.bf16.mxu0 %v1253
    %2274 = vmatpush1.bf16.msra.mxu0 %v1252
    %2275 = vmatprep.mubr.bf16.mxu0 %v227
    %2276 = vmatmul.mubr.bf16.gmra.mrb[0].mxu0 %v226
    %v2277 = vpop.f32.mrb[0].mxu0
    %v2278 = vadd.f32 %v2237, %v2277
    %v2279 = vpop.f32.mrb[0].mxu0
    %v2280 = vadd.f32 %v2239, %v2279
    %v2281 = vpop.f32.mrb[0].mxu0
    %v2282 = vpop.f32.mrb[0].mxu0
    %2283 = vdwg.mxu0
    %2284 = vmatprep.subr.bf16.mxu0 %v239
    %2285 = vmatpush1.bf16.msra.mxu0 %v238
    %2286 = vmatprep.subr.bf16.mxu0 %v247
    %2287 = vmatpush1.bf16.msra.mxu0 %v246
    %2288 = vmatprep.subr.bf16.mxu0 %v255
    %2289 = vmatpush1.bf16.msra.mxu0 %v254
    %2290 = vmatprep.subr.bf16.mxu0 %v263
    %2291 = vmatpush1.bf16.msra.mxu0 %v262
    %2292 = vmatprep.subr.bf16.mxu0 %v271
    %2293 = vmatpush1.bf16.msra.mxu0 %v270
    %2294 = vmatprep.subr.bf16.mxu0 %v279
    %2295 = vmatpush1.bf16.msra.mxu0 %v278
    %2296 = vmatprep.subr.bf16.mxu0 %v287
    %2297 = vmatpush1.bf16.msra.mxu0 %v286
    %2298 = vmatprep.subr.bf16.mxu0 %v295
    %2299 = vmatpush1.bf16.msra.mxu0 %v294
    %2300 = vmatprep.subr.bf16.mxu0 %v303
    %2301 = vmatpush1.bf16.msra.mxu0 %v302
    %2302 = vmatprep.subr.bf16.mxu0 %v311
    %2303 = vmatpush1.bf16.msra.mxu0 %v310
    %2304 = vmatprep.subr.bf16.mxu0 %v319
    %2305 = vmatpush1.bf16.msra.mxu0 %v318
    %2306 = vmatprep.subr.bf16.mxu0 %v327
    %2307 = vmatpush1.bf16.msra.mxu0 %v326
    %2308 = vmatprep.subr.bf16.mxu0 %v335
    %2309 = vmatpush1.bf16.msra.mxu0 %v334
    %2310 = vmatprep.subr.bf16.mxu0 %v343
    %2311 = vmatpush1.bf16.msra.mxu0 %v342
    %2312 = vmatprep.subr.bf16.mxu0 %v351
    %2313 = vmatpush1.bf16.msra.mxu0 %v350
    %2314 = vmatprep.subr.bf16.mxu0 %v359
    %2315 = vmatpush1.bf16.msra.mxu0 %v358
    %2316 = vmatprep.mubr.bf16.mxu0 %v213
    %2317 = vmatmul.mubr.bf16.gmra.mrb[0].mxu0 %v212
    %v2318 = vpop.f32.mrb[0].mxu0
    %v2319 = vadd.f32 %v1287, %v2318
    %v2320 = vpop.f32.mrb[0].mxu0
    %v2321 = vadd.f32 %v1291, %v2320
    %v2322 = vpop.f32.mrb[0].mxu0
    %v2323 = vpop.f32.mrb[0].mxu0
    %2324 = vdwg.mxu0
    %2325 = vmatprep.subr.bf16.mxu0 %v367
    %2326 = vmatpush1.bf16.msra.mxu0 %v366
    %2327 = vmatprep.subr.bf16.mxu0 %v375
    %2328 = vmatpush1.bf16.msra.mxu0 %v374
    %2329 = vmatprep.subr.bf16.mxu0 %v383
    %2330 = vmatpush1.bf16.msra.mxu0 %v382
    %2331 = vmatprep.subr.bf16.mxu0 %v391
    %2332 = vmatpush1.bf16.msra.mxu0 %v390
    %2333 = vmatprep.subr.bf16.mxu0 %v399
    %2334 = vmatpush1.bf16.msra.mxu0 %v398
    %2335 = vmatprep.subr.bf16.mxu0 %v407
    %2336 = vmatpush1.bf16.msra.mxu0 %v406
    %2337 = vmatprep.subr.bf16.mxu0 %v415
    %2338 = vmatpush1.bf16.msra.mxu0 %v414
    %2339 = vmatprep.subr.bf16.mxu0 %v423
    %2340 = vmatpush1.bf16.msra.mxu0 %v422
    %2341 = vmatprep.subr.bf16.mxu0 %v431
    %2342 = vmatpush1.bf16.msra.mxu0 %v430
    %2343 = vmatprep.subr.bf16.mxu0 %v439
    %2344 = vmatpush1.bf16.msra.mxu0 %v438
    %2345 = vmatprep.subr.bf16.mxu0 %v447
    %2346 = vmatpush1.bf16.msra.mxu0 %v446
    %2347 = vmatprep.subr.bf16.mxu0 %v455
    %2348 = vmatpush1.bf16.msra.mxu0 %v454
    %2349 = vmatprep.subr.bf16.mxu0 %v463
    %2350 = vmatpush1.bf16.msra.mxu0 %v462
    %2351 = vmatprep.subr.bf16.mxu0 %v471
    %2352 = vmatpush1.bf16.msra.mxu0 %v470
    %2353 = vmatprep.subr.bf16.mxu0 %v479
    %2354 = vmatpush1.bf16.msra.mxu0 %v478
    %2355 = vmatprep.subr.bf16.mxu0 %v487
    %2356 = vmatpush1.bf16.msra.mxu0 %v486
    %2357 = vmatprep.mubr.bf16.mxu0 %v215
    %2358 = vmatmul.mubr.bf16.gmra.mrb[0].mxu0 %v214
    %v2359 = vpop.f32.mrb[0].mxu0
    %v2360 = vadd.f32 %v2319, %v2359
    %v2361 = vpop.f32.mrb[0].mxu0
    %v2362 = vadd.f32 %v2321, %v2361
    %v2363 = vpop.f32.mrb[0].mxu0
    %v2364 = vpop.f32.mrb[0].mxu0
    %2365 = vdwg.mxu0
    %2366 = vmatprep.subr.bf16.mxu0 %v495
    %2367 = vmatpush1.bf16.msra.mxu0 %v494
    %2368 = vmatprep.subr.bf16.mxu0 %v503
    %2369 = vmatpush1.bf16.msra.mxu0 %v502
    %2370 = vmatprep.subr.bf16.mxu0 %v511
    %2371 = vmatpush1.bf16.msra.mxu0 %v510
    %2372 = vmatprep.subr.bf16.mxu0 %v519
    %2373 = vmatpush1.bf16.msra.mxu0 %v518
    %2374 = vmatprep.subr.bf16.mxu0 %v527
    %2375 = vmatpush1.bf16.msra.mxu0 %v526
    %2376 = vmatprep.subr.bf16.mxu0 %v535
    %2377 = vmatpush1.bf16.msra.mxu0 %v534
    %2378 = vmatprep.subr.bf16.mxu0 %v543
    %2379 = vmatpush1.bf16.msra.mxu0 %v542
    %2380 = vmatprep.subr.bf16.mxu0 %v551
    %2381 = vmatpush1.bf16.msra.mxu0 %v550
    %2382 = vmatprep.subr.bf16.mxu0 %v559
    %2383 = vmatpush1.bf16.msra.mxu0 %v558
    %2384 = vmatprep.subr.bf16.mxu0 %v567
    %2385 = vmatpush1.bf16.msra.mxu0 %v566
    %2386 = vmatprep.subr.bf16.mxu0 %v575
    %2387 = vmatpush1.bf16.msra.mxu0 %v574
    %2388 = vmatprep.subr.bf16.mxu0 %v583
    %2389 = vmatpush1.bf16.msra.mxu0 %v582
    %2390 = vmatprep.subr.bf16.mxu0 %v591
    %2391 = vmatpush1.bf16.msra.mxu0 %v590
    %2392 = vmatprep.subr.bf16.mxu0 %v599
    %2393 = vmatpush1.bf16.msra.mxu0 %v598
    %2394 = vmatprep.subr.bf16.mxu0 %v607
    %2395 = vmatpush1.bf16.msra.mxu0 %v606
    %2396 = vmatprep.subr.bf16.mxu0 %v615
    %2397 = vmatpush1.bf16.msra.mxu0 %v614
    %2398 = vmatprep.mubr.bf16.mxu0 %v217
    %2399 = vmatmul.mubr.bf16.gmra.mrb[0].mxu0 %v216
    %v2400 = vpop.f32.mrb[0].mxu0
    %v2401 = vadd.f32 %v2360, %v2400
    %v2402 = vpop.f32.mrb[0].mxu0
    %v2403 = vadd.f32 %v2362, %v2402
    %v2404 = vpop.f32.mrb[0].mxu0
    %v2405 = vpop.f32.mrb[0].mxu0
    %2406 = vdwg.mxu0
    %2407 = vmatprep.subr.bf16.mxu0 %v623
    %2408 = vmatpush1.bf16.msra.mxu0 %v622
    %2409 = vmatprep.subr.bf16.mxu0 %v631
    %2410 = vmatpush1.bf16.msra.mxu0 %v630
    %2411 = vmatprep.subr.bf16.mxu0 %v639
    %2412 = vmatpush1.bf16.msra.mxu0 %v638
    %2413 = vmatprep.subr.bf16.mxu0 %v647
    %2414 = vmatpush1.bf16.msra.mxu0 %v646
    %2415 = vmatprep.subr.bf16.mxu0 %v655
    %2416 = vmatpush1.bf16.msra.mxu0 %v654
    %2417 = vmatprep.subr.bf16.mxu0 %v663
    %2418 = vmatpush1.bf16.msra.mxu0 %v662
    %2419 = vmatprep.subr.bf16.mxu0 %v671
    %2420 = vmatpush1.bf16.msra.mxu0 %v670
    %2421 = vmatprep.subr.bf16.mxu0 %v679
    %2422 = vmatpush1.bf16.msra.mxu0 %v678
    %2423 = vmatprep.subr.bf16.mxu0 %v687
    %2424 = vmatpush1.bf16.msra.mxu0 %v686
    %2425 = vmatprep.subr.bf16.mxu0 %v695
    %2426 = vmatpush1.bf16.msra.mxu0 %v694
    %2427 = vmatprep.subr.bf16.mxu0 %v703
    %2428 = vmatpush1.bf16.msra.mxu0 %v702
    %2429 = vmatprep.subr.bf16.mxu0 %v711
    %2430 = vmatpush1.bf16.msra.mxu0 %v710
    %2431 = vmatprep.subr.bf16.mxu0 %v719
    %2432 = vmatpush1.bf16.msra.mxu0 %v718
    %2433 = vmatprep.subr.bf16.mxu0 %v727
    %2434 = vmatpush1.bf16.msra.mxu0 %v726
    %2435 = vmatprep.subr.bf16.mxu0 %v735
    %2436 = vmatpush1.bf16.msra.mxu0 %v734
    %2437 = vmatprep.subr.bf16.mxu0 %v743
    %2438 = vmatpush1.bf16.msra.mxu0 %v742
    %2439 = vmatprep.mubr.bf16.mxu0 %v219
    %2440 = vmatmul.mubr.bf16.gmra.mrb[0].mxu0 %v218
    %v2441 = vpop.f32.mrb[0].mxu0
    %v2442 = vadd.f32 %v2401, %v2441
    %v2443 = vpop.f32.mrb[0].mxu0
    %v2444 = vadd.f32 %v2403, %v2443
    %v2445 = vpop.f32.mrb[0].mxu0
    %v2446 = vpop.f32.mrb[0].mxu0
    %2447 = vdwg.mxu0
    %2448 = vmatprep.subr.bf16.mxu0 %v751
    %2449 = vmatpush1.bf16.msra.mxu0 %v750
    %2450 = vmatprep.subr.bf16.mxu0 %v759
    %2451 = vmatpush1.bf16.msra.mxu0 %v758
    %2452 = vmatprep.subr.bf16.mxu0 %v767
    %2453 = vmatpush1.bf16.msra.mxu0 %v766
    %2454 = vmatprep.subr.bf16.mxu0 %v775
    %2455 = vmatpush1.bf16.msra.mxu0 %v774
    %2456 = vmatprep.subr.bf16.mxu0 %v783
    %2457 = vmatpush1.bf16.msra.mxu0 %v782
    %2458 = vmatprep.subr.bf16.mxu0 %v791
    %2459 = vmatpush1.bf16.msra.mxu0 %v790
    %2460 = vmatprep.subr.bf16.mxu0 %v799
    %2461 = vmatpush1.bf16.msra.mxu0 %v798
    %2462 = vmatprep.subr.bf16.mxu0 %v807
    %2463 = vmatpush1.bf16.msra.mxu0 %v806
    %2464 = vmatprep.subr.bf16.mxu0 %v815
    %2465 = vmatpush1.bf16.msra.mxu0 %v814
    %2466 = vmatprep.subr.bf16.mxu0 %v823
    %2467 = vmatpush1.bf16.msra.mxu0 %v822
    %2468 = vmatprep.subr.bf16.mxu0 %v831
    %2469 = vmatpush1.bf16.msra.mxu0 %v830
    %2470 = vmatprep.subr.bf16.mxu0 %v839
    %2471 = vmatpush1.bf16.msra.mxu0 %v838
    %2472 = vmatprep.subr.bf16.mxu0 %v847
    %2473 = vmatpush1.bf16.msra.mxu0 %v846
    %2474 = vmatprep.subr.bf16.mxu0 %v855
    %2475 = vmatpush1.bf16.msra.mxu0 %v854
    %2476 = vmatprep.subr.bf16.mxu0 %v863
    %2477 = vmatpush1.bf16.msra.mxu0 %v862
    %2478 = vmatprep.subr.bf16.mxu0 %v871
    %2479 = vmatpush1.bf16.msra.mxu0 %v870
    %2480 = vmatprep.mubr.bf16.mxu0 %v221
    %2481 = vmatmul.mubr.bf16.gmra.mrb[0].mxu0 %v220
    %v2482 = vpop.f32.mrb[0].mxu0
    %v2483 = vadd.f32 %v2442, %v2482
    %v2484 = vpop.f32.mrb[0].mxu0
    %v2485 = vadd.f32 %v2444, %v2484
    %v2486 = vpop.f32.mrb[0].mxu0
    %v2487 = vpop.f32.mrb[0].mxu0
    %2488 = vdwg.mxu0
    %2489 = vmatprep.subr.bf16.mxu0 %v879
    %2490 = vmatpush1.bf16.msra.mxu0 %v878
    %2491 = vmatprep.subr.bf16.mxu0 %v887
    %2492 = vmatpush1.bf16.msra.mxu0 %v886
    %2493 = vmatprep.subr.bf16.mxu0 %v895
    %2494 = vmatpush1.bf16.msra.mxu0 %v894
    %2495 = vmatprep.subr.bf16.mxu0 %v903
    %2496 = vmatpush1.bf16.msra.mxu0 %v902
    %2497 = vmatprep.subr.bf16.mxu0 %v911
    %2498 = vmatpush1.bf16.msra.mxu0 %v910
    %2499 = vmatprep.subr.bf16.mxu0 %v919
    %2500 = vmatpush1.bf16.msra.mxu0 %v918
    %2501 = vmatprep.subr.bf16.mxu0 %v927
    %2502 = vmatpush1.bf16.msra.mxu0 %v926
    %2503 = vmatprep.subr.bf16.mxu0 %v935
    %2504 = vmatpush1.bf16.msra.mxu0 %v934
    %2505 = vmatprep.subr.bf16.mxu0 %v943
    %2506 = vmatpush1.bf16.msra.mxu0 %v942
    %2507 = vmatprep.subr.bf16.mxu0 %v951
    %2508 = vmatpush1.bf16.msra.mxu0 %v950
    %2509 = vmatprep.subr.bf16.mxu0 %v959
    %2510 = vmatpush1.bf16.msra.mxu0 %v958
    %2511 = vmatprep.subr.bf16.mxu0 %v967
    %2512 = vmatpush1.bf16.msra.mxu0 %v966
    %2513 = vmatprep.subr.bf16.mxu0 %v975
    %2514 = vmatpush1.bf16.msra.mxu0 %v974
    %2515 = vmatprep.subr.bf16.mxu0 %v983
    %2516 = vmatpush1.bf16.msra.mxu0 %v982
    %2517 = vmatprep.subr.bf16.mxu0 %v991
    %2518 = vmatpush1.bf16.msra.mxu0 %v990
    %2519 = vmatprep.subr.bf16.mxu0 %v999
    %2520 = vmatpush1.bf16.msra.mxu0 %v998
    %2521 = vmatprep.mubr.bf16.mxu0 %v223
    %2522 = vmatmul.mubr.bf16.gmra.mrb[0].mxu0 %v222
    %v2523 = vpop.f32.mrb[0].mxu0
    %v2524 = vadd.f32 %v2483, %v2523
    %v2525 = vpop.f32.mrb[0].mxu0
    %v2526 = vadd.f32 %v2485, %v2525
    %v2527 = vpop.f32.mrb[0].mxu0
    %v2528 = vpop.f32.mrb[0].mxu0
    %2529 = vdwg.mxu0
    %2530 = vmatprep.subr.bf16.mxu0 %v1007
    %2531 = vmatpush1.bf16.msra.mxu0 %v1006
    %2532 = vmatprep.subr.bf16.mxu0 %v1015
    %2533 = vmatpush1.bf16.msra.mxu0 %v1014
    %2534 = vmatprep.subr.bf16.mxu0 %v1023
    %2535 = vmatpush1.bf16.msra.mxu0 %v1022
    %2536 = vmatprep.subr.bf16.mxu0 %v1031
    %2537 = vmatpush1.bf16.msra.mxu0 %v1030
    %2538 = vmatprep.subr.bf16.mxu0 %v1039
    %2539 = vmatpush1.bf16.msra.mxu0 %v1038
    %2540 = vmatprep.subr.bf16.mxu0 %v1047
    %2541 = vmatpush1.bf16.msra.mxu0 %v1046
    %2542 = vmatprep.subr.bf16.mxu0 %v1055
    %2543 = vmatpush1.bf16.msra.mxu0 %v1054
    %2544 = vmatprep.subr.bf16.mxu0 %v1063
    %2545 = vmatpush1.bf16.msra.mxu0 %v1062
    %2546 = vmatprep.subr.bf16.mxu0 %v1071
    %2547 = vmatpush1.bf16.msra.mxu0 %v1070
    %2548 = vmatprep.subr.bf16.mxu0 %v1079
    %2549 = vmatpush1.bf16.msra.mxu0 %v1078
    %2550 = vmatprep.subr.bf16.mxu0 %v1087
    %2551 = vmatpush1.bf16.msra.mxu0 %v1086
    %2552 = vmatprep.subr.bf16.mxu0 %v1095
    %2553 = vmatpush1.bf16.msra.mxu0 %v1094
    %2554 = vmatprep.subr.bf16.mxu0 %v1103
    %2555 = vmatpush1.bf16.msra.mxu0 %v1102
    %2556 = vmatprep.subr.bf16.mxu0 %v1111
    %2557 = vmatpush1.bf16.msra.mxu0 %v1110
    %2558 = vmatprep.subr.bf16.mxu0 %v1119
    %2559 = vmatpush1.bf16.msra.mxu0 %v1118
    %2560 = vmatprep.subr.bf16.mxu0 %v1127
    %2561 = vmatpush1.bf16.msra.mxu0 %v1126
    %2562 = vmatprep.mubr.bf16.mxu0 %v225
    %2563 = vmatmul.mubr.bf16.gmra.mrb[0].mxu0 %v224
    %v2564 = vpop.f32.mrb[0].mxu0
    %v2565 = vadd.f32 %v2524, %v2564
    %v2566 = vpop.f32.mrb[0].mxu0
    %v2567 = vadd.f32 %v2526, %v2566
    %v2568 = vpop.f32.mrb[0].mxu0
    %v2569 = vpop.f32.mrb[0].mxu0
    %2570 = vdwg.mxu0
    %2571 = vmatprep.subr.bf16.mxu0 %v1135
    %2572 = vmatpush1.bf16.msra.mxu0 %v1134
    %2573 = vmatprep.subr.bf16.mxu0 %v1143
    %2574 = vmatpush1.bf16.msra.mxu0 %v1142
    %2575 = vmatprep.subr.bf16.mxu0 %v1151
    %2576 = vmatpush1.bf16.msra.mxu0 %v1150
    %2577 = vmatprep.subr.bf16.mxu0 %v1159
    %2578 = vmatpush1.bf16.msra.mxu0 %v1158
    %2579 = vmatprep.subr.bf16.mxu0 %v1167
    %2580 = vmatpush1.bf16.msra.mxu0 %v1166
    %2581 = vmatprep.subr.bf16.mxu0 %v1175
    %2582 = vmatpush1.bf16.msra.mxu0 %v1174
    %2583 = vmatprep.subr.bf16.mxu0 %v1183
    %2584 = vmatpush1.bf16.msra.mxu0 %v1182
    %2585 = vmatprep.subr.bf16.mxu0 %v1191
    %2586 = vmatpush1.bf16.msra.mxu0 %v1190
    %2587 = vmatprep.subr.bf16.mxu0 %v1199
    %2588 = vmatpush1.bf16.msra.mxu0 %v1198
    %2589 = vmatprep.subr.bf16.mxu0 %v1207
    %2590 = vmatpush1.bf16.msra.mxu0 %v1206
    %2591 = vmatprep.subr.bf16.mxu0 %v1215
    %2592 = vmatpush1.bf16.msra.mxu0 %v1214
    %2593 = vmatprep.subr.bf16.mxu0 %v1223
    %2594 = vmatpush1.bf16.msra.mxu0 %v1222
    %2595 = vmatprep.subr.bf16.mxu0 %v1231
    %2596 = vmatpush1.bf16.msra.mxu0 %v1230
    %2597 = vmatprep.subr.bf16.mxu0 %v1239
    %2598 = vmatpush1.bf16.msra.mxu0 %v1238
    %2599 = vmatprep.subr.bf16.mxu0 %v1247
    %2600 = vmatpush1.bf16.msra.mxu0 %v1246
    %2601 = vmatprep.subr.bf16.mxu0 %v1255
    %2602 = vmatpush1.bf16.msra.mxu0 %v1254
    %2603 = vmatprep.mubr.bf16.mxu0 %v227
    %2604 = vmatmul.mubr.bf16.gmra.mrb[0].mxu0 %v226
    %v2605 = vpop.f32.mrb[0].mxu0
    %v2606 = vadd.f32 %v2565, %v2605
    %v2607 = vpop.f32.mrb[0].mxu0
    %v2608 = vadd.f32 %v2567, %v2607
    %v2609 = vpop.f32.mrb[0].mxu0
    %v2610 = vpop.f32.mrb[0].mxu0
    %2611 = vdwg.mxu0
    %v2612 = vmul.f32 %v1622, 0.5
    %v2613 = vmul.f32 %v1624, 0.5
    %v2614 = vmul.f32 %v1950, 0.5
    %v2615 = vmul.f32 %v1952, 0.5
    %v2616 = vmul.f32 %v2278, 0.5
    %v2617 = vmul.f32 %v2280, 0.5
    %v2618 = vmul.f32 %v2606, 0.5
    %v2619 = vmul.f32 %v2608, 0.5
    %v2620 = vmul.f32 %v1622, 0.70710677
    %v2621 = vmul.f32 %v1624, 0.70710677
    %v2622 = vmul.f32 %v1950, 0.70710677
    %v2623 = vmul.f32 %v1952, 0.70710677
    %v2624 = vmul.f32 %v2278, 0.70710677
    %v2625 = vmul.f32 %v2280, 0.70710677
    %v2626 = vmul.f32 %v2606, 0.70710677
    %v2627 = vmul.f32 %v2608, 0.70710677
    %v2628 = verf.f32.pop %v2620
    %v2629 = verf.f32.pop %v2621
    %v2630 = verf.f32.pop %v2622
    %v2631 = verf.f32.pop %v2623
    %v2632 = verf.f32.pop %v2624
    %v2633 = verf.f32.pop %v2625
    %v2634 = verf.f32.pop %v2626
    %v2635 = verf.f32.pop %v2627
    %v2636 = vadd.f32 %v2628, 1.0
    %v2637 = vadd.f32 %v2629, 1.0
    %v2638 = vadd.f32 %v2630, 1.0
    %v2639 = vadd.f32 %v2631, 1.0
    %v2640 = vadd.f32 %v2632, 1.0
    %v2641 = vadd.f32 %v2633, 1.0
    %v2642 = vadd.f32 %v2634, 1.0
    %v2643 = vadd.f32 %v2635, 1.0
    %v2644 = vmul.f32 %v2612, %v2636
    %v2645 = vmul.f32 %v2613, %v2637
    %v2646 = vmul.f32 %v2614, %v2638
    %v2647 = vmul.f32 %v2615, %v2639
    %v2648 = vmul.f32 %v2616, %v2640
    %v2649 = vmul.f32 %v2617, %v2641
    %v2650 = vmul.f32 %v2618, %v2642
    %v2651 = vmul.f32 %v2619, %v2643
    %v2652 = vpack.c.bf16 %v2644, %v2644
    %v2653 = vpack.c.bf16 %v2645, %v2645
    %v2654 = vpack.c.bf16 %v2646, %v2646
    %v2655 = vpack.c.bf16 %v2647, %v2647
    %v2656 = vpack.c.bf16 %v2648, %v2648
    %v2657 = vpack.c.bf16 %v2649, %v2649
    %v2658 = vpack.c.bf16 %v2650, %v2650
    %v2659 = vpack.c.bf16 %v2651, %v2651
    %s2660 = smul.u32 4, 128
    %s2661 = smul.u32 %s2660, 4
    %s2662 = sshll.u32 %s2661, 4
    %2663 = dma.done %s78, %s2662
    %v2664 = vld [vmem:[#allocation3] sm:$0xff]
    %v2665 = vld [vmem:[#allocation3 + $0x8] sm:$0xff]
    %v2666 = vld [vmem:[#allocation3 + $0x10] sm:$0xff]
    %v2667 = vld [vmem:[#allocation3 + $0x18] sm:$0xff]
    %v2668 = vld [vmem:[#allocation3 + $0x20] sm:$0xff]
    %v2669 = vld [vmem:[#allocation3 + $0x28] sm:$0xff]
    %v2670 = vld [vmem:[#allocation3 + $0x30] sm:$0xff]
    %v2671 = vld [vmem:[#allocation3 + $0x38] sm:$0xff]
    %v2672 = vld [vmem:[#allocation3 + $0x40] sm:$0xff]
    %v2673 = vld [vmem:[#allocation3 + $0x48] sm:$0xff]
    %v2674 = vld [vmem:[#allocation3 + $0x50] sm:$0xff]
    %v2675 = vld [vmem:[#allocation3 + $0x58] sm:$0xff]
    %v2676 = vld [vmem:[#allocation3 + $0x60] sm:$0xff]
    %v2677 = vld [vmem:[#allocation3 + $0x68] sm:$0xff]
    %v2678 = vld [vmem:[#allocation3 + $0x70] sm:$0xff]
    %v2679 = vld [vmem:[#allocation3 + $0x78] sm:$0xff]
    %v2680 = vld [vmem:[#allocation3 + $0x80] sm:$0xff]
    %v2681 = vld [vmem:[#allocation3 + $0x88] sm:$0xff]
    %v2682 = vld [vmem:[#allocation3 + $0x90] sm:$0xff]
    %v2683 = vld [vmem:[#allocation3 + $0x98] sm:$0xff]
    %v2684 = vld [vmem:[#allocation3 + $0xa0] sm:$0xff]
    %v2685 = vld [vmem:[#allocation3 + $0xa8] sm:$0xff]
    %v2686 = vld [vmem:[#allocation3 + $0xb0] sm:$0xff]
    %v2687 = vld [vmem:[#allocation3 + $0xb8] sm:$0xff]
    %v2688 = vld [vmem:[#allocation3 + $0xc0] sm:$0xff]
    %v2689 = vld [vmem:[#allocation3 + $0xc8] sm:$0xff]
    %v2690 = vld [vmem:[#allocation3 + $0xd0] sm:$0xff]
    %v2691 = vld [vmem:[#allocation3 + $0xd8] sm:$0xff]
    %v2692 = vld [vmem:[#allocation3 + $0xe0] sm:$0xff]
    %v2693 = vld [vmem:[#allocation3 + $0xe8] sm:$0xff]
    %v2694 = vld [vmem:[#allocation3 + $0xf0] sm:$0xff]
    %v2695 = vld [vmem:[#allocation3 + $0xf8] sm:$0xff]
    %v2696 = vld [vmem:[#allocation3 + $0x100] sm:$0xff]
    %v2697 = vld [vmem:[#allocation3 + $0x108] sm:$0xff]
    %v2698 = vld [vmem:[#allocation3 + $0x110] sm:$0xff]
    %v2699 = vld [vmem:[#allocation3 + $0x118] sm:$0xff]
    %v2700 = vld [vmem:[#allocation3 + $0x120] sm:$0xff]
    %v2701 = vld [vmem:[#allocation3 + $0x128] sm:$0xff]
    %v2702 = vld [vmem:[#allocation3 + $0x130] sm:$0xff]
    %v2703 = vld [vmem:[#allocation3 + $0x138] sm:$0xff]
    %v2704 = vld [vmem:[#allocation3 + $0x140] sm:$0xff]
    %v2705 = vld [vmem:[#allocation3 + $0x148] sm:$0xff]
    %v2706 = vld [vmem:[#allocation3 + $0x150] sm:$0xff]
    %v2707 = vld [vmem:[#allocation3 + $0x158] sm:$0xff]
    %v2708 = vld [vmem:[#allocation3 + $0x160] sm:$0xff]
    %v2709 = vld [vmem:[#allocation3 + $0x168] sm:$0xff]
    %v2710 = vld [vmem:[#allocation3 + $0x170] sm:$0xff]
    %v2711 = vld [vmem:[#allocation3 + $0x178] sm:$0xff]
    %v2712 = vld [vmem:[#allocation3 + $0x180] sm:$0xff]
    %v2713 = vld [vmem:[#allocation3 + $0x188] sm:$0xff]
    %v2714 = vld [vmem:[#allocation3 + $0x190] sm:$0xff]
    %v2715 = vld [vmem:[#allocation3 + $0x198] sm:$0xff]
    %v2716 = vld [vmem:[#allocation3 + $0x1a0] sm:$0xff]
    %v2717 = vld [vmem:[#allocation3 + $0x1a8] sm:$0xff]
    %v2718 = vld [vmem:[#allocation3 + $0x1b0] sm:$0xff]
    %v2719 = vld [vmem:[#allocation3 + $0x1b8] sm:$0xff]
    %v2720 = vld [vmem:[#allocation3 + $0x1c0] sm:$0xff]
    %v2721 = vld [vmem:[#allocation3 + $0x1c8] sm:$0xff]
    %v2722 = vld [vmem:[#allocation3 + $0x1d0] sm:$0xff]
    %v2723 = vld [vmem:[#allocation3 + $0x1d8] sm:$0xff]
    %v2724 = vld [vmem:[#allocation3 + $0x1e0] sm:$0xff]
    %v2725 = vld [vmem:[#allocation3 + $0x1e8] sm:$0xff]
    %v2726 = vld [vmem:[#allocation3 + $0x1f0] sm:$0xff]
    %v2727 = vld [vmem:[#allocation3 + $0x1f8] sm:$0xff]
    %v2728 = vld [vmem:[#allocation3 + $0x200] sm:$0xff]
    %v2729 = vld [vmem:[#allocation3 + $0x208] sm:$0xff]
    %v2730 = vld [vmem:[#allocation3 + $0x210] sm:$0xff]
    %v2731 = vld [vmem:[#allocation3 + $0x218] sm:$0xff]
    %v2732 = vld [vmem:[#allocation3 + $0x220] sm:$0xff]
    %v2733 = vld [vmem:[#allocation3 + $0x228] sm:$0xff]
    %v2734 = vld [vmem:[#allocation3 + $0x230] sm:$0xff]
    %v2735 = vld [vmem:[#allocation3 + $0x238] sm:$0xff]
    %v2736 = vld [vmem:[#allocation3 + $0x240] sm:$0xff]
    %v2737 = vld [vmem:[#allocation3 + $0x248] sm:$0xff]
    %v2738 = vld [vmem:[#allocation3 + $0x250] sm:$0xff]
    %v2739 = vld [vmem:[#allocation3 + $0x258] sm:$0xff]
    %v2740 = vld [vmem:[#allocation3 + $0x260] sm:$0xff]
    %v2741 = vld [vmem:[#allocation3 + $0x268] sm:$0xff]
    %v2742 = vld [vmem:[#allocation3 + $0x270] sm:$0xff]
    %v2743 = vld [vmem:[#allocation3 + $0x278] sm:$0xff]
    %v2744 = vld [vmem:[#allocation3 + $0x280] sm:$0xff]
    %v2745 = vld [vmem:[#allocation3 + $0x288] sm:$0xff]
    %v2746 = vld [vmem:[#allocation3 + $0x290] sm:$0xff]
    %v2747 = vld [vmem:[#allocation3 + $0x298] sm:$0xff]
    %v2748 = vld [vmem:[#allocation3 + $0x2a0] sm:$0xff]
    %v2749 = vld [vmem:[#allocation3 + $0x2a8] sm:$0xff]
    %v2750 = vld [vmem:[#allocation3 + $0x2b0] sm:$0xff]
    %v2751 = vld [vmem:[#allocation3 + $0x2b8] sm:$0xff]
    %v2752 = vld [vmem:[#allocation3 + $0x2c0] sm:$0xff]
    %v2753 = vld [vmem:[#allocation3 + $0x2c8] sm:$0xff]
    %v2754 = vld [vmem:[#allocation3 + $0x2d0] sm:$0xff]
    %v2755 = vld [vmem:[#allocation3 + $0x2d8] sm:$0xff]
    %v2756 = vld [vmem:[#allocation3 + $0x2e0] sm:$0xff]
    %v2757 = vld [vmem:[#allocation3 + $0x2e8] sm:$0xff]
    %v2758 = vld [vmem:[#allocation3 + $0x2f0] sm:$0xff]
    %v2759 = vld [vmem:[#allocation3 + $0x2f8] sm:$0xff]
    %v2760 = vld [vmem:[#allocation3 + $0x300] sm:$0xff]
    %v2761 = vld [vmem:[#allocation3 + $0x308] sm:$0xff]
    %v2762 = vld [vmem:[#allocation3 + $0x310] sm:$0xff]
    %v2763 = vld [vmem:[#allocation3 + $0x318] sm:$0xff]
    %v2764 = vld [vmem:[#allocation3 + $0x320] sm:$0xff]
    %v2765 = vld [vmem:[#allocation3 + $0x328] sm:$0xff]
    %v2766 = vld [vmem:[#allocation3 + $0x330] sm:$0xff]
    %v2767 = vld [vmem:[#allocation3 + $0x338] sm:$0xff]
    %v2768 = vld [vmem:[#allocation3 + $0x340] sm:$0xff]
    %v2769 = vld [vmem:[#allocation3 + $0x348] sm:$0xff]
    %v2770 = vld [vmem:[#allocation3 + $0x350] sm:$0xff]
    %v2771 = vld [vmem:[#allocation3 + $0x358] sm:$0xff]
    %v2772 = vld [vmem:[#allocation3 + $0x360] sm:$0xff]
    %v2773 = vld [vmem:[#allocation3 + $0x368] sm:$0xff]
    %v2774 = vld [vmem:[#allocation3 + $0x370] sm:$0xff]
    %v2775 = vld [vmem:[#allocation3 + $0x378] sm:$0xff]
    %v2776 = vld [vmem:[#allocation3 + $0x380] sm:$0xff]
    %v2777 = vld [vmem:[#allocation3 + $0x388] sm:$0xff]
    %v2778 = vld [vmem:[#allocation3 + $0x390] sm:$0xff]
    %v2779 = vld [vmem:[#allocation3 + $0x398] sm:$0xff]
    %v2780 = vld [vmem:[#allocation3 + $0x3a0] sm:$0xff]
    %v2781 = vld [vmem:[#allocation3 + $0x3a8] sm:$0xff]
    %v2782 = vld [vmem:[#allocation3 + $0x3b0] sm:$0xff]
    %v2783 = vld [vmem:[#allocation3 + $0x3b8] sm:$0xff]
    %v2784 = vld [vmem:[#allocation3 + $0x3c0] sm:$0xff]
    %v2785 = vld [vmem:[#allocation3 + $0x3c8] sm:$0xff]
    %v2786 = vld [vmem:[#allocation3 + $0x3d0] sm:$0xff]
    %v2787 = vld [vmem:[#allocation3 + $0x3d8] sm:$0xff]
    %v2788 = vld [vmem:[#allocation3 + $0x3e0] sm:$0xff]
    %v2789 = vld [vmem:[#allocation3 + $0x3e8] sm:$0xff]
    %v2790 = vld [vmem:[#allocation3 + $0x3f0] sm:$0xff]
    %v2791 = vld [vmem:[#allocation3 + $0x3f8] sm:$0xff]
    %v2792 = vld [vmem:[#allocation3 + $0x400] sm:$0xff]
    %v2793 = vld [vmem:[#allocation3 + $0x408] sm:$0xff]
    %v2794 = vld [vmem:[#allocation3 + $0x410] sm:$0xff]
    %v2795 = vld [vmem:[#allocation3 + $0x418] sm:$0xff]
    %v2796 = vld [vmem:[#allocation3 + $0x420] sm:$0xff]
    %v2797 = vld [vmem:[#allocation3 + $0x428] sm:$0xff]
    %v2798 = vld [vmem:[#allocation3 + $0x430] sm:$0xff]
    %v2799 = vld [vmem:[#allocation3 + $0x438] sm:$0xff]
    %v2800 = vld [vmem:[#allocation3 + $0x440] sm:$0xff]
    %v2801 = vld [vmem:[#allocation3 + $0x448] sm:$0xff]
    %v2802 = vld [vmem:[#allocation3 + $0x450] sm:$0xff]
    %v2803 = vld [vmem:[#allocation3 + $0x458] sm:$0xff]
    %v2804 = vld [vmem:[#allocation3 + $0x460] sm:$0xff]
    %v2805 = vld [vmem:[#allocation3 + $0x468] sm:$0xff]
    %v2806 = vld [vmem:[#allocation3 + $0x470] sm:$0xff]
    %v2807 = vld [vmem:[#allocation3 + $0x478] sm:$0xff]
    %v2808 = vld [vmem:[#allocation3 + $0x480] sm:$0xff]
    %v2809 = vld [vmem:[#allocation3 + $0x488] sm:$0xff]
    %v2810 = vld [vmem:[#allocation3 + $0x490] sm:$0xff]
    %v2811 = vld [vmem:[#allocation3 + $0x498] sm:$0xff]
    %v2812 = vld [vmem:[#allocation3 + $0x4a0] sm:$0xff]
    %v2813 = vld [vmem:[#allocation3 + $0x4a8] sm:$0xff]
    %v2814 = vld [vmem:[#allocation3 + $0x4b0] sm:$0xff]
    %v2815 = vld [vmem:[#allocation3 + $0x4b8] sm:$0xff]
    %v2816 = vld [vmem:[#allocation3 + $0x4c0] sm:$0xff]
    %v2817 = vld [vmem:[#allocation3 + $0x4c8] sm:$0xff]
    %v2818 = vld [vmem:[#allocation3 + $0x4d0] sm:$0xff]
    %v2819 = vld [vmem:[#allocation3 + $0x4d8] sm:$0xff]
    %v2820 = vld [vmem:[#allocation3 + $0x4e0] sm:$0xff]
    %v2821 = vld [vmem:[#allocation3 + $0x4e8] sm:$0xff]
    %v2822 = vld [vmem:[#allocation3 + $0x4f0] sm:$0xff]
    %v2823 = vld [vmem:[#allocation3 + $0x4f8] sm:$0xff]
    %v2824 = vld [vmem:[#allocation3 + $0x500] sm:$0xff]
    %v2825 = vld [vmem:[#allocation3 + $0x508] sm:$0xff]
    %v2826 = vld [vmem:[#allocation3 + $0x510] sm:$0xff]
    %v2827 = vld [vmem:[#allocation3 + $0x518] sm:$0xff]
    %v2828 = vld [vmem:[#allocation3 + $0x520] sm:$0xff]
    %v2829 = vld [vmem:[#allocation3 + $0x528] sm:$0xff]
    %v2830 = vld [vmem:[#allocation3 + $0x530] sm:$0xff]
    %v2831 = vld [vmem:[#allocation3 + $0x538] sm:$0xff]
    %v2832 = vld [vmem:[#allocation3 + $0x540] sm:$0xff]
    %v2833 = vld [vmem:[#allocation3 + $0x548] sm:$0xff]
    %v2834 = vld [vmem:[#allocation3 + $0x550] sm:$0xff]
    %v2835 = vld [vmem:[#allocation3 + $0x558] sm:$0xff]
    %v2836 = vld [vmem:[#allocation3 + $0x560] sm:$0xff]
    %v2837 = vld [vmem:[#allocation3 + $0x568] sm:$0xff]
    %v2838 = vld [vmem:[#allocation3 + $0x570] sm:$0xff]
    %v2839 = vld [vmem:[#allocation3 + $0x578] sm:$0xff]
    %v2840 = vld [vmem:[#allocation3 + $0x580] sm:$0xff]
    %v2841 = vld [vmem:[#allocation3 + $0x588] sm:$0xff]
    %v2842 = vld [vmem:[#allocation3 + $0x590] sm:$0xff]
    %v2843 = vld [vmem:[#allocation3 + $0x598] sm:$0xff]
    %v2844 = vld [vmem:[#allocation3 + $0x5a0] sm:$0xff]
    %v2845 = vld [vmem:[#allocation3 + $0x5a8] sm:$0xff]
    %v2846 = vld [vmem:[#allocation3 + $0x5b0] sm:$0xff]
    %v2847 = vld [vmem:[#allocation3 + $0x5b8] sm:$0xff]
    %v2848 = vld [vmem:[#allocation3 + $0x5c0] sm:$0xff]
    %v2849 = vld [vmem:[#allocation3 + $0x5c8] sm:$0xff]
    %v2850 = vld [vmem:[#allocation3 + $0x5d0] sm:$0xff]
    %v2851 = vld [vmem:[#allocation3 + $0x5d8] sm:$0xff]
    %v2852 = vld [vmem:[#allocation3 + $0x5e0] sm:$0xff]
    %v2853 = vld [vmem:[#allocation3 + $0x5e8] sm:$0xff]
    %v2854 = vld [vmem:[#allocation3 + $0x5f0] sm:$0xff]
    %v2855 = vld [vmem:[#allocation3 + $0x5f8] sm:$0xff]
    %v2856 = vld [vmem:[#allocation3 + $0x600] sm:$0xff]
    %v2857 = vld [vmem:[#allocation3 + $0x608] sm:$0xff]
    %v2858 = vld [vmem:[#allocation3 + $0x610] sm:$0xff]
    %v2859 = vld [vmem:[#allocation3 + $0x618] sm:$0xff]
    %v2860 = vld [vmem:[#allocation3 + $0x620] sm:$0xff]
    %v2861 = vld [vmem:[#allocation3 + $0x628] sm:$0xff]
    %v2862 = vld [vmem:[#allocation3 + $0x630] sm:$0xff]
    %v2863 = vld [vmem:[#allocation3 + $0x638] sm:$0xff]
    %v2864 = vld [vmem:[#allocation3 + $0x640] sm:$0xff]
    %v2865 = vld [vmem:[#allocation3 + $0x648] sm:$0xff]
    %v2866 = vld [vmem:[#allocation3 + $0x650] sm:$0xff]
    %v2867 = vld [vmem:[#allocation3 + $0x658] sm:$0xff]
    %v2868 = vld [vmem:[#allocation3 + $0x660] sm:$0xff]
    %v2869 = vld [vmem:[#allocation3 + $0x668] sm:$0xff]
    %v2870 = vld [vmem:[#allocation3 + $0x670] sm:$0xff]
    %v2871 = vld [vmem:[#allocation3 + $0x678] sm:$0xff]
    %v2872 = vld [vmem:[#allocation3 + $0x680] sm:$0xff]
    %v2873 = vld [vmem:[#allocation3 + $0x688] sm:$0xff]
    %v2874 = vld [vmem:[#allocation3 + $0x690] sm:$0xff]
    %v2875 = vld [vmem:[#allocation3 + $0x698] sm:$0xff]
    %v2876 = vld [vmem:[#allocation3 + $0x6a0] sm:$0xff]
    %v2877 = vld [vmem:[#allocation3 + $0x6a8] sm:$0xff]
    %v2878 = vld [vmem:[#allocation3 + $0x6b0] sm:$0xff]
    %v2879 = vld [vmem:[#allocation3 + $0x6b8] sm:$0xff]
    %v2880 = vld [vmem:[#allocation3 + $0x6c0] sm:$0xff]
    %v2881 = vld [vmem:[#allocation3 + $0x6c8] sm:$0xff]
    %v2882 = vld [vmem:[#allocation3 + $0x6d0] sm:$0xff]
    %v2883 = vld [vmem:[#allocation3 + $0x6d8] sm:$0xff]
    %v2884 = vld [vmem:[#allocation3 + $0x6e0] sm:$0xff]
    %v2885 = vld [vmem:[#allocation3 + $0x6e8] sm:$0xff]
    %v2886 = vld [vmem:[#allocation3 + $0x6f0] sm:$0xff]
    %v2887 = vld [vmem:[#allocation3 + $0x6f8] sm:$0xff]
    %v2888 = vld [vmem:[#allocation3 + $0x700] sm:$0xff]
    %v2889 = vld [vmem:[#allocation3 + $0x708] sm:$0xff]
    %v2890 = vld [vmem:[#allocation3 + $0x710] sm:$0xff]
    %v2891 = vld [vmem:[#allocation3 + $0x718] sm:$0xff]
    %v2892 = vld [vmem:[#allocation3 + $0x720] sm:$0xff]
    %v2893 = vld [vmem:[#allocation3 + $0x728] sm:$0xff]
    %v2894 = vld [vmem:[#allocation3 + $0x730] sm:$0xff]
    %v2895 = vld [vmem:[#allocation3 + $0x738] sm:$0xff]
    %v2896 = vld [vmem:[#allocation3 + $0x740] sm:$0xff]
    %v2897 = vld [vmem:[#allocation3 + $0x748] sm:$0xff]
    %v2898 = vld [vmem:[#allocation3 + $0x750] sm:$0xff]
    %v2899 = vld [vmem:[#allocation3 + $0x758] sm:$0xff]
    %v2900 = vld [vmem:[#allocation3 + $0x760] sm:$0xff]
    %v2901 = vld [vmem:[#allocation3 + $0x768] sm:$0xff]
    %v2902 = vld [vmem:[#allocation3 + $0x770] sm:$0xff]
    %v2903 = vld [vmem:[#allocation3 + $0x778] sm:$0xff]
    %v2904 = vld [vmem:[#allocation3 + $0x780] sm:$0xff]
    %v2905 = vld [vmem:[#allocation3 + $0x788] sm:$0xff]
    %v2906 = vld [vmem:[#allocation3 + $0x790] sm:$0xff]
    %v2907 = vld [vmem:[#allocation3 + $0x798] sm:$0xff]
    %v2908 = vld [vmem:[#allocation3 + $0x7a0] sm:$0xff]
    %v2909 = vld [vmem:[#allocation3 + $0x7a8] sm:$0xff]
    %v2910 = vld [vmem:[#allocation3 + $0x7b0] sm:$0xff]
    %v2911 = vld [vmem:[#allocation3 + $0x7b8] sm:$0xff]
    %v2912 = vld [vmem:[#allocation3 + $0x7c0] sm:$0xff]
    %v2913 = vld [vmem:[#allocation3 + $0x7c8] sm:$0xff]
    %v2914 = vld [vmem:[#allocation3 + $0x7d0] sm:$0xff]
    %v2915 = vld [vmem:[#allocation3 + $0x7d8] sm:$0xff]
    %v2916 = vld [vmem:[#allocation3 + $0x7e0] sm:$0xff]
    %v2917 = vld [vmem:[#allocation3 + $0x7e8] sm:$0xff]
    %v2918 = vld [vmem:[#allocation3 + $0x7f0] sm:$0xff]
    %v2919 = vld [vmem:[#allocation3 + $0x7f8] sm:$0xff]
    %s2920 = scalar_lea.vmem [#allocation12], 1
    %v2921 = vld [vmem:[%s2920] ss:$8 sm:$0xf]
    %v2923 = vlaneseq
    %v2924 = vshrl.u32 %v2923, 7
    %v2925 = vsub.s32 0, %v2924
    %v2926 = vrot.slane %v2921, %v2925
    %v2927 = vlaneseq
    %v2928 = vshrl.u32 %v2927, 7
    %v2929 = vsub.s32 1, %v2928
    %v2930 = vrot.slane %v2921, %v2929
    %v2931 = vlaneseq
    %v2932 = vshrl.u32 %v2931, 7
    %v2933 = vsub.s32 2, %v2932
    %v2934 = vrot.slane %v2921, %v2933
    %v2935 = vlaneseq
    %v2936 = vshrl.u32 %v2935, 7
    %v2937 = vsub.s32 3, %v2936
    %v2938 = vrot.slane %v2921, %v2937
    %2943 = vmatprep.subr.bf16.mxu0 %v2665
    %2944 = vmatpush1.bf16.msra.mxu0 %v2664
    %2945 = vmatprep.subr.bf16.mxu0 %v2669
    %2946 = vmatpush1.bf16.msra.mxu0 %v2668
    %2947 = vmatprep.subr.bf16.mxu0 %v2673
    %2948 = vmatpush1.bf16.msra.mxu0 %v2672
    %2949 = vmatprep.subr.bf16.mxu0 %v2677
    %2950 = vmatpush1.bf16.msra.mxu0 %v2676
    %2951 = vmatprep.subr.bf16.mxu0 %v2681
    %2952 = vmatpush1.bf16.msra.mxu0 %v2680
    %2953 = vmatprep.subr.bf16.mxu0 %v2685
    %2954 = vmatpush1.bf16.msra.mxu0 %v2684
    %2955 = vmatprep.subr.bf16.mxu0 %v2689
    %2956 = vmatpush1.bf16.msra.mxu0 %v2688
    %2957 = vmatprep.subr.bf16.mxu0 %v2693
    %2958 = vmatpush1.bf16.msra.mxu0 %v2692
    %2959 = vmatprep.subr.bf16.mxu0 %v2697
    %2960 = vmatpush1.bf16.msra.mxu0 %v2696
    %2961 = vmatprep.subr.bf16.mxu0 %v2701
    %2962 = vmatpush1.bf16.msra.mxu0 %v2700
    %2963 = vmatprep.subr.bf16.mxu0 %v2705
    %2964 = vmatpush1.bf16.msra.mxu0 %v2704
    %2965 = vmatprep.subr.bf16.mxu0 %v2709
    %2966 = vmatpush1.bf16.msra.mxu0 %v2708
    %2967 = vmatprep.subr.bf16.mxu0 %v2713
    %2968 = vmatpush1.bf16.msra.mxu0 %v2712
    %2969 = vmatprep.subr.bf16.mxu0 %v2717
    %2970 = vmatpush1.bf16.msra.mxu0 %v2716
    %2971 = vmatprep.subr.bf16.mxu0 %v2721
    %2972 = vmatpush1.bf16.msra.mxu0 %v2720
    %2973 = vmatprep.subr.bf16.mxu0 %v2725
    %2974 = vmatpush1.bf16.msra.mxu0 %v2724
    %2975 = vmatprep.mubr.bf16.mxu0 %v2653
    %2976 = vmatmul.mubr.bf16.gmra.mrb[0].mxu0 %v2652
    %v2977 = vpop.f32.mrb[0].mxu0
    %v2978 = vadd.f32 %v2926, %v2977
    %v2979 = vpop.f32.mrb[0].mxu0
    %v2980 = vadd.f32 %v2930, %v2979
    %v2981 = vpop.f32.mrb[0].mxu0
    %v2982 = vpop.f32.mrb[0].mxu0
    %2983 = vdwg.mxu0
    %2984 = vmatprep.subr.bf16.mxu0 %v2729
    %2985 = vmatpush1.bf16.msra.mxu0 %v2728
    %2986 = vmatprep.subr.bf16.mxu0 %v2733
    %2987 = vmatpush1.bf16.msra.mxu0 %v2732
    %2988 = vmatprep.subr.bf16.mxu0 %v2737
    %2989 = vmatpush1.bf16.msra.mxu0 %v2736
    %2990 = vmatprep.subr.bf16.mxu0 %v2741
    %2991 = vmatpush1.bf16.msra.mxu0 %v2740
    %2992 = vmatprep.subr.bf16.mxu0 %v2745
    %2993 = vmatpush1.bf16.msra.mxu0 %v2744
    %2994 = vmatprep.subr.bf16.mxu0 %v2749
    %2995 = vmatpush1.bf16.msra.mxu0 %v2748
    %2996 = vmatprep.subr.bf16.mxu0 %v2753
    %2997 = vmatpush1.bf16.msra.mxu0 %v2752
    %2998 = vmatprep.subr.bf16.mxu0 %v2757
    %2999 = vmatpush1.bf16.msra.mxu0 %v2756
    %3000 = vmatprep.subr.bf16.mxu0 %v2761
    %3001 = vmatpush1.bf16.msra.mxu0 %v2760
    %3002 = vmatprep.subr.bf16.mxu0 %v2765
    %3003 = vmatpush1.bf16.msra.mxu0 %v2764
    %3004 = vmatprep.subr.bf16.mxu0 %v2769
    %3005 = vmatpush1.bf16.msra.mxu0 %v2768
    %3006 = vmatprep.subr.bf16.mxu0 %v2773
    %3007 = vmatpush1.bf16.msra.mxu0 %v2772
    %3008 = vmatprep.subr.bf16.mxu0 %v2777
    %3009 = vmatpush1.bf16.msra.mxu0 %v2776
    %3010 = vmatprep.subr.bf16.mxu0 %v2781
    %3011 = vmatpush1.bf16.msra.mxu0 %v2780
    %3012 = vmatprep.subr.bf16.mxu0 %v2785
    %3013 = vmatpush1.bf16.msra.mxu0 %v2784
    %3014 = vmatprep.subr.bf16.mxu0 %v2789
    %3015 = vmatpush1.bf16.msra.mxu0 %v2788
    %3016 = vmatprep.mubr.bf16.mxu0 %v2655
    %3017 = vmatmul.mubr.bf16.gmra.mrb[0].mxu0 %v2654
    %v3018 = vpop.f32.mrb[0].mxu0
    %v3019 = vadd.f32 %v2978, %v3018
    %v3020 = vpop.f32.mrb[0].mxu0
    %v3021 = vadd.f32 %v2980, %v3020
    %v3022 = vpop.f32.mrb[0].mxu0
    %v3023 = vpop.f32.mrb[0].mxu0
    %3024 = vdwg.mxu0
    %3025 = vmatprep.subr.bf16.mxu0 %v2793
    %3026 = vmatpush1.bf16.msra.mxu0 %v2792
    %3027 = vmatprep.subr.bf16.mxu0 %v2797
    %3028 = vmatpush1.bf16.msra.mxu0 %v2796
    %3029 = vmatprep.subr.bf16.mxu0 %v2801
    %3030 = vmatpush1.bf16.msra.mxu0 %v2800
    %3031 = vmatprep.subr.bf16.mxu0 %v2805
    %3032 = vmatpush1.bf16.msra.mxu0 %v2804
    %3033 = vmatprep.subr.bf16.mxu0 %v2809
    %3034 = vmatpush1.bf16.msra.mxu0 %v2808
    %3035 = vmatprep.subr.bf16.mxu0 %v2813
    %3036 = vmatpush1.bf16.msra.mxu0 %v2812
    %3037 = vmatprep.subr.bf16.mxu0 %v2817
    %3038 = vmatpush1.bf16.msra.mxu0 %v2816
    %3039 = vmatprep.subr.bf16.mxu0 %v2821
    %3040 = vmatpush1.bf16.msra.mxu0 %v2820
    %3041 = vmatprep.subr.bf16.mxu0 %v2825
    %3042 = vmatpush1.bf16.msra.mxu0 %v2824
    %3043 = vmatprep.subr.bf16.mxu0 %v2829
    %3044 = vmatpush1.bf16.msra.mxu0 %v2828
    %3045 = vmatprep.subr.bf16.mxu0 %v2833
    %3046 = vmatpush1.bf16.msra.mxu0 %v2832
    %3047 = vmatprep.subr.bf16.mxu0 %v2837
    %3048 = vmatpush1.bf16.msra.mxu0 %v2836
    %3049 = vmatprep.subr.bf16.mxu0 %v2841
    %3050 = vmatpush1.bf16.msra.mxu0 %v2840
    %3051 = vmatprep.subr.bf16.mxu0 %v2845
    %3052 = vmatpush1.bf16.msra.mxu0 %v2844
    %3053 = vmatprep.subr.bf16.mxu0 %v2849
    %3054 = vmatpush1.bf16.msra.mxu0 %v2848
    %3055 = vmatprep.subr.bf16.mxu0 %v2853
    %3056 = vmatpush1.bf16.msra.mxu0 %v2852
    %3057 = vmatprep.mubr.bf16.mxu0 %v2657
    %3058 = vmatmul.mubr.bf16.gmra.mrb[0].mxu0 %v2656
    %v3059 = vpop.f32.mrb[0].mxu0
    %v3060 = vadd.f32 %v3019, %v3059
    %v3061 = vpop.f32.mrb[0].mxu0
    %v3062 = vadd.f32 %v3021, %v3061
    %v3063 = vpop.f32.mrb[0].mxu0
    %v3064 = vpop.f32.mrb[0].mxu0
    %3065 = vdwg.mxu0
    %3066 = vmatprep.subr.bf16.mxu0 %v2857
    %3067 = vmatpush1.bf16.msra.mxu0 %v2856
    %3068 = vmatprep.subr.bf16.mxu0 %v2861
    %3069 = vmatpush1.bf16.msra.mxu0 %v2860
    %3070 = vmatprep.subr.bf16.mxu0 %v2865
    %3071 = vmatpush1.bf16.msra.mxu0 %v2864
    %3072 = vmatprep.subr.bf16.mxu0 %v2869
    %3073 = vmatpush1.bf16.msra.mxu0 %v2868
    %3074 = vmatprep.subr.bf16.mxu0 %v2873
    %3075 = vmatpush1.bf16.msra.mxu0 %v2872
    %3076 = vmatprep.subr.bf16.mxu0 %v2877
    %3077 = vmatpush1.bf16.msra.mxu0 %v2876
    %3078 = vmatprep.subr.bf16.mxu0 %v2881
    %3079 = vmatpush1.bf16.msra.mxu0 %v2880
    %3080 = vmatprep.subr.bf16.mxu0 %v2885
    %3081 = vmatpush1.bf16.msra.mxu0 %v2884
    %3082 = vmatprep.subr.bf16.mxu0 %v2889
    %3083 = vmatpush1.bf16.msra.mxu0 %v2888
    %3084 = vmatprep.subr.bf16.mxu0 %v2893
    %3085 = vmatpush1.bf16.msra.mxu0 %v2892
    %3086 = vmatprep.subr.bf16.mxu0 %v2897
    %3087 = vmatpush1.bf16.msra.mxu0 %v2896
    %3088 = vmatprep.subr.bf16.mxu0 %v2901
    %3089 = vmatpush1.bf16.msra.mxu0 %v2900
    %3090 = vmatprep.subr.bf16.mxu0 %v2905
    %3091 = vmatpush1.bf16.msra.mxu0 %v2904
    %3092 = vmatprep.subr.bf16.mxu0 %v2909
    %3093 = vmatpush1.bf16.msra.mxu0 %v2908
    %3094 = vmatprep.subr.bf16.mxu0 %v2913
    %3095 = vmatpush1.bf16.msra.mxu0 %v2912
    %3096 = vmatprep.subr.bf16.mxu0 %v2917
    %3097 = vmatpush1.bf16.msra.mxu0 %v2916
    %3098 = vmatprep.mubr.bf16.mxu0 %v2659
    %3099 = vmatmul.mubr.bf16.gmra.mrb[0].mxu0 %v2658
    %v3100 = vpop.f32.mrb[0].mxu0
    %v3101 = vadd.f32 %v3060, %v3100
    %v3102 = vpop.f32.mrb[0].mxu0
    %v3103 = vadd.f32 %v3062, %v3102
    %v3104 = vpop.f32.mrb[0].mxu0
    %v3105 = vpop.f32.mrb[0].mxu0
    %3106 = vdwg.mxu0
    %3107 = vmatprep.subr.bf16.mxu0 %v2667
    %3108 = vmatpush1.bf16.msra.mxu0 %v2666
    %3109 = vmatprep.subr.bf16.mxu0 %v2671
    %3110 = vmatpush1.bf16.msra.mxu0 %v2670
    %3111 = vmatprep.subr.bf16.mxu0 %v2675
    %3112 = vmatpush1.bf16.msra.mxu0 %v2674
    %3113 = vmatprep.subr.bf16.mxu0 %v2679
    %3114 = vmatpush1.bf16.msra.mxu0 %v2678
    %3115 = vmatprep.subr.bf16.mxu0 %v2683
    %3116 = vmatpush1.bf16.msra.mxu0 %v2682
    %3117 = vmatprep.subr.bf16.mxu0 %v2687
    %3118 = vmatpush1.bf16.msra.mxu0 %v2686
    %3119 = vmatprep.subr.bf16.mxu0 %v2691
    %3120 = vmatpush1.bf16.msra.mxu0 %v2690
    %3121 = vmatprep.subr.bf16.mxu0 %v2695
    %3122 = vmatpush1.bf16.msra.mxu0 %v2694
    %3123 = vmatprep.subr.bf16.mxu0 %v2699
    %3124 = vmatpush1.bf16.msra.mxu0 %v2698
    %3125 = vmatprep.subr.bf16.mxu0 %v2703
    %3126 = vmatpush1.bf16.msra.mxu0 %v2702
    %3127 = vmatprep.subr.bf16.mxu0 %v2707
    %3128 = vmatpush1.bf16.msra.mxu0 %v2706
    %3129 = vmatprep.subr.bf16.mxu0 %v2711
    %3130 = vmatpush1.bf16.msra.mxu0 %v2710
    %3131 = vmatprep.subr.bf16.mxu0 %v2715
    %3132 = vmatpush1.bf16.msra.mxu0 %v2714
    %3133 = vmatprep.subr.bf16.mxu0 %v2719
    %3134 = vmatpush1.bf16.msra.mxu0 %v2718
    %3135 = vmatprep.subr.bf16.mxu0 %v2723
    %3136 = vmatpush1.bf16.msra.mxu0 %v2722
    %3137 = vmatprep.subr.bf16.mxu0 %v2727
    %3138 = vmatpush1.bf16.msra.mxu0 %v2726
    %3139 = vmatprep.mubr.bf16.mxu0 %v2653
    %3140 = vmatmul.mubr.bf16.gmra.mrb[0].mxu0 %v2652
    %v3141 = vpop.f32.mrb[0].mxu0
    %v3142 = vadd.f32 %v2934, %v3141
    %v3143 = vpop.f32.mrb[0].mxu0
    %v3144 = vadd.f32 %v2938, %v3143
    %v3145 = vpop.f32.mrb[0].mxu0
    %v3146 = vpop.f32.mrb[0].mxu0
    %3147 = vdwg.mxu0
    %3148 = vmatprep.subr.bf16.mxu0 %v2731
    %3149 = vmatpush1.bf16.msra.mxu0 %v2730
    %3150 = vmatprep.subr.bf16.mxu0 %v2735
    %3151 = vmatpush1.bf16.msra.mxu0 %v2734
    %3152 = vmatprep.subr.bf16.mxu0 %v2739
    %3153 = vmatpush1.bf16.msra.mxu0 %v2738
    %3154 = vmatprep.subr.bf16.mxu0 %v2743
    %3155 = vmatpush1.bf16.msra.mxu0 %v2742
    %3156 = vmatprep.subr.bf16.mxu0 %v2747
    %3157 = vmatpush1.bf16.msra.mxu0 %v2746
    %3158 = vmatprep.subr.bf16.mxu0 %v2751
    %3159 = vmatpush1.bf16.msra.mxu0 %v2750
    %3160 = vmatprep.subr.bf16.mxu0 %v2755
    %3161 = vmatpush1.bf16.msra.mxu0 %v2754
    %3162 = vmatprep.subr.bf16.mxu0 %v2759
    %3163 = vmatpush1.bf16.msra.mxu0 %v2758
    %3164 = vmatprep.subr.bf16.mxu0 %v2763
    %3165 = vmatpush1.bf16.msra.mxu0 %v2762
    %3166 = vmatprep.subr.bf16.mxu0 %v2767
    %3167 = vmatpush1.bf16.msra.mxu0 %v2766
    %3168 = vmatprep.subr.bf16.mxu0 %v2771
    %3169 = vmatpush1.bf16.msra.mxu0 %v2770
    %3170 = vmatprep.subr.bf16.mxu0 %v2775
    %3171 = vmatpush1.bf16.msra.mxu0 %v2774
    %3172 = vmatprep.subr.bf16.mxu0 %v2779
    %3173 = vmatpush1.bf16.msra.mxu0 %v2778
    %3174 = vmatprep.subr.bf16.mxu0 %v2783
    %3175 = vmatpush1.bf16.msra.mxu0 %v2782
    %3176 = vmatprep.subr.bf16.mxu0 %v2787
    %3177 = vmatpush1.bf16.msra.mxu0 %v2786
    %3178 = vmatprep.subr.bf16.mxu0 %v2791
    %3179 = vmatpush1.bf16.msra.mxu0 %v2790
    %3180 = vmatprep.mubr.bf16.mxu0 %v2655
    %3181 = vmatmul.mubr.bf16.gmra.mrb[0].mxu0 %v2654
    %v3182 = vpop.f32.mrb[0].mxu0
    %v3183 = vadd.f32 %v3142, %v3182
    %v3184 = vpop.f32.mrb[0].mxu0
    %v3185 = vadd.f32 %v3144, %v3184
    %v3186 = vpop.f32.mrb[0].mxu0
    %v3187 = vpop.f32.mrb[0].mxu0
    %3188 = vdwg.mxu0
    %3189 = vmatprep.subr.bf16.mxu0 %v2795
    %3190 = vmatpush1.bf16.msra.mxu0 %v2794
    %3191 = vmatprep.subr.bf16.mxu0 %v2799
    %3192 = vmatpush1.bf16.msra.mxu0 %v2798
    %3193 = vmatprep.subr.bf16.mxu0 %v2803
    %3194 = vmatpush1.bf16.msra.mxu0 %v2802
    %3195 = vmatprep.subr.bf16.mxu0 %v2807
    %3196 = vmatpush1.bf16.msra.mxu0 %v2806
    %3197 = vmatprep.subr.bf16.mxu0 %v2811
    %3198 = vmatpush1.bf16.msra.mxu0 %v2810
    %3199 = vmatprep.subr.bf16.mxu0 %v2815
    %3200 = vmatpush1.bf16.msra.mxu0 %v2814
    %3201 = vmatprep.subr.bf16.mxu0 %v2819
    %3202 = vmatpush1.bf16.msra.mxu0 %v2818
    %3203 = vmatprep.subr.bf16.mxu0 %v2823
    %3204 = vmatpush1.bf16.msra.mxu0 %v2822
    %3205 = vmatprep.subr.bf16.mxu0 %v2827
    %3206 = vmatpush1.bf16.msra.mxu0 %v2826
    %3207 = vmatprep.subr.bf16.mxu0 %v2831
    %3208 = vmatpush1.bf16.msra.mxu0 %v2830
    %3209 = vmatprep.subr.bf16.mxu0 %v2835
    %3210 = vmatpush1.bf16.msra.mxu0 %v2834
    %3211 = vmatprep.subr.bf16.mxu0 %v2839
    %3212 = vmatpush1.bf16.msra.mxu0 %v2838
    %3213 = vmatprep.subr.bf16.mxu0 %v2843
    %3214 = vmatpush1.bf16.msra.mxu0 %v2842
    %3215 = vmatprep.subr.bf16.mxu0 %v2847
    %3216 = vmatpush1.bf16.msra.mxu0 %v2846
    %3217 = vmatprep.subr.bf16.mxu0 %v2851
    %3218 = vmatpush1.bf16.msra.mxu0 %v2850
    %3219 = vmatprep.subr.bf16.mxu0 %v2855
    %3220 = vmatpush1.bf16.msra.mxu0 %v2854
    %3221 = vmatprep.mubr.bf16.mxu0 %v2657
    %3222 = vmatmul.mubr.bf16.gmra.mrb[0].mxu0 %v2656
    %v3223 = vpop.f32.mrb[0].mxu0
    %v3224 = vadd.f32 %v3183, %v3223
    %v3225 = vpop.f32.mrb[0].mxu0
    %v3226 = vadd.f32 %v3185, %v3225
    %v3227 = vpop.f32.mrb[0].mxu0
    %v3228 = vpop.f32.mrb[0].mxu0
    %3229 = vdwg.mxu0
    %3230 = vmatprep.subr.bf16.mxu0 %v2859
    %3231 = vmatpush1.bf16.msra.mxu0 %v2858
    %3232 = vmatprep.subr.bf16.mxu0 %v2863
    %3233 = vmatpush1.bf16.msra.mxu0 %v2862
    %3234 = vmatprep.subr.bf16.mxu0 %v2867
    %3235 = vmatpush1.bf16.msra.mxu0 %v2866
    %3236 = vmatprep.subr.bf16.mxu0 %v2871
    %3237 = vmatpush1.bf16.msra.mxu0 %v2870
    %3238 = vmatprep.subr.bf16.mxu0 %v2875
    %3239 = vmatpush1.bf16.msra.mxu0 %v2874
    %3240 = vmatprep.subr.bf16.mxu0 %v2879
    %3241 = vmatpush1.bf16.msra.mxu0 %v2878
    %3242 = vmatprep.subr.bf16.mxu0 %v2883
    %3243 = vmatpush1.bf16.msra.mxu0 %v2882
    %3244 = vmatprep.subr.bf16.mxu0 %v2887
    %3245 = vmatpush1.bf16.msra.mxu0 %v2886
    %3246 = vmatprep.subr.bf16.mxu0 %v2891
    %3247 = vmatpush1.bf16.msra.mxu0 %v2890
    %3248 = vmatprep.subr.bf16.mxu0 %v2895
    %3249 = vmatpush1.bf16.msra.mxu0 %v2894
    %3250 = vmatprep.subr.bf16.mxu0 %v2899
    %3251 = vmatpush1.bf16.msra.mxu0 %v2898
    %3252 = vmatprep.subr.bf16.mxu0 %v2903
    %3253 = vmatpush1.bf16.msra.mxu0 %v2902
    %3254 = vmatprep.subr.bf16.mxu0 %v2907
    %3255 = vmatpush1.bf16.msra.mxu0 %v2906
    %3256 = vmatprep.subr.bf16.mxu0 %v2911
    %3257 = vmatpush1.bf16.msra.mxu0 %v2910
    %3258 = vmatprep.subr.bf16.mxu0 %v2915
    %3259 = vmatpush1.bf16.msra.mxu0 %v2914
    %3260 = vmatprep.subr.bf16.mxu0 %v2919
    %3261 = vmatpush1.bf16.msra.mxu0 %v2918
    %3262 = vmatprep.mubr.bf16.mxu0 %v2659
    %3263 = vmatmul.mubr.bf16.gmra.mrb[0].mxu0 %v2658
    %v3264 = vpop.f32.mrb[0].mxu0
    %v3265 = vadd.f32 %v3224, %v3264
    %v3266 = vpop.f32.mrb[0].mxu0
    %v3267 = vadd.f32 %v3226, %v3266
    %v3268 = vpop.f32.mrb[0].mxu0
    %v3269 = vpop.f32.mrb[0].mxu0
    %3270 = vdwg.mxu0
    %v3271 = vmul.f32 %v3101, 0.5
    %v3272 = vmul.f32 %v3103, 0.5
    %v3273 = vmul.f32 %v3265, 0.5
    %v3274 = vmul.f32 %v3267, 0.5
    %v3275 = vmul.f32 %v3101, 0.70710677
    %v3276 = vmul.f32 %v3103, 0.70710677
    %v3277 = vmul.f32 %v3265, 0.70710677
    %v3278 = vmul.f32 %v3267, 0.70710677
    %v3279 = verf.f32.pop %v3275
    %v3280 = verf.f32.pop %v3276
    %v3281 = verf.f32.pop %v3277
    %v3282 = verf.f32.pop %v3278
    %v3283 = vadd.f32 %v3279, 1.0
    %v3284 = vadd.f32 %v3280, 1.0
    %v3285 = vadd.f32 %v3281, 1.0
    %v3286 = vadd.f32 %v3282, 1.0
    %v3287 = vmul.f32 %v3271, %v3283
    %v3288 = vmul.f32 %v3272, %v3284
    %v3289 = vmul.f32 %v3273, %v3285
    %v3290 = vmul.f32 %v3274, %v3286
    %v3291 = vpack.c.bf16 %v3287, %v3287
    %v3292 = vpack.c.bf16 %v3288, %v3288
    %v3293 = vpack.c.bf16 %v3289, %v3289
    %v3294 = vpack.c.bf16 %v3290, %v3290
    %s3295 = smul.u32 4, 64
    %s3296 = smul.u32 %s3295, 2
    %s3297 = sshll.u32 %s3296, 4
    %3298 = dma.done %s113, %s3297
    %v3299 = vld [vmem:[#allocation4] sm:$0xff]
    %v3300 = vld [vmem:[#allocation4 + $0x8] sm:$0xff]
    %v3301 = vld [vmem:[#allocation4 + $0x10] sm:$0xff]
    %v3302 = vld [vmem:[#allocation4 + $0x18] sm:$0xff]
    %v3303 = vld [vmem:[#allocation4 + $0x20] sm:$0xff]
    %v3304 = vld [vmem:[#allocation4 + $0x28] sm:$0xff]
    %v3305 = vld [vmem:[#allocation4 + $0x30] sm:$0xff]
    %v3306 = vld [vmem:[#allocation4 + $0x38] sm:$0xff]
    %v3307 = vld [vmem:[#allocation4 + $0x40] sm:$0xff]
    %v3308 = vld [vmem:[#allocation4 + $0x48] sm:$0xff]
    %v3309 = vld [vmem:[#allocation4 + $0x50] sm:$0xff]
    %v3310 = vld [vmem:[#allocation4 + $0x58] sm:$0xff]
    %v3311 = vld [vmem:[#allocation4 + $0x60] sm:$0xff]
    %v3312 = vld [vmem:[#allocation4 + $0x68] sm:$0xff]
    %v3313 = vld [vmem:[#allocation4 + $0x70] sm:$0xff]
    %v3314 = vld [vmem:[#allocation4 + $0x78] sm:$0xff]
    %v3315 = vld [vmem:[#allocation4 + $0x80] sm:$0xff]
    %v3316 = vld [vmem:[#allocation4 + $0x88] sm:$0xff]
    %v3317 = vld [vmem:[#allocation4 + $0x90] sm:$0xff]
    %v3318 = vld [vmem:[#allocation4 + $0x98] sm:$0xff]
    %v3319 = vld [vmem:[#allocation4 + $0xa0] sm:$0xff]
    %v3320 = vld [vmem:[#allocation4 + $0xa8] sm:$0xff]
    %v3321 = vld [vmem:[#allocation4 + $0xb0] sm:$0xff]
    %v3322 = vld [vmem:[#allocation4 + $0xb8] sm:$0xff]
    %v3323 = vld [vmem:[#allocation4 + $0xc0] sm:$0xff]
    %v3324 = vld [vmem:[#allocation4 + $0xc8] sm:$0xff]
    %v3325 = vld [vmem:[#allocation4 + $0xd0] sm:$0xff]
    %v3326 = vld [vmem:[#allocation4 + $0xd8] sm:$0xff]
    %v3327 = vld [vmem:[#allocation4 + $0xe0] sm:$0xff]
    %v3328 = vld [vmem:[#allocation4 + $0xe8] sm:$0xff]
    %v3329 = vld [vmem:[#allocation4 + $0xf0] sm:$0xff]
    %v3330 = vld [vmem:[#allocation4 + $0xf8] sm:$0xff]
    %v3331 = vld [vmem:[#allocation4 + $0x100] sm:$0xff]
    %v3332 = vld [vmem:[#allocation4 + $0x108] sm:$0xff]
    %v3333 = vld [vmem:[#allocation4 + $0x110] sm:$0xff]
    %v3334 = vld [vmem:[#allocation4 + $0x118] sm:$0xff]
    %v3335 = vld [vmem:[#allocation4 + $0x120] sm:$0xff]
    %v3336 = vld [vmem:[#allocation4 + $0x128] sm:$0xff]
    %v3337 = vld [vmem:[#allocation4 + $0x130] sm:$0xff]
    %v3338 = vld [vmem:[#allocation4 + $0x138] sm:$0xff]
    %v3339 = vld [vmem:[#allocation4 + $0x140] sm:$0xff]
    %v3340 = vld [vmem:[#allocation4 + $0x148] sm:$0xff]
    %v3341 = vld [vmem:[#allocation4 + $0x150] sm:$0xff]
    %v3342 = vld [vmem:[#allocation4 + $0x158] sm:$0xff]
    %v3343 = vld [vmem:[#allocation4 + $0x160] sm:$0xff]
    %v3344 = vld [vmem:[#allocation4 + $0x168] sm:$0xff]
    %v3345 = vld [vmem:[#allocation4 + $0x170] sm:$0xff]
    %v3346 = vld [vmem:[#allocation4 + $0x178] sm:$0xff]
    %v3347 = vld [vmem:[#allocation4 + $0x180] sm:$0xff]
    %v3348 = vld [vmem:[#allocation4 + $0x188] sm:$0xff]
    %v3349 = vld [vmem:[#allocation4 + $0x190] sm:$0xff]
    %v3350 = vld [vmem:[#allocation4 + $0x198] sm:$0xff]
    %v3351 = vld [vmem:[#allocation4 + $0x1a0] sm:$0xff]
    %v3352 = vld [vmem:[#allocation4 + $0x1a8] sm:$0xff]
    %v3353 = vld [vmem:[#allocation4 + $0x1b0] sm:$0xff]
    %v3354 = vld [vmem:[#allocation4 + $0x1b8] sm:$0xff]
    %v3355 = vld [vmem:[#allocation4 + $0x1c0] sm:$0xff]
    %v3356 = vld [vmem:[#allocation4 + $0x1c8] sm:$0xff]
    %v3357 = vld [vmem:[#allocation4 + $0x1d0] sm:$0xff]
    %v3358 = vld [vmem:[#allocation4 + $0x1d8] sm:$0xff]
    %v3359 = vld [vmem:[#allocation4 + $0x1e0] sm:$0xff]
    %v3360 = vld [vmem:[#allocation4 + $0x1e8] sm:$0xff]
    %v3361 = vld [vmem:[#allocation4 + $0x1f0] sm:$0xff]
    %v3362 = vld [vmem:[#allocation4 + $0x1f8] sm:$0xff]
    %s3363 = scalar_lea.vmem [#allocation12], 2
    %v3364 = vld [vmem:[%s3363] ss:$8 sm:$0x3]
    %v3366 = vlaneseq
    %v3367 = vshrl.u32 %v3366, 7
    %v3368 = vsub.s32 0, %v3367
    %v3369 = vrot.slane %v3364, %v3368
    %v3370 = vlaneseq
    %v3371 = vshrl.u32 %v3370, 7
    %v3372 = vsub.s32 1, %v3371
    %v3373 = vrot.slane %v3364, %v3372
    %3376 = vmatprep.subr.bf16.mxu0 %v3300
    %3377 = vmatpush1.bf16.msra.mxu0 %v3299
    %3378 = vmatprep.subr.bf16.mxu0 %v3302
    %3379 = vmatpush1.bf16.msra.mxu0 %v3301
    %3380 = vmatprep.subr.bf16.mxu0 %v3304
    %3381 = vmatpush1.bf16.msra.mxu0 %v3303
    %3382 = vmatprep.subr.bf16.mxu0 %v3306
    %3383 = vmatpush1.bf16.msra.mxu0 %v3305
    %3384 = vmatprep.subr.bf16.mxu0 %v3308
    %3385 = vmatpush1.bf16.msra.mxu0 %v3307
    %3386 = vmatprep.subr.bf16.mxu0 %v3310
    %3387 = vmatpush1.bf16.msra.mxu0 %v3309
    %3388 = vmatprep.subr.bf16.mxu0 %v3312
    %3389 = vmatpush1.bf16.msra.mxu0 %v3311
    %3390 = vmatprep.subr.bf16.mxu0 %v3314
    %3391 = vmatpush1.bf16.msra.mxu0 %v3313
    %3392 = vmatprep.subr.bf16.mxu0 %v3316
    %3393 = vmatpush1.bf16.msra.mxu0 %v3315
    %3394 = vmatprep.subr.bf16.mxu0 %v3318
    %3395 = vmatpush1.bf16.msra.mxu0 %v3317
    %3396 = vmatprep.subr.bf16.mxu0 %v3320
    %3397 = vmatpush1.bf16.msra.mxu0 %v3319
    %3398 = vmatprep.subr.bf16.mxu0 %v3322
    %3399 = vmatpush1.bf16.msra.mxu0 %v3321
    %3400 = vmatprep.subr.bf16.mxu0 %v3324
    %3401 = vmatpush1.bf16.msra.mxu0 %v3323
    %3402 = vmatprep.subr.bf16.mxu0 %v3326
    %3403 = vmatpush1.bf16.msra.mxu0 %v3325
    %3404 = vmatprep.subr.bf16.mxu0 %v3328
    %3405 = vmatpush1.bf16.msra.mxu0 %v3327
    %3406 = vmatprep.subr.bf16.mxu0 %v3330
    %3407 = vmatpush1.bf16.msra.mxu0 %v3329
    %3408 = vmatprep.mubr.bf16.mxu0 %v3292
    %3409 = vmatmul.mubr.bf16.gmra.mrb[0].mxu0 %v3291
    %v3410 = vpop.f32.mrb[0].mxu0
    %v3411 = vadd.f32 %v3369, %v3410
    %v3412 = vpop.f32.mrb[0].mxu0
    %v3413 = vadd.f32 %v3373, %v3412
    %v3414 = vpop.f32.mrb[0].mxu0
    %v3415 = vpop.f32.mrb[0].mxu0
    %3416 = vdwg.mxu0
    %3417 = vmatprep.subr.bf16.mxu0 %v3332
    %3418 = vmatpush1.bf16.msra.mxu0 %v3331
    %3419 = vmatprep.subr.bf16.mxu0 %v3334
    %3420 = vmatpush1.bf16.msra.mxu0 %v3333
    %3421 = vmatprep.subr.bf16.mxu0 %v3336
    %3422 = vmatpush1.bf16.msra.mxu0 %v3335
    %3423 = vmatprep.subr.bf16.mxu0 %v3338
    %3424 = vmatpush1.bf16.msra.mxu0 %v3337
    %3425 = vmatprep.subr.bf16.mxu0 %v3340
    %3426 = vmatpush1.bf16.msra.mxu0 %v3339
    %3427 = vmatprep.subr.bf16.mxu0 %v3342
    %3428 = vmatpush1.bf16.msra.mxu0 %v3341
    %3429 = vmatprep.subr.bf16.mxu0 %v3344
    %3430 = vmatpush1.bf16.msra.mxu0 %v3343
    %3431 = vmatprep.subr.bf16.mxu0 %v3346
    %3432 = vmatpush1.bf16.msra.mxu0 %v3345
    %3433 = vmatprep.subr.bf16.mxu0 %v3348
    %3434 = vmatpush1.bf16.msra.mxu0 %v3347
    %3435 = vmatprep.subr.bf16.mxu0 %v3350
    %3436 = vmatpush1.bf16.msra.mxu0 %v3349
    %3437 = vmatprep.subr.bf16.mxu0 %v3352
    %3438 = vmatpush1.bf16.msra.mxu0 %v3351
    %3439 = vmatprep.subr.bf16.mxu0 %v3354
    %3440 = vmatpush1.bf16.msra.mxu0 %v3353
    %3441 = vmatprep.subr.bf16.mxu0 %v3356
    %3442 = vmatpush1.bf16.msra.mxu0 %v3355
    %3443 = vmatprep.subr.bf16.mxu0 %v3358
    %3444 = vmatpush1.bf16.msra.mxu0 %v3357
    %3445 = vmatprep.subr.bf16.mxu0 %v3360
    %3446 = vmatpush1.bf16.msra.mxu0 %v3359
    %3447 = vmatprep.subr.bf16.mxu0 %v3362
    %3448 = vmatpush1.bf16.msra.mxu0 %v3361
    %3449 = vmatprep.mubr.bf16.mxu0 %v3294
    %3450 = vmatmul.mubr.bf16.gmra.mrb[0].mxu0 %v3293
    %v3451 = vpop.f32.mrb[0].mxu0
    %v3452 = vadd.f32 %v3411, %v3451
    %v3453 = vpop.f32.mrb[0].mxu0
    %v3454 = vadd.f32 %v3413, %v3453
    %v3455 = vpop.f32.mrb[0].mxu0
    %v3456 = vpop.f32.mrb[0].mxu0
    %3457 = vdwg.mxu0
    %v3458 = vmul.f32 %v3452, 0.5
    %v3459 = vmul.f32 %v3454, 0.5
    %v3460 = vmul.f32 %v3452, 0.70710677
    %v3461 = vmul.f32 %v3454, 0.70710677
    %v3462 = verf.f32.pop %v3460
    %v3463 = verf.f32.pop %v3461
    %v3464 = vadd.f32 %v3462, 1.0
    %v3465 = vadd.f32 %v3463, 1.0
    %v3466 = vmul.f32 %v3458, %v3464
    %v3467 = vmul.f32 %v3459, %v3465
    %v3468 = vpack.c.bf16 %v3466, %v3466
    %v3469 = vpack.c.bf16 %v3467, %v3467
    %s3470 = smul.u32 4, 32
    %s3471 = smul.u32 %s3470, 1
    %s3472 = sshll.u32 %s3471, 4
    %3473 = dma.done %s148, %s3472
    %v3474 = vld [vmem:[#allocation5] sm:$0xff]
    %v3475 = vld [vmem:[#allocation5 + $0x8] sm:$0xff]
    %v3476 = vld [vmem:[#allocation5 + $0x10] sm:$0xff]
    %v3477 = vld [vmem:[#allocation5 + $0x18] sm:$0xff]
    %v3478 = vld [vmem:[#allocation5 + $0x20] sm:$0xff]
    %v3479 = vld [vmem:[#allocation5 + $0x28] sm:$0xff]
    %v3480 = vld [vmem:[#allocation5 + $0x30] sm:$0xff]
    %v3481 = vld [vmem:[#allocation5 + $0x38] sm:$0xff]
    %v3482 = vld [vmem:[#allocation5 + $0x40] sm:$0xff]
    %v3483 = vld [vmem:[#allocation5 + $0x48] sm:$0xff]
    %v3484 = vld [vmem:[#allocation5 + $0x50] sm:$0xff]
    %v3485 = vld [vmem:[#allocation5 + $0x58] sm:$0xff]
    %v3486 = vld [vmem:[#allocation5 + $0x60] sm:$0xff]
    %v3487 = vld [vmem:[#allocation5 + $0x68] sm:$0xff]
    %v3488 = vld [vmem:[#allocation5 + $0x70] sm:$0xff]
    %v3489 = vld [vmem:[#allocation5 + $0x78] sm:$0xff]
    %v3490 = vld [vmem:[#allocation12 + $0x3] ss:$0 sm:$0xff]
    %3491 = vmatprep.subr.bf16.mxu0 0
    %3492 = vmatpush1.bf16.msra.mxu0 %v3474
    %3493 = vmatprep.subr.bf16.mxu0 0
    %3494 = vmatpush1.bf16.msra.mxu0 %v3475
    %3495 = vmatprep.subr.bf16.mxu0 0
    %3496 = vmatpush1.bf16.msra.mxu0 %v3476
    %3497 = vmatprep.subr.bf16.mxu0 0
    %3498 = vmatpush1.bf16.msra.mxu0 %v3477
    %3499 = vmatprep.subr.bf16.mxu0 0
    %3500 = vmatpush1.bf16.msra.mxu0 %v3478
    %3501 = vmatprep.subr.bf16.mxu0 0
    %3502 = vmatpush1.bf16.msra.mxu0 %v3479
    %3503 = vmatprep.subr.bf16.mxu0 0
    %3504 = vmatpush1.bf16.msra.mxu0 %v3480
    %3505 = vmatprep.subr.bf16.mxu0 0
    %3506 = vmatpush1.bf16.msra.mxu0 %v3481
    %3507 = vmatprep.subr.bf16.mxu0 0
    %3508 = vmatpush1.bf16.msra.mxu0 %v3482
    %3509 = vmatprep.subr.bf16.mxu0 0
    %3510 = vmatpush1.bf16.msra.mxu0 %v3483
    %3511 = vmatprep.subr.bf16.mxu0 0
    %3512 = vmatpush1.bf16.msra.mxu0 %v3484
    %3513 = vmatprep.subr.bf16.mxu0 0
    %3514 = vmatpush1.bf16.msra.mxu0 %v3485
    %3515 = vmatprep.subr.bf16.mxu0 0
    %3516 = vmatpush1.bf16.msra.mxu0 %v3486
    %3517 = vmatprep.subr.bf16.mxu0 0
    %3518 = vmatpush1.bf16.msra.mxu0 %v3487
    %3519 = vmatprep.subr.bf16.mxu0 0
    %3520 = vmatpush1.bf16.msra.mxu0 %v3488
    %3521 = vmatprep.subr.bf16.mxu0 0
    %3522 = vmatpush1.bf16.msra.mxu0 %v3489
    %3523 = vmatprep.mubr.bf16.mxu0 %v3469
    %3524 = vmatmul.mubr.bf16.gmra.mrb[0].mxu0 %v3468
    %v3525 = vpop.f32.mrb[0].mxu0
    %v3526 = vadd.f32 %v3490, %v3525
    %v3527 = vpop.f32.mrb[0].mxu0
    %v3528 = vpop.f32.mrb[0].mxu0
    %v3529 = vpop.f32.mrb[0].mxu0
    %3530 = vdwg.mxu0
    %v3531 = vmul.f32 %v3526, 0.5
    %v3532 = vmul.f32 %v3526, 0.70710677
    %v3533 = verf.f32.pop %v3532
    %v3534 = vadd.f32 %v3533, 1.0
    %v3535 = vmul.f32 %v3531, %v3534
    %v3536 = vpack.c.bf16 %v3535, %v3535
    %s3537 = smul.u32 4, 16
    %s3538 = smul.u32 %s3537, 1
    %s3539 = sshll.u32 %s3538, 4
    %3540 = dma.done %s160, %s3539
    %v3541 = vld [vmem:[#allocation6] sm:$0xff]
    %v3542 = vld [vmem:[#allocation6 + $0x8] sm:$0xff]
    %v3543 = vld [vmem:[#allocation6 + $0x10] sm:$0xff]
    %v3544 = vld [vmem:[#allocation6 + $0x18] sm:$0xff]
    %v3545 = vld [vmem:[#allocation6 + $0x20] sm:$0xff]
    %v3546 = vld [vmem:[#allocation6 + $0x28] sm:$0xff]
    %v3547 = vld [vmem:[#allocation6 + $0x30] sm:$0xff]
    %v3548 = vld [vmem:[#allocation6 + $0x38] sm:$0xff]
    %v3549 = vld [vmem:[#allocation12 + $0x4] ss:$0 sm:$0xff]
    %3550 = vmatprep.subr.bf16.mxu0 0
    %3551 = vmatpush1.bf16.msra.mxu0 %v3541
    %3552 = vmatprep.subr.bf16.mxu0 0
    %3553 = vmatpush1.bf16.msra.mxu0 %v3542
    %3554 = vmatprep.subr.bf16.mxu0 0
    %3555 = vmatpush1.bf16.msra.mxu0 %v3543
    %3556 = vmatprep.subr.bf16.mxu0 0
    %3557 = vmatpush1.bf16.msra.mxu0 %v3544
    %3558 = vmatprep.subr.bf16.mxu0 0
    %3559 = vmatpush1.bf16.msra.mxu0 %v3545
    %3560 = vmatprep.subr.bf16.mxu0 0
    %3561 = vmatpush1.bf16.msra.mxu0 %v3546
    %3562 = vmatprep.subr.bf16.mxu0 0
    %3563 = vmatpush1.bf16.msra.mxu0 %v3547
    %3564 = vmatprep.subr.bf16.mxu0 0
    %3565 = vmatpush1.bf16.msra.mxu0 %v3548
    %3566 = vmatprep.subr.bf16.mxu0 0
    %3567 = vmatpush1.bf16.msra.mxu0 0
    %3568 = vmatprep.subr.bf16.mxu0 0
    %3569 = vmatpush1.bf16.msra.mxu0 0
    %3570 = vmatprep.subr.bf16.mxu0 0
    %3571 = vmatpush1.bf16.msra.mxu0 0
    %3572 = vmatprep.subr.bf16.mxu0 0
    %3573 = vmatpush1.bf16.msra.mxu0 0
    %3574 = vmatprep.subr.bf16.mxu0 0
    %3575 = vmatpush1.bf16.msra.mxu0 0
    %3576 = vmatprep.subr.bf16.mxu0 0
    %3577 = vmatpush1.bf16.msra.mxu0 0
    %3578 = vmatprep.subr.bf16.mxu0 0
    %3579 = vmatpush1.bf16.msra.mxu0 0
    %3580 = vmatprep.subr.bf16.mxu0 0
    %3581 = vmatpush1.bf16.msra.mxu0 0
    %3582 = vmatprep.mubr.bf16.mxu0 0
    %3583 = vmatmul.mubr.bf16.gmra.mrb[0].mxu0 %v3536
    %v3584 = vpop.f32.mrb[0].mxu0
    %v3585 = vadd.f32 %v3549, %v3584
    %v3586 = vpop.f32.mrb[0].mxu0
    %v3587 = vpop.f32.mrb[0].mxu0
    %v3588 = vpop.f32.mrb[0].mxu0
    %3589 = vdwg.mxu0
    %v3590 = vmul.f32 %v3585, 0.5
    %v3591 = vmul.f32 %v3585, 0.70710677
    %v3592 = verf.f32.pop %v3591
    %v3593 = vadd.f32 %v3592, 1.0
    %v3594 = vmul.f32 %v3590, %v3593
    %v3595 = vpack.c.bf16 %v3594, %v3594
    %s3596 = sshll.u32 %s3538, 4
    %3597 = dma.done %s172, %s3596
    %v3598 = vld [vmem:[#allocation7] sm:$0xff]
    %v3599 = vld [vmem:[#allocation7 + $0x8] sm:$0xff]
    %v3600 = vld [vmem:[#allocation7 + $0x10] sm:$0xff]
    %v3601 = vld [vmem:[#allocation7 + $0x18] sm:$0xff]
    %v3602 = vld [vmem:[#allocation7 + $0x20] sm:$0xff]
    %v3603 = vld [vmem:[#allocation7 + $0x28] sm:$0xff]
    %v3604 = vld [vmem:[#allocation7 + $0x30] sm:$0xff]
    %v3605 = vld [vmem:[#allocation7 + $0x38] sm:$0xff]
    %v3606 = vld [vmem:[#allocation12 + $0x5] ss:$0 sm:$0xff]
    %3607 = vmatprep.subr.bf16.mxu0 0
    %3608 = vmatpush1.bf16.msra.mxu0 %v3598
    %3609 = vmatprep.subr.bf16.mxu0 0
    %3610 = vmatpush1.bf16.msra.mxu0 %v3599
    %3611 = vmatprep.subr.bf16.mxu0 0
    %3612 = vmatpush1.bf16.msra.mxu0 %v3600
    %3613 = vmatprep.subr.bf16.mxu0 0
    %3614 = vmatpush1.bf16.msra.mxu0 %v3601
    %3615 = vmatprep.subr.bf16.mxu0 0
    %3616 = vmatpush1.bf16.msra.mxu0 %v3602
    %3617 = vmatprep.subr.bf16.mxu0 0
    %3618 = vmatpush1.bf16.msra.mxu0 %v3603
    %3619 = vmatprep.subr.bf16.mxu0 0
    %3620 = vmatpush1.bf16.msra.mxu0 %v3604
    %3621 = vmatprep.subr.bf16.mxu0 0
    %3622 = vmatpush1.bf16.msra.mxu0 %v3605
    %3623 = vmatprep.subr.bf16.mxu0 0
    %3624 = vmatpush1.bf16.msra.mxu0 0
    %3625 = vmatprep.subr.bf16.mxu0 0
    %3626 = vmatpush1.bf16.msra.mxu0 0
    %3627 = vmatprep.subr.bf16.mxu0 0
    %3628 = vmatpush1.bf16.msra.mxu0 0
    %3629 = vmatprep.subr.bf16.mxu0 0
    %3630 = vmatpush1.bf16.msra.mxu0 0
    %3631 = vmatprep.subr.bf16.mxu0 0
    %3632 = vmatpush1.bf16.msra.mxu0 0
    %3633 = vmatprep.subr.bf16.mxu0 0
    %3634 = vmatpush1.bf16.msra.mxu0 0
    %3635 = vmatprep.subr.bf16.mxu0 0
    %3636 = vmatpush1.bf16.msra.mxu0 0
    %3637 = vmatprep.subr.bf16.mxu0 0
    %3638 = vmatpush1.bf16.msra.mxu0 0
    %3639 = vmatprep.mubr.bf16.mxu0 0
    %3640 = vmatmul.mubr.bf16.gmra.mrb[0].mxu0 %v3595
    %v3641 = vpop.f32.mrb[0].mxu0
    %v3642 = vadd.f32 %v3606, %v3641
    %v3643 = vpop.f32.mrb[0].mxu0
    %v3644 = vpop.f32.mrb[0].mxu0
    %v3645 = vpop.f32.mrb[0].mxu0
    %3646 = vdwg.mxu0
    %v3647 = vmul.f32 %v3642, 0.5
    %v3648 = vmul.f32 %v3642, 0.70710677
    %v3649 = verf.f32.pop %v3648
    %v3650 = vadd.f32 %v3649, 1.0
    %v3651 = vmul.f32 %v3647, %v3650
    %v3652 = vpack.c.bf16 %v3651, %v3651
    %s3653 = sshll.u32 %s3538, 4
    %3654 = dma.done %s184, %s3653
    %v3655 = vld [vmem:[#allocation8] sm:$0xff]
    %v3656 = vld [vmem:[#allocation8 + $0x8] sm:$0xff]
    %v3657 = vld [vmem:[#allocation8 + $0x10] sm:$0xff]
    %v3658 = vld [vmem:[#allocation8 + $0x18] sm:$0xff]
    %v3659 = vld [vmem:[#allocation8 + $0x20] sm:$0xff]
    %v3660 = vld [vmem:[#allocation8 + $0x28] sm:$0xff]
    %v3661 = vld [vmem:[#allocation8 + $0x30] sm:$0xff]
    %v3662 = vld [vmem:[#allocation8 + $0x38] sm:$0xff]
    %v3663 = vld [vmem:[#allocation12 + $0x6] ss:$0 sm:$0xff]
    %3664 = vmatprep.subr.bf16.mxu0 0
    %3665 = vmatpush1.bf16.msra.mxu0 %v3655
    %3666 = vmatprep.subr.bf16.mxu0 0
    %3667 = vmatpush1.bf16.msra.mxu0 %v3656
    %3668 = vmatprep.subr.bf16.mxu0 0
    %3669 = vmatpush1.bf16.msra.mxu0 %v3657
    %3670 = vmatprep.subr.bf16.mxu0 0
    %3671 = vmatpush1.bf16.msra.mxu0 %v3658
    %3672 = vmatprep.subr.bf16.mxu0 0
    %3673 = vmatpush1.bf16.msra.mxu0 %v3659
    %3674 = vmatprep.subr.bf16.mxu0 0
    %3675 = vmatpush1.bf16.msra.mxu0 %v3660
    %3676 = vmatprep.subr.bf16.mxu0 0
    %3677 = vmatpush1.bf16.msra.mxu0 %v3661
    %3678 = vmatprep.subr.bf16.mxu0 0
    %3679 = vmatpush1.bf16.msra.mxu0 %v3662
    %3680 = vmatprep.subr.bf16.mxu0 0
    %3681 = vmatpush1.bf16.msra.mxu0 0
    %3682 = vmatprep.subr.bf16.mxu0 0
    %3683 = vmatpush1.bf16.msra.mxu0 0
    %3684 = vmatprep.subr.bf16.mxu0 0
    %3685 = vmatpush1.bf16.msra.mxu0 0
    %3686 = vmatprep.subr.bf16.mxu0 0
    %3687 = vmatpush1.bf16.msra.mxu0 0
    %3688 = vmatprep.subr.bf16.mxu0 0
    %3689 = vmatpush1.bf16.msra.mxu0 0
    %3690 = vmatprep.subr.bf16.mxu0 0
    %3691 = vmatpush1.bf16.msra.mxu0 0
    %3692 = vmatprep.subr.bf16.mxu0 0
    %3693 = vmatpush1.bf16.msra.mxu0 0
    %3694 = vmatprep.subr.bf16.mxu0 0
    %3695 = vmatpush1.bf16.msra.mxu0 0
    %3696 = vmatprep.mubr.bf16.mxu0 0
    %3697 = vmatmul.mubr.bf16.gmra.mrb[0].mxu0 %v3652
    %v3698 = vpop.f32.mrb[0].mxu0
    %v3699 = vadd.f32 %v3663, %v3698
    %v3700 = vpop.f32.mrb[0].mxu0
    %v3701 = vpop.f32.mrb[0].mxu0
    %v3702 = vpop.f32.mrb[0].mxu0
    %3703 = vdwg.mxu0
    %3704 = vst [vmem:[%s9] sm:$0xff] %v3699
    // Predicated region
    $region34: #{geo_predictor_forward.1} parent=1 // pred_check
      _
    $region35: #{geo_predictor_forward.1} parent=1 // pred_check_branch
      %3706 = sbr.rel (0) target = $region37
    $region36: #{geo_predictor_forward.1} parent=1 // pred_region
      _
    $region37: #{geo_predictor_forward.1} parent=1 // pred_fallthru
      _
    // Predicated region
    $region38: #{geo_predictor_forward.1} parent=1 // pred_check
      _
    $region39: #{geo_predictor_forward.1} parent=1 // pred_check_branch
      %3708 = sbr.rel (0) target = $region41
    $region40: #{geo_predictor_forward.1} parent=1 // pred_region
      _
    $region41: #{geo_predictor_forward.1} parent=1 // pred_fallthru
      _
    %3709 = vsyncpa [#allocation11], 1
    %3710 = vsyncpa [#allocation13], 1
  %3711 = vsyncmov [#allocation9]
  %s3712 = vpop.sfrf %3711
  %p3713 = scmp.eq.s32.totalorder %s3712, 0
  %p3714 = pneg %p3713
  %3716 = shalt.err (%p3714)
  %s3717 = scalar_lea.sflag [#allocation9], 1
  %3718 = vsyncmov %s3717
  %s3719 = vpop.sfrf %3718
  %p3720 = scmp.eq.s32.totalorder %s3719, 0
  %p3721 = pneg %p3720
  %3723 = shalt.err (%p3721)
  %s3724 = scalar_lea.sflag [#allocation9], 2
  %3725 = vsyncmov %s3724
  %s3726 = vpop.sfrf %3725
  %p3727 = scmp.eq.s32.totalorder %s3726, 0
  %p3728 = pneg %p3727
  %3730 = shalt.err (%p3728)
  %s3731 = scalar_lea.sflag [#allocation9], 3
  %3732 = vsyncmov %s3731
  %s3733 = vpop.sfrf %3732
  %p3734 = scmp.eq.s32.totalorder %s3733, 0
  %p3735 = pneg %p3734
  %3737 = shalt.err (%p3735)
  %s3738 = scalar_lea.sflag [#allocation9], 4
  %3739 = vsyncmov %s3738
  %s3740 = vpop.sfrf %3739
  %p3741 = scmp.eq.s32.totalorder %s3740, 0
  %p3742 = pneg %p3741
  %3744 = shalt.err (%p3742)
  %s3745 = scalar_lea.sflag [#allocation9], 5
  %3746 = vsyncmov %s3745
  %s3747 = vpop.sfrf %3746
  %p3748 = scmp.eq.s32.totalorder %s3747, 0
  %p3749 = pneg %p3748
  %3751 = shalt.err (%p3749)
  %s3752 = scalar_lea.sflag [#allocation9], 6
  %3753 = vsyncmov %s3752
  %s3754 = vpop.sfrf %3753
  %p3755 = scmp.eq.s32.totalorder %s3754, 0
  %p3756 = pneg %p3755
  %3758 = shalt.err (%p3756)

</llo_original>
